<compile_context>
chip_gen: v5e
topology: v5e:2x2
jax: 0.10.0
libtpu: 0.0.40
codegen_flags: <defaults>
</compile_context>

<pallas_src>
import functools

import jax
import jax.numpy as jnp
from jax import lax
from jax.experimental import pallas as pl
from jax.experimental.pallas import tpu as pltpu


def _mha_kernel(x_ref, wq_ref, wk_ref, wv_ref, wout_ref, bout_ref, o_ref,
                *maybe_attn, block_b, seq, input_dim, num_heads, head_dim,
                keep_attn):
    attn_ref = maybe_attn[0] if keep_attn else None
    rows = block_b * seq

    # (block_b, N, D) bf16 -> (rows, D): leading-dim merge, layout preserving.
    x = x_ref[...].reshape(rows, input_dim)

    # Output-projection accumulator: the head axis is contracted by accumulation,
    # so no (rows, H*d) lane concat is ever materialized.
    y = jnp.zeros((rows, input_dim), dtype=jnp.float32)

    for h in range(num_heads):                     # unrolled; all indices static
        # Per-head weight tiles via leading-dim ref indexing (no lane slicing).
        wq_h = wq_ref[h]                           # (D, d) bf16, 1/sqrt(d) pre-folded
        wk_h = wk_ref[h]                           # (D, d) bf16
        wv_h = wv_ref[h]                           # (D, d) bf16
        wo_h = wout_ref[h]                         # (d, D) bf16

        # Per-head Q/K/V projections: bf16 MXU inputs, f32 accumulation.
        q = jnp.dot(x, wq_h, preferred_element_type=jnp.float32)    # (rows, d)
        k = jnp.dot(x, wk_h, preferred_element_type=jnp.float32)
        v = jnp.dot(x, wv_h, preferred_element_type=jnp.float32)

        q3 = q.astype(jnp.bfloat16).reshape(block_b, seq, head_dim)
        k3 = k.astype(jnp.bfloat16).reshape(block_b, seq, head_dim)
        v3 = v.astype(jnp.bfloat16).reshape(block_b, seq, head_dim)

        # sim[b, i, j] = q[b, i, :] . k[b, j, :]   (batched over block_b, f32 acc)
        sim = lax.dot_general(q3, k3, (((2,), (2,)), ((0,), (0,))),
                              preferred_element_type=jnp.float32)   # (b, N, N)

        # Numerically stable softmax over keys, kept in f32.
        m = jnp.max(sim, axis=-1, keepdims=True)
        e = jnp.exp(sim - m)
        l = jnp.sum(e, axis=-1, keepdims=True)
        # Exact reciprocal when the weights are returned (sum to ~1 like
        # torch.softmax); approx EUP reciprocal on the throughput-only path.
        p = e * pl.reciprocal(l, approx=not keep_attn)

        if keep_attn:
            # Pre-dropout attention weights (mirrors module.attn_weights).
            attn_ref[:, h, :, :] = p.astype(attn_ref.dtype)

        # out[b, i, :] = sum_j p[b, i, j] * v[b, j, :]   (bf16 in, f32 acc)
        pv = lax.dot_general(p.astype(jnp.bfloat16), v3,
                             (((2,), (1,)), ((0,), (0,))),
                             preferred_element_type=jnp.float32)    # (b, N, d)

        # Head contribution to the output projection (head axis contracted here).
        y = y + jnp.dot(pv.reshape(rows, head_dim).astype(jnp.bfloat16), wo_h,
                        preferred_element_type=jnp.float32)         # (rows, D)

    y = y + bout_ref[...]                                            # + bias (f32)
    o_ref[...] = y.reshape(block_b, seq, input_dim).astype(o_ref.dtype)


def prepare_mha_params(w_qkv, w_out, b_out, *, num_heads, head_dim):
    """One-time weight preparation (do at load time, not per call).

    w_qkv: (D, 3*inner) so that qkv = x @ w_qkv   (torch to_qkv.weight.T)
    w_out: (inner, D)   so that y   = o @ w_out   (torch to_out.weight.T)
    b_out: (D,) or (1, D)
    Returns bf16 per-head tensors wq/wk/wv: (H, D, d), wo: (H, d, D), and bias (1, D)
    f32, with the 1/sqrt(head_dim) scale folded into wq.
    """
    D = w_qkv.shape[0]
    inner = num_heads * head_dim
    assert w_qkv.shape == (D, 3 * inner) and w_out.shape == (inner, D)
    scale = head_dim ** -0.5

    wq, wk, wv = jnp.split(w_qkv, 3, axis=-1)                # (D, inner) each

    def per_head(w):                                         # (D, inner) -> (H, D, d)
        return jnp.transpose(w.reshape(D, num_heads, head_dim), (1, 0, 2))

    wq = (per_head(wq) * scale).astype(jnp.bfloat16)         # fold scale into Wq
    wk = per_head(wk).astype(jnp.bfloat16)
    wv = per_head(wv).astype(jnp.bfloat16)
    wo = w_out.reshape(num_heads, head_dim, D).astype(jnp.bfloat16)
    bo = jnp.asarray(b_out, jnp.float32).reshape(1, D)
    return wq, wk, wv, wo, bo


def _pick_block_b(batch, seq, input_dim, num_heads, attn_bytes, keep_attn,
                  target_rows=512, vmem_budget_bytes=40 << 20):
    """Largest divisor of `batch` with ~target_rows fused rows per step whose
    double-buffered blocks fit the VMEM budget, keeping >=2 grid steps when
    possible so both v7x TensorCores get work on the 'parallel' axis."""
    def blocks_bytes(tb):
        xb = tb * seq * input_dim * 2                         # bf16 input block
        ob = tb * seq * input_dim * 4                         # f32 output block
        ab = tb * num_heads * seq * seq * attn_bytes if keep_attn else 0
        return 2 * (xb + ob + ab)                             # double-buffered

    divisors = [d for d in range(batch, 0, -1) if batch % d == 0]
    cap = max(1, target_rows // max(seq, 1))
    tb = 1
    for d in divisors:
        if d <= cap and blocks_bytes(d) <= vmem_budget_bytes:
            tb = d
            break
    if batch // tb < 2 and tb > 1:
        smaller = [d for d in divisors if d <= tb // 2]
        if smaller:
            tb = smaller[0]
    return tb


def multi_headed_attention(x, wq, wk, wv, wo, b_out, *, keep_attn=True,
                           attn_dtype=jnp.float32, block_b=None,
                           target_rows=512, vmem_limit_bytes=None):
    """x: (B, N, D) f32.  wq/wk/wv: (H, D, d) bf16 (scale folded into wq).
    wo: (H, d, D) bf16.  b_out: (1, D) f32.  Returns (y, attn) or y."""
    B, N, D = x.shape
    H, _, d = wq.shape
    attn_bytes = jnp.dtype(attn_dtype).itemsize

    if block_b is None:
        block_b = _pick_block_b(B, N, D, H, attn_bytes, keep_attn,
                                target_rows=target_rows)
    assert B % block_b == 0, "block_b must divide the batch size"

    if vmem_limit_bytes is None:
        x_blk = block_b * N * D * 2
        o_blk = block_b * N * D * 4
        a_blk = block_b * H * N * N * attn_bytes if keep_attn else 0
        w_bytes = (3 * H * D * d + H * d * D) * 2 + D * 4
        need = 2 * (x_blk + o_blk + a_blk) + w_bytes
        # Floor at the common 32 MiB scoped default, cap at v7x's 64 MiB physical.
        vmem_limit_bytes = int(min(64 << 20, max(32 << 20, 2 * need + (8 << 20))))

    kernel = functools.partial(
        _mha_kernel, block_b=block_b, seq=N, input_dim=D, num_heads=H,
        head_dim=d, keep_attn=keep_attn)

    out_shape = [jax.ShapeDtypeStruct((B, N, D), x.dtype)]
    out_specs = [pl.BlockSpec((block_b, N, D), lambda b: (b, 0, 0))]
    if keep_attn:
        # f32 mirrors the module's attn_weights; pass attn_dtype=jnp.bfloat16 to
        # halve the dominant HBM writeback on bandwidth-poor chips (v5e).
        out_shape.append(jax.ShapeDtypeStruct((B, H, N, N), attn_dtype))
        out_specs.append(pl.BlockSpec((block_b, H, N, N),
                                      lambda b: (b, 0, 0, 0)))

    result = pl.pallas_call(
        kernel,
        out_shape=tuple(out_shape),
        grid_spec=pltpu.PrefetchScalarGridSpec(
            num_scalar_prefetch=0,
            grid=(B // block_b,),
            in_specs=[
                pl.BlockSpec((block_b, N, D), lambda b: (b, 0, 0)),   # x tile
                pl.BlockSpec((H, D, d), lambda b: (0, 0, 0)),         # wq (resident)
                pl.BlockSpec((H, D, d), lambda b: (0, 0, 0)),         # wk (resident)
                pl.BlockSpec((H, D, d), lambda b: (0, 0, 0)),         # wv (resident)
                pl.BlockSpec((H, d, D), lambda b: (0, 0, 0)),         # wo (resident)
                pl.BlockSpec((1, D), lambda b: (0, 0)),               # bias
            ],
            out_specs=out_specs,
        ),
        compiler_params=pltpu.CompilerParams(
            dimension_semantics=("parallel",),
            vmem_limit_bytes=vmem_limit_bytes),
    )(x.astype(jnp.bfloat16), wq, wk, wv, wo, b_out)

    if keep_attn:
        return result
    return result[0]


def _reference(x, w_qkv, w_out, b_out, *, num_heads, head_dim):
    B, N, D = x.shape
    inner = num_heads * head_dim
    qkv = x @ w_qkv
    q, k, v = jnp.split(qkv, 3, axis=-1)

    def to_heads(t):
        return t.reshape(B, N, num_heads, head_dim).transpose(0, 2, 1, 3)

    q, k, v = map(to_heads, (q, k, v))
    sim = jnp.einsum("bhid,bhjd->bhij", q, k) * (head_dim ** -0.5)
    attn = jax.nn.softmax(sim, axis=-1)
    out = jnp.einsum("bhij,bhjd->bhid", attn, v)
    out = out.transpose(0, 2, 1, 3).reshape(B, N, inner)
    return out @ w_out + b_out, attn


if __name__ == "__main__":
    # Small shapes consistent with the module defaults.
    B, N = 4, 8
    input_dim = 32
    num_heads = 8
    head_dim = 16
    inner = num_heads * head_dim  # 128

    key = jax.random.PRNGKey(0)
    kx, k1, k2, k3 = jax.random.split(key, 4)

    x = jax.random.normal(kx, (B, N, input_dim), dtype=jnp.float32)
    # f32 parameters stored transposed relative to torch so the math is x @ W.
    w_qkv = jax.random.normal(k1, (input_dim, 3 * inner), jnp.float32) * (input_dim ** -0.5)
    w_out = jax.random.normal(k2, (inner, input_dim), jnp.float32) * (inner ** -0.5)
    b_out = jax.random.normal(k3, (1, input_dim), jnp.float32) * 0.01

    # One-time weight preparation: per-head split, bf16, scale folded into wq.
    wq, wk, wv, wo, bo = prepare_mha_params(w_qkv, w_out, b_out,
                                            num_heads=num_heads, head_dim=head_dim)

    y, attn = multi_headed_attention(x, wq, wk, wv, wo, bo, keep_attn=True)
    y = jax.block_until_ready(y)
    attn = jax.block_until_ready(attn)

    y_nokeep = multi_headed_attention(x, wq, wk, wv, wo, bo, keep_attn=False)
    y_nokeep = jax.block_until_ready(y_nokeep)

    y_ref, attn_ref = _reference(x, w_qkv, w_out, b_out,
                                 num_heads=num_heads, head_dim=head_dim)

    assert y.shape == (B, N, input_dim)
    assert attn.shape == (B, num_heads, N, N)
    assert y_nokeep.shape == (B, N, input_dim)
    # bf16 MXU operands with f32 accumulation => mixed-precision tolerances vs f32 ref.
    assert bool(jnp.allclose(y, y_ref, atol=1e-1, rtol=5e-2))
    assert bool(jnp.allclose(attn, attn_ref, atol=5e-2, rtol=5e-2))
    assert bool(jnp.allclose(y_nokeep, y_ref, atol=1e-1, rtol=5e-2))

    print("KERNEL_OK")
</pallas_src>

<mosaic_0001>
module attributes {stable_mosaic.version = 11 : i64} {
  func.func @_mha_kernel(%arg0: i32, %arg1: memref<2x8x32xbf16, #tpu.memory_space<vmem>>, %arg2: memref<8x32x16xbf16, #tpu.memory_space<vmem>>, %arg3: memref<8x32x16xbf16, #tpu.memory_space<vmem>>, %arg4: memref<8x32x16xbf16, #tpu.memory_space<vmem>>, %arg5: memref<8x16x32xbf16, #tpu.memory_space<vmem>>, %arg6: memref<1x32xf32, #tpu.memory_space<vmem>>, %arg7: memref<2x8x32xf32, #tpu.memory_space<vmem>>, %arg8: memref<2x8x8x8xf32, #tpu.memory_space<vmem>>) attributes {dimension_semantics = [#tpu.dimension_semantics<parallel>], iteration_bounds = array<i64: 2>, scalar_prefetch = 0 : i64, scratch_operands = 0 : i64, tpu.core_type = #tpu.core_type<tc>, window_params = [{transform_indices = @transform_0, window_bounds = array<i64: 2, 8, 32>}, {pipeline_mode = #tpu.pipeline_mode<synchronous>, transform_indices = @transform_1, window_bounds = array<i64: 8, 32, 16>}, {pipeline_mode = #tpu.pipeline_mode<synchronous>, transform_indices = @transform_2, window_bounds = array<i64: 8, 32, 16>}, {pipeline_mode = #tpu.pipeline_mode<synchronous>, transform_indices = @transform_3, window_bounds = array<i64: 8, 32, 16>}, {pipeline_mode = #tpu.pipeline_mode<synchronous>, transform_indices = @transform_4, window_bounds = array<i64: 8, 16, 32>}, {pipeline_mode = #tpu.pipeline_mode<synchronous>, transform_indices = @transform_5, window_bounds = array<i64: 1, 32>}, {transform_indices = @transform_6, window_bounds = array<i64: 2, 8, 32>}, {transform_indices = @transform_7, window_bounds = array<i64: 2, 8, 8, 8>}]} {
    %c0 = arith.constant 0 : index
    %c0_0 = arith.constant 0 : index
    %c0_1 = arith.constant 0 : index
    %0 = vector.load %arg1[%c0, %c0_0, %c0_1] : memref<2x8x32xbf16, #tpu.memory_space<vmem>>, vector<2x8x32xbf16>
    %1 = vector.shape_cast %0 : vector<2x8x32xbf16> to vector<16x32xbf16>
    %cst = arith.constant 0.000000e+00 : f32
    %2 = vector.broadcast %cst : f32 to vector<16x32xf32>
    %c0_2 = arith.constant 0 : index
    %c0_3 = arith.constant 0 : index
    %c0_4 = arith.constant 0 : index
    %3 = vector.load %arg2[%c0_2, %c0_3, %c0_4] : memref<8x32x16xbf16, #tpu.memory_space<vmem>>, vector<1x32x16xbf16>
    %4 = vector.shape_cast %3 : vector<1x32x16xbf16> to vector<32x16xbf16>
    %c0_5 = arith.constant 0 : index
    %c0_6 = arith.constant 0 : index
    %c0_7 = arith.constant 0 : index
    %5 = vector.load %arg3[%c0_5, %c0_6, %c0_7] : memref<8x32x16xbf16, #tpu.memory_space<vmem>>, vector<1x32x16xbf16>
    %6 = vector.shape_cast %5 : vector<1x32x16xbf16> to vector<32x16xbf16>
    %c0_8 = arith.constant 0 : index
    %c0_9 = arith.constant 0 : index
    %c0_10 = arith.constant 0 : index
    %7 = vector.load %arg4[%c0_8, %c0_9, %c0_10] : memref<8x32x16xbf16, #tpu.memory_space<vmem>>, vector<1x32x16xbf16>
    %8 = vector.shape_cast %7 : vector<1x32x16xbf16> to vector<32x16xbf16>
    %c0_11 = arith.constant 0 : index
    %c0_12 = arith.constant 0 : index
    %c0_13 = arith.constant 0 : index
    %9 = vector.load %arg5[%c0_11, %c0_12, %c0_13] : memref<8x16x32xbf16, #tpu.memory_space<vmem>>, vector<1x16x32xbf16>
    %10 = vector.shape_cast %9 : vector<1x16x32xbf16> to vector<16x32xbf16>
    %cst_14 = arith.constant dense<0.000000e+00> : vector<16x16xf32>
    %11 = tpu.matmul %1, %4, %cst_14 {dimension_numbers = #tpu.dot_dimension_numbers<[1], [0], [0], [1], [0, 0, 1, 1], [], []>} : vector<16x32xbf16>, vector<32x16xbf16>, vector<16x16xf32> -> vector<16x16xf32>
    %cst_15 = arith.constant dense<0.000000e+00> : vector<16x16xf32>
    %12 = tpu.matmul %1, %6, %cst_15 {dimension_numbers = #tpu.dot_dimension_numbers<[1], [0], [0], [1], [0, 0, 1, 1], [], []>} : vector<16x32xbf16>, vector<32x16xbf16>, vector<16x16xf32> -> vector<16x16xf32>
    %cst_16 = arith.constant dense<0.000000e+00> : vector<16x16xf32>
    %13 = tpu.matmul %1, %8, %cst_16 {dimension_numbers = #tpu.dot_dimension_numbers<[1], [0], [0], [1], [0, 0, 1, 1], [], []>} : vector<16x32xbf16>, vector<32x16xbf16>, vector<16x16xf32> -> vector<16x16xf32>
    %14 = arith.truncf %11 : vector<16x16xf32> to vector<16x16xbf16>
    %15 = vector.shape_cast %14 : vector<16x16xbf16> to vector<2x8x16xbf16>
    %16 = arith.truncf %12 : vector<16x16xf32> to vector<16x16xbf16>
    %17 = vector.shape_cast %16 : vector<16x16xbf16> to vector<2x8x16xbf16>
    %18 = arith.truncf %13 : vector<16x16xf32> to vector<16x16xbf16>
    %19 = vector.shape_cast %18 : vector<16x16xbf16> to vector<2x8x16xbf16>
    %cst_17 = arith.constant dense<0.000000e+00> : vector<2x8x8xf32>
    %20 = tpu.matmul %15, %17, %cst_17 {dimension_numbers = #tpu.dot_dimension_numbers<[2], [2], [1], [1], [0, 0, 0, 1, 1, 1], [0], [0]>} : vector<2x8x16xbf16>, vector<2x8x16xbf16>, vector<2x8x8xf32> -> vector<2x8x8xf32>
    %cst_18 = arith.constant dense<0xFF800000> : vector<2x8xf32>
    %21 = vector.multi_reduction <maximumf>, %20, %cst_18 [2] : vector<2x8x8xf32> to vector<2x8xf32>
    %22 = vector.shape_cast %21 : vector<2x8xf32> to vector<2x8x1xf32>
    %23 = vector.broadcast %22 : vector<2x8x1xf32> to vector<2x8x8xf32>
    %24 = arith.subf %20, %23 : vector<2x8x8xf32>
    %25 = math.exp %24 : vector<2x8x8xf32>
    %cst_19 = arith.constant dense<0.000000e+00> : vector<2x8xf32>
    %26 = vector.multi_reduction <add>, %25, %cst_19 [2] : vector<2x8x8xf32> to vector<2x8xf32>
    %27 = vector.shape_cast %26 : vector<2x8xf32> to vector<2x8x1xf32>
    %28 = tpu.reciprocal %27 : vector<2x8x1xf32> -> vector<2x8x1xf32>
    %29 = vector.broadcast %28 : vector<2x8x1xf32> to vector<2x8x8xf32>
    %30 = arith.mulf %25, %29 : vector<2x8x8xf32>
    %c0_20 = arith.constant 0 : index
    %c0_21 = arith.constant 0 : index
    %c0_22 = arith.constant 0 : index
    %c0_23 = arith.constant 0 : index
    %31 = vector.load %arg8[%c0_20, %c0_21, %c0_22, %c0_23] : memref<2x8x8x8xf32, #tpu.memory_space<vmem>>, vector<2x1x8x8xf32>
    %32 = vector.shape_cast %31 : vector<2x1x8x8xf32> to vector<2x8x8xf32>
    %33 = vector.shape_cast %30 : vector<2x8x8xf32> to vector<2x1x8x8xf32>
    tpu.vector_store %arg8[%c0_20, %c0_21, %c0_22, %c0_23], %33 {strides = array<i32>} : memref<2x8x8x8xf32, #tpu.memory_space<vmem>>, vector<2x1x8x8xf32>,
    %34 = arith.truncf %30 : vector<2x8x8xf32> to vector<2x8x8xbf16>
    %cst_24 = arith.constant dense<0.000000e+00> : vector<2x8x16xf32>
    %35 = tpu.matmul %34, %19, %cst_24 {dimension_numbers = #tpu.dot_dimension_numbers<[2], [1], [1], [2], [0, 0, 0, 1, 1, 2], [0], [0]>} : vector<2x8x8xbf16>, vector<2x8x16xbf16>, vector<2x8x16xf32> -> vector<2x8x16xf32>
    %36 = vector.shape_cast %35 : vector<2x8x16xf32> to vector<16x16xf32>
    %37 = arith.truncf %36 : vector<16x16xf32> to vector<16x16xbf16>
    %cst_25 = arith.constant dense<0.000000e+00> : vector<16x32xf32>
    %38 = tpu.matmul %37, %10, %cst_25 {dimension_numbers = #tpu.dot_dimension_numbers<[1], [0], [0], [1], [0, 0, 1, 1], [], []>} : vector<16x16xbf16>, vector<16x32xbf16>, vector<16x32xf32> -> vector<16x32xf32>
    %39 = arith.addf %2, %38 : vector<16x32xf32>
    %c1 = arith.constant 1 : index
    %c0_26 = arith.constant 0 : index
    %c0_27 = arith.constant 0 : index
    %40 = vector.load %arg2[%c1, %c0_26, %c0_27] : memref<8x32x16xbf16, #tpu.memory_space<vmem>>, vector<1x32x16xbf16>
    %41 = vector.shape_cast %40 : vector<1x32x16xbf16> to vector<32x16xbf16>
    %c1_28 = arith.constant 1 : index
    %c0_29 = arith.constant 0 : index
    %c0_30 = arith.constant 0 : index
    %42 = vector.load %arg3[%c1_28, %c0_29, %c0_30] : memref<8x32x16xbf16, #tpu.memory_space<vmem>>, vector<1x32x16xbf16>
    %43 = vector.shape_cast %42 : vector<1x32x16xbf16> to vector<32x16xbf16>
    %c1_31 = arith.constant 1 : index
    %c0_32 = arith.constant 0 : index
    %c0_33 = arith.constant 0 : index
    %44 = vector.load %arg4[%c1_31, %c0_32, %c0_33] : memref<8x32x16xbf16, #tpu.memory_space<vmem>>, vector<1x32x16xbf16>
    %45 = vector.shape_cast %44 : vector<1x32x16xbf16> to vector<32x16xbf16>
    %c1_34 = arith.constant 1 : index
    %c0_35 = arith.constant 0 : index
    %c0_36 = arith.constant 0 : index
    %46 = vector.load %arg5[%c1_34, %c0_35, %c0_36] : memref<8x16x32xbf16, #tpu.memory_space<vmem>>, vector<1x16x32xbf16>
    %47 = vector.shape_cast %46 : vector<1x16x32xbf16> to vector<16x32xbf16>
    %cst_37 = arith.constant dense<0.000000e+00> : vector<16x16xf32>
    %48 = tpu.matmul %1, %41, %cst_37 {dimension_numbers = #tpu.dot_dimension_numbers<[1], [0], [0], [1], [0, 0, 1, 1], [], []>} : vector<16x32xbf16>, vector<32x16xbf16>, vector<16x16xf32> -> vector<16x16xf32>
    %cst_38 = arith.constant dense<0.000000e+00> : vector<16x16xf32>
    %49 = tpu.matmul %1, %43, %cst_38 {dimension_numbers = #tpu.dot_dimension_numbers<[1], [0], [0], [1], [0, 0, 1, 1], [], []>} : vector<16x32xbf16>, vector<32x16xbf16>, vector<16x16xf32> -> vector<16x16xf32>
    %cst_39 = arith.constant dense<0.000000e+00> : vector<16x16xf32>
    %50 = tpu.matmul %1, %45, %cst_39 {dimension_numbers = #tpu.dot_dimension_numbers<[1], [0], [0], [1], [0, 0, 1, 1], [], []>} : vector<16x32xbf16>, vector<32x16xbf16>, vector<16x16xf32> -> vector<16x16xf32>
    %51 = arith.truncf %48 : vector<16x16xf32> to vector<16x16xbf16>
    %52 = vector.shape_cast %51 : vector<16x16xbf16> to vector<2x8x16xbf16>
    %53 = arith.truncf %49 : vector<16x16xf32> to vector<16x16xbf16>
    %54 = vector.shape_cast %53 : vector<16x16xbf16> to vector<2x8x16xbf16>
    %55 = arith.truncf %50 : vector<16x16xf32> to vector<16x16xbf16>
    %56 = vector.shape_cast %55 : vector<16x16xbf16> to vector<2x8x16xbf16>
    %cst_40 = arith.constant dense<0.000000e+00> : vector<2x8x8xf32>
    %57 = tpu.matmul %52, %54, %cst_40 {dimension_numbers = #tpu.dot_dimension_numbers<[2], [2], [1], [1], [0, 0, 0, 1, 1, 1], [0], [0]>} : vector<2x8x16xbf16>, vector<2x8x16xbf16>, vector<2x8x8xf32> -> vector<2x8x8xf32>
    %cst_41 = arith.constant dense<0xFF800000> : vector<2x8xf32>
    %58 = vector.multi_reduction <maximumf>, %57, %cst_41 [2] : vector<2x8x8xf32> to vector<2x8xf32>
    %59 = vector.shape_cast %58 : vector<2x8xf32> to vector<2x8x1xf32>
    %60 = vector.broadcast %59 : vector<2x8x1xf32> to vector<2x8x8xf32>
    %61 = arith.subf %57, %60 : vector<2x8x8xf32>
    %62 = math.exp %61 : vector<2x8x8xf32>
    %cst_42 = arith.constant dense<0.000000e+00> : vector<2x8xf32>
    %63 = vector.multi_reduction <add>, %62, %cst_42 [2] : vector<2x8x8xf32> to vector<2x8xf32>
    %64 = vector.shape_cast %63 : vector<2x8xf32> to vector<2x8x1xf32>
    %65 = tpu.reciprocal %64 : vector<2x8x1xf32> -> vector<2x8x1xf32>
    %66 = vector.broadcast %65 : vector<2x8x1xf32> to vector<2x8x8xf32>
    %67 = arith.mulf %62, %66 : vector<2x8x8xf32>
    %c0_43 = arith.constant 0 : index
    %c1_44 = arith.constant 1 : index
    %c0_45 = arith.constant 0 : index
    %c0_46 = arith.constant 0 : index
    %68 = vector.load %arg8[%c0_43, %c1_44, %c0_45, %c0_46] : memref<2x8x8x8xf32, #tpu.memory_space<vmem>>, vector<2x1x8x8xf32>
    %69 = vector.shape_cast %68 : vector<2x1x8x8xf32> to vector<2x8x8xf32>
    %70 = vector.shape_cast %67 : vector<2x8x8xf32> to vector<2x1x8x8xf32>
    tpu.vector_store %arg8[%c0_43, %c1_44, %c0_45, %c0_46], %70 {strides = array<i32>} : memref<2x8x8x8xf32, #tpu.memory_space<vmem>>, vector<2x1x8x8xf32>,
    %71 = arith.truncf %67 : vector<2x8x8xf32> to vector<2x8x8xbf16>
    %cst_47 = arith.constant dense<0.000000e+00> : vector<2x8x16xf32>
    %72 = tpu.matmul %71, %56, %cst_47 {dimension_numbers = #tpu.dot_dimension_numbers<[2], [1], [1], [2], [0, 0, 0, 1, 1, 2], [0], [0]>} : vector<2x8x8xbf16>, vector<2x8x16xbf16>, vector<2x8x16xf32> -> vector<2x8x16xf32>
    %73 = vector.shape_cast %72 : vector<2x8x16xf32> to vector<16x16xf32>
    %74 = arith.truncf %73 : vector<16x16xf32> to vector<16x16xbf16>
    %cst_48 = arith.constant dense<0.000000e+00> : vector<16x32xf32>
    %75 = tpu.matmul %74, %47, %cst_48 {dimension_numbers = #tpu.dot_dimension_numbers<[1], [0], [0], [1], [0, 0, 1, 1], [], []>} : vector<16x16xbf16>, vector<16x32xbf16>, vector<16x32xf32> -> vector<16x32xf32>
    %76 = arith.addf %39, %75 : vector<16x32xf32>
    %c2 = arith.constant 2 : index
    %c0_49 = arith.constant 0 : index
    %c0_50 = arith.constant 0 : index
    %77 = vector.load %arg2[%c2, %c0_49, %c0_50] : memref<8x32x16xbf16, #tpu.memory_space<vmem>>, vector<1x32x16xbf16>
    %78 = vector.shape_cast %77 : vector<1x32x16xbf16> to vector<32x16xbf16>
    %c2_51 = arith.constant 2 : index
    %c0_52 = arith.constant 0 : index
    %c0_53 = arith.constant 0 : index
    %79 = vector.load %arg3[%c2_51, %c0_52, %c0_53] : memref<8x32x16xbf16, #tpu.memory_space<vmem>>, vector<1x32x16xbf16>
    %80 = vector.shape_cast %79 : vector<1x32x16xbf16> to vector<32x16xbf16>
    %c2_54 = arith.constant 2 : index
    %c0_55 = arith.constant 0 : index
    %c0_56 = arith.constant 0 : index
    %81 = vector.load %arg4[%c2_54, %c0_55, %c0_56] : memref<8x32x16xbf16, #tpu.memory_space<vmem>>, vector<1x32x16xbf16>
    %82 = vector.shape_cast %81 : vector<1x32x16xbf16> to vector<32x16xbf16>
    %c2_57 = arith.constant 2 : index
    %c0_58 = arith.constant 0 : index
    %c0_59 = arith.constant 0 : index
    %83 = vector.load %arg5[%c2_57, %c0_58, %c0_59] : memref<8x16x32xbf16, #tpu.memory_space<vmem>>, vector<1x16x32xbf16>
    %84 = vector.shape_cast %83 : vector<1x16x32xbf16> to vector<16x32xbf16>
    %cst_60 = arith.constant dense<0.000000e+00> : vector<16x16xf32>
    %85 = tpu.matmul %1, %78, %cst_60 {dimension_numbers = #tpu.dot_dimension_numbers<[1], [0], [0], [1], [0, 0, 1, 1], [], []>} : vector<16x32xbf16>, vector<32x16xbf16>, vector<16x16xf32> -> vector<16x16xf32>
    %cst_61 = arith.constant dense<0.000000e+00> : vector<16x16xf32>
    %86 = tpu.matmul %1, %80, %cst_61 {dimension_numbers = #tpu.dot_dimension_numbers<[1], [0], [0], [1], [0, 0, 1, 1], [], []>} : vector<16x32xbf16>, vector<32x16xbf16>, vector<16x16xf32> -> vector<16x16xf32>
    %cst_62 = arith.constant dense<0.000000e+00> : vector<16x16xf32>
    %87 = tpu.matmul %1, %82, %cst_62 {dimension_numbers = #tpu.dot_dimension_numbers<[1], [0], [0], [1], [0, 0, 1, 1], [], []>} : vector<16x32xbf16>, vector<32x16xbf16>, vector<16x16xf32> -> vector<16x16xf32>
    %88 = arith.truncf %85 : vector<16x16xf32> to vector<16x16xbf16>
    %89 = vector.shape_cast %88 : vector<16x16xbf16> to vector<2x8x16xbf16>
    %90 = arith.truncf %86 : vector<16x16xf32> to vector<16x16xbf16>
    %91 = vector.shape_cast %90 : vector<16x16xbf16> to vector<2x8x16xbf16>
    %92 = arith.truncf %87 : vector<16x16xf32> to vector<16x16xbf16>
    %93 = vector.shape_cast %92 : vector<16x16xbf16> to vector<2x8x16xbf16>
    %cst_63 = arith.constant dense<0.000000e+00> : vector<2x8x8xf32>
    %94 = tpu.matmul %89, %91, %cst_63 {dimension_numbers = #tpu.dot_dimension_numbers<[2], [2], [1], [1], [0, 0, 0, 1, 1, 1], [0], [0]>} : vector<2x8x16xbf16>, vector<2x8x16xbf16>, vector<2x8x8xf32> -> vector<2x8x8xf32>
    %cst_64 = arith.constant dense<0xFF800000> : vector<2x8xf32>
    %95 = vector.multi_reduction <maximumf>, %94, %cst_64 [2] : vector<2x8x8xf32> to vector<2x8xf32>
    %96 = vector.shape_cast %95 : vector<2x8xf32> to vector<2x8x1xf32>
    %97 = vector.broadcast %96 : vector<2x8x1xf32> to vector<2x8x8xf32>
    %98 = arith.subf %94, %97 : vector<2x8x8xf32>
    %99 = math.exp %98 : vector<2x8x8xf32>
    %cst_65 = arith.constant dense<0.000000e+00> : vector<2x8xf32>
    %100 = vector.multi_reduction <add>, %99, %cst_65 [2] : vector<2x8x8xf32> to vector<2x8xf32>
    %101 = vector.shape_cast %100 : vector<2x8xf32> to vector<2x8x1xf32>
    %102 = tpu.reciprocal %101 : vector<2x8x1xf32> -> vector<2x8x1xf32>
    %103 = vector.broadcast %102 : vector<2x8x1xf32> to vector<2x8x8xf32>
    %104 = arith.mulf %99, %103 : vector<2x8x8xf32>
    %c0_66 = arith.constant 0 : index
    %c2_67 = arith.constant 2 : index
    %c0_68 = arith.constant 0 : index
    %c0_69 = arith.constant 0 : index
    %105 = vector.load %arg8[%c0_66, %c2_67, %c0_68, %c0_69] : memref<2x8x8x8xf32, #tpu.memory_space<vmem>>, vector<2x1x8x8xf32>
    %106 = vector.shape_cast %105 : vector<2x1x8x8xf32> to vector<2x8x8xf32>
    %107 = vector.shape_cast %104 : vector<2x8x8xf32> to vector<2x1x8x8xf32>
    tpu.vector_store %arg8[%c0_66, %c2_67, %c0_68, %c0_69], %107 {strides = array<i32>} : memref<2x8x8x8xf32, #tpu.memory_space<vmem>>, vector<2x1x8x8xf32>,
    %108 = arith.truncf %104 : vector<2x8x8xf32> to vector<2x8x8xbf16>
    %cst_70 = arith.constant dense<0.000000e+00> : vector<2x8x16xf32>
    %109 = tpu.matmul %108, %93, %cst_70 {dimension_numbers = #tpu.dot_dimension_numbers<[2], [1], [1], [2], [0, 0, 0, 1, 1, 2], [0], [0]>} : vector<2x8x8xbf16>, vector<2x8x16xbf16>, vector<2x8x16xf32> -> vector<2x8x16xf32>
    %110 = vector.shape_cast %109 : vector<2x8x16xf32> to vector<16x16xf32>
    %111 = arith.truncf %110 : vector<16x16xf32> to vector<16x16xbf16>
    %cst_71 = arith.constant dense<0.000000e+00> : vector<16x32xf32>
    %112 = tpu.matmul %111, %84, %cst_71 {dimension_numbers = #tpu.dot_dimension_numbers<[1], [0], [0], [1], [0, 0, 1, 1], [], []>} : vector<16x16xbf16>, vector<16x32xbf16>, vector<16x32xf32> -> vector<16x32xf32>
    %113 = arith.addf %76, %112 : vector<16x32xf32>
    %c3 = arith.constant 3 : index
    %c0_72 = arith.constant 0 : index
    %c0_73 = arith.constant 0 : index
    %114 = vector.load %arg2[%c3, %c0_72, %c0_73] : memref<8x32x16xbf16, #tpu.memory_space<vmem>>, vector<1x32x16xbf16>
    %115 = vector.shape_cast %114 : vector<1x32x16xbf16> to vector<32x16xbf16>
    %c3_74 = arith.constant 3 : index
    %c0_75 = arith.constant 0 : index
    %c0_76 = arith.constant 0 : index
    %116 = vector.load %arg3[%c3_74, %c0_75, %c0_76] : memref<8x32x16xbf16, #tpu.memory_space<vmem>>, vector<1x32x16xbf16>
    %117 = vector.shape_cast %116 : vector<1x32x16xbf16> to vector<32x16xbf16>
    %c3_77 = arith.constant 3 : index
    %c0_78 = arith.constant 0 : index
    %c0_79 = arith.constant 0 : index
    %118 = vector.load %arg4[%c3_77, %c0_78, %c0_79] : memref<8x32x16xbf16, #tpu.memory_space<vmem>>, vector<1x32x16xbf16>
    %119 = vector.shape_cast %118 : vector<1x32x16xbf16> to vector<32x16xbf16>
    %c3_80 = arith.constant 3 : index
    %c0_81 = arith.constant 0 : index
    %c0_82 = arith.constant 0 : index
    %120 = vector.load %arg5[%c3_80, %c0_81, %c0_82] : memref<8x16x32xbf16, #tpu.memory_space<vmem>>, vector<1x16x32xbf16>
    %121 = vector.shape_cast %120 : vector<1x16x32xbf16> to vector<16x32xbf16>
    %cst_83 = arith.constant dense<0.000000e+00> : vector<16x16xf32>
    %122 = tpu.matmul %1, %115, %cst_83 {dimension_numbers = #tpu.dot_dimension_numbers<[1], [0], [0], [1], [0, 0, 1, 1], [], []>} : vector<16x32xbf16>, vector<32x16xbf16>, vector<16x16xf32> -> vector<16x16xf32>
    %cst_84 = arith.constant dense<0.000000e+00> : vector<16x16xf32>
    %123 = tpu.matmul %1, %117, %cst_84 {dimension_numbers = #tpu.dot_dimension_numbers<[1], [0], [0], [1], [0, 0, 1, 1], [], []>} : vector<16x32xbf16>, vector<32x16xbf16>, vector<16x16xf32> -> vector<16x16xf32>
    %cst_85 = arith.constant dense<0.000000e+00> : vector<16x16xf32>
    %124 = tpu.matmul %1, %119, %cst_85 {dimension_numbers = #tpu.dot_dimension_numbers<[1], [0], [0], [1], [0, 0, 1, 1], [], []>} : vector<16x32xbf16>, vector<32x16xbf16>, vector<16x16xf32> -> vector<16x16xf32>
    %125 = arith.truncf %122 : vector<16x16xf32> to vector<16x16xbf16>
    %126 = vector.shape_cast %125 : vector<16x16xbf16> to vector<2x8x16xbf16>
    %127 = arith.truncf %123 : vector<16x16xf32> to vector<16x16xbf16>
    %128 = vector.shape_cast %127 : vector<16x16xbf16> to vector<2x8x16xbf16>
    %129 = arith.truncf %124 : vector<16x16xf32> to vector<16x16xbf16>
    %130 = vector.shape_cast %129 : vector<16x16xbf16> to vector<2x8x16xbf16>
    %cst_86 = arith.constant dense<0.000000e+00> : vector<2x8x8xf32>
    %131 = tpu.matmul %126, %128, %cst_86 {dimension_numbers = #tpu.dot_dimension_numbers<[2], [2], [1], [1], [0, 0, 0, 1, 1, 1], [0], [0]>} : vector<2x8x16xbf16>, vector<2x8x16xbf16>, vector<2x8x8xf32> -> vector<2x8x8xf32>
    %cst_87 = arith.constant dense<0xFF800000> : vector<2x8xf32>
    %132 = vector.multi_reduction <maximumf>, %131, %cst_87 [2] : vector<2x8x8xf32> to vector<2x8xf32>
    %133 = vector.shape_cast %132 : vector<2x8xf32> to vector<2x8x1xf32>
    %134 = vector.broadcast %133 : vector<2x8x1xf32> to vector<2x8x8xf32>
    %135 = arith.subf %131, %134 : vector<2x8x8xf32>
    %136 = math.exp %135 : vector<2x8x8xf32>
    %cst_88 = arith.constant dense<0.000000e+00> : vector<2x8xf32>
    %137 = vector.multi_reduction <add>, %136, %cst_88 [2] : vector<2x8x8xf32> to vector<2x8xf32>
    %138 = vector.shape_cast %137 : vector<2x8xf32> to vector<2x8x1xf32>
    %139 = tpu.reciprocal %138 : vector<2x8x1xf32> -> vector<2x8x1xf32>
    %140 = vector.broadcast %139 : vector<2x8x1xf32> to vector<2x8x8xf32>
    %141 = arith.mulf %136, %140 : vector<2x8x8xf32>
    %c0_89 = arith.constant 0 : index
    %c3_90 = arith.constant 3 : index
    %c0_91 = arith.constant 0 : index
    %c0_92 = arith.constant 0 : index
    %142 = vector.load %arg8[%c0_89, %c3_90, %c0_91, %c0_92] : memref<2x8x8x8xf32, #tpu.memory_space<vmem>>, vector<2x1x8x8xf32>
    %143 = vector.shape_cast %142 : vector<2x1x8x8xf32> to vector<2x8x8xf32>
    %144 = vector.shape_cast %141 : vector<2x8x8xf32> to vector<2x1x8x8xf32>
    tpu.vector_store %arg8[%c0_89, %c3_90, %c0_91, %c0_92], %144 {strides = array<i32>} : memref<2x8x8x8xf32, #tpu.memory_space<vmem>>, vector<2x1x8x8xf32>,
    %145 = arith.truncf %141 : vector<2x8x8xf32> to vector<2x8x8xbf16>
    %cst_93 = arith.constant dense<0.000000e+00> : vector<2x8x16xf32>
    %146 = tpu.matmul %145, %130, %cst_93 {dimension_numbers = #tpu.dot_dimension_numbers<[2], [1], [1], [2], [0, 0, 0, 1, 1, 2], [0], [0]>} : vector<2x8x8xbf16>, vector<2x8x16xbf16>, vector<2x8x16xf32> -> vector<2x8x16xf32>
    %147 = vector.shape_cast %146 : vector<2x8x16xf32> to vector<16x16xf32>
    %148 = arith.truncf %147 : vector<16x16xf32> to vector<16x16xbf16>
    %cst_94 = arith.constant dense<0.000000e+00> : vector<16x32xf32>
    %149 = tpu.matmul %148, %121, %cst_94 {dimension_numbers = #tpu.dot_dimension_numbers<[1], [0], [0], [1], [0, 0, 1, 1], [], []>} : vector<16x16xbf16>, vector<16x32xbf16>, vector<16x32xf32> -> vector<16x32xf32>
    %150 = arith.addf %113, %149 : vector<16x32xf32>
    %c4 = arith.constant 4 : index
    %c0_95 = arith.constant 0 : index
    %c0_96 = arith.constant 0 : index
    %151 = vector.load %arg2[%c4, %c0_95, %c0_96] : memref<8x32x16xbf16, #tpu.memory_space<vmem>>, vector<1x32x16xbf16>
    %152 = vector.shape_cast %151 : vector<1x32x16xbf16> to vector<32x16xbf16>
    %c4_97 = arith.constant 4 : index
    %c0_98 = arith.constant 0 : index
    %c0_99 = arith.constant 0 : index
    %153 = vector.load %arg3[%c4_97, %c0_98, %c0_99] : memref<8x32x16xbf16, #tpu.memory_space<vmem>>, vector<1x32x16xbf16>
    %154 = vector.shape_cast %153 : vector<1x32x16xbf16> to vector<32x16xbf16>
    %c4_100 = arith.constant 4 : index
    %c0_101 = arith.constant 0 : index
    %c0_102 = arith.constant 0 : index
    %155 = vector.load %arg4[%c4_100, %c0_101, %c0_102] : memref<8x32x16xbf16, #tpu.memory_space<vmem>>, vector<1x32x16xbf16>
    %156 = vector.shape_cast %155 : vector<1x32x16xbf16> to vector<32x16xbf16>
    %c4_103 = arith.constant 4 : index
    %c0_104 = arith.constant 0 : index
    %c0_105 = arith.constant 0 : index
    %157 = vector.load %arg5[%c4_103, %c0_104, %c0_105] : memref<8x16x32xbf16, #tpu.memory_space<vmem>>, vector<1x16x32xbf16>
    %158 = vector.shape_cast %157 : vector<1x16x32xbf16> to vector<16x32xbf16>
    %cst_106 = arith.constant dense<0.000000e+00> : vector<16x16xf32>
    %159 = tpu.matmul %1, %152, %cst_106 {dimension_numbers = #tpu.dot_dimension_numbers<[1], [0], [0], [1], [0, 0, 1, 1], [], []>} : vector<16x32xbf16>, vector<32x16xbf16>, vector<16x16xf32> -> vector<16x16xf32>
    %cst_107 = arith.constant dense<0.000000e+00> : vector<16x16xf32>
    %160 = tpu.matmul %1, %154, %cst_107 {dimension_numbers = #tpu.dot_dimension_numbers<[1], [0], [0], [1], [0, 0, 1, 1], [], []>} : vector<16x32xbf16>, vector<32x16xbf16>, vector<16x16xf32> -> vector<16x16xf32>
    %cst_108 = arith.constant dense<0.000000e+00> : vector<16x16xf32>
    %161 = tpu.matmul %1, %156, %cst_108 {dimension_numbers = #tpu.dot_dimension_numbers<[1], [0], [0], [1], [0, 0, 1, 1], [], []>} : vector<16x32xbf16>, vector<32x16xbf16>, vector<16x16xf32> -> vector<16x16xf32>
    %162 = arith.truncf %159 : vector<16x16xf32> to vector<16x16xbf16>
    %163 = vector.shape_cast %162 : vector<16x16xbf16> to vector<2x8x16xbf16>
    %164 = arith.truncf %160 : vector<16x16xf32> to vector<16x16xbf16>
    %165 = vector.shape_cast %164 : vector<16x16xbf16> to vector<2x8x16xbf16>
    %166 = arith.truncf %161 : vector<16x16xf32> to vector<16x16xbf16>
    %167 = vector.shape_cast %166 : vector<16x16xbf16> to vector<2x8x16xbf16>
    %cst_109 = arith.constant dense<0.000000e+00> : vector<2x8x8xf32>
    %168 = tpu.matmul %163, %165, %cst_109 {dimension_numbers = #tpu.dot_dimension_numbers<[2], [2], [1], [1], [0, 0, 0, 1, 1, 1], [0], [0]>} : vector<2x8x16xbf16>, vector<2x8x16xbf16>, vector<2x8x8xf32> -> vector<2x8x8xf32>
    %cst_110 = arith.constant dense<0xFF800000> : vector<2x8xf32>
    %169 = vector.multi_reduction <maximumf>, %168, %cst_110 [2] : vector<2x8x8xf32> to vector<2x8xf32>
    %170 = vector.shape_cast %169 : vector<2x8xf32> to vector<2x8x1xf32>
    %171 = vector.broadcast %170 : vector<2x8x1xf32> to vector<2x8x8xf32>
    %172 = arith.subf %168, %171 : vector<2x8x8xf32>
    %173 = math.exp %172 : vector<2x8x8xf32>
    %cst_111 = arith.constant dense<0.000000e+00> : vector<2x8xf32>
    %174 = vector.multi_reduction <add>, %173, %cst_111 [2] : vector<2x8x8xf32> to vector<2x8xf32>
    %175 = vector.shape_cast %174 : vector<2x8xf32> to vector<2x8x1xf32>
    %176 = tpu.reciprocal %175 : vector<2x8x1xf32> -> vector<2x8x1xf32>
    %177 = vector.broadcast %176 : vector<2x8x1xf32> to vector<2x8x8xf32>
    %178 = arith.mulf %173, %177 : vector<2x8x8xf32>
    %c0_112 = arith.constant 0 : index
    %c4_113 = arith.constant 4 : index
    %c0_114 = arith.constant 0 : index
    %c0_115 = arith.constant 0 : index
    %179 = vector.load %arg8[%c0_112, %c4_113, %c0_114, %c0_115] : memref<2x8x8x8xf32, #tpu.memory_space<vmem>>, vector<2x1x8x8xf32>
    %180 = vector.shape_cast %179 : vector<2x1x8x8xf32> to vector<2x8x8xf32>
    %181 = vector.shape_cast %178 : vector<2x8x8xf32> to vector<2x1x8x8xf32>
    tpu.vector_store %arg8[%c0_112, %c4_113, %c0_114, %c0_115], %181 {strides = array<i32>} : memref<2x8x8x8xf32, #tpu.memory_space<vmem>>, vector<2x1x8x8xf32>,
    %182 = arith.truncf %178 : vector<2x8x8xf32> to vector<2x8x8xbf16>
    %cst_116 = arith.constant dense<0.000000e+00> : vector<2x8x16xf32>
    %183 = tpu.matmul %182, %167, %cst_116 {dimension_numbers = #tpu.dot_dimension_numbers<[2], [1], [1], [2], [0, 0, 0, 1, 1, 2], [0], [0]>} : vector<2x8x8xbf16>, vector<2x8x16xbf16>, vector<2x8x16xf32> -> vector<2x8x16xf32>
    %184 = vector.shape_cast %183 : vector<2x8x16xf32> to vector<16x16xf32>
    %185 = arith.truncf %184 : vector<16x16xf32> to vector<16x16xbf16>
    %cst_117 = arith.constant dense<0.000000e+00> : vector<16x32xf32>
    %186 = tpu.matmul %185, %158, %cst_117 {dimension_numbers = #tpu.dot_dimension_numbers<[1], [0], [0], [1], [0, 0, 1, 1], [], []>} : vector<16x16xbf16>, vector<16x32xbf16>, vector<16x32xf32> -> vector<16x32xf32>
    %187 = arith.addf %150, %186 : vector<16x32xf32>
    %c5 = arith.constant 5 : index
    %c0_118 = arith.constant 0 : index
    %c0_119 = arith.constant 0 : index
    %188 = vector.load %arg2[%c5, %c0_118, %c0_119] : memref<8x32x16xbf16, #tpu.memory_space<vmem>>, vector<1x32x16xbf16>
    %189 = vector.shape_cast %188 : vector<1x32x16xbf16> to vector<32x16xbf16>
    %c5_120 = arith.constant 5 : index
    %c0_121 = arith.constant 0 : index
    %c0_122 = arith.constant 0 : index
    %190 = vector.load %arg3[%c5_120, %c0_121, %c0_122] : memref<8x32x16xbf16, #tpu.memory_space<vmem>>, vector<1x32x16xbf16>
    %191 = vector.shape_cast %190 : vector<1x32x16xbf16> to vector<32x16xbf16>
    %c5_123 = arith.constant 5 : index
    %c0_124 = arith.constant 0 : index
    %c0_125 = arith.constant 0 : index
    %192 = vector.load %arg4[%c5_123, %c0_124, %c0_125] : memref<8x32x16xbf16, #tpu.memory_space<vmem>>, vector<1x32x16xbf16>
    %193 = vector.shape_cast %192 : vector<1x32x16xbf16> to vector<32x16xbf16>
    %c5_126 = arith.constant 5 : index
    %c0_127 = arith.constant 0 : index
    %c0_128 = arith.constant 0 : index
    %194 = vector.load %arg5[%c5_126, %c0_127, %c0_128] : memref<8x16x32xbf16, #tpu.memory_space<vmem>>, vector<1x16x32xbf16>
    %195 = vector.shape_cast %194 : vector<1x16x32xbf16> to vector<16x32xbf16>
    %cst_129 = arith.constant dense<0.000000e+00> : vector<16x16xf32>
    %196 = tpu.matmul %1, %189, %cst_129 {dimension_numbers = #tpu.dot_dimension_numbers<[1], [0], [0], [1], [0, 0, 1, 1], [], []>} : vector<16x32xbf16>, vector<32x16xbf16>, vector<16x16xf32> -> vector<16x16xf32>
    %cst_130 = arith.constant dense<0.000000e+00> : vector<16x16xf32>
    %197 = tpu.matmul %1, %191, %cst_130 {dimension_numbers = #tpu.dot_dimension_numbers<[1], [0], [0], [1], [0, 0, 1, 1], [], []>} : vector<16x32xbf16>, vector<32x16xbf16>, vector<16x16xf32> -> vector<16x16xf32>
    %cst_131 = arith.constant dense<0.000000e+00> : vector<16x16xf32>
    %198 = tpu.matmul %1, %193, %cst_131 {dimension_numbers = #tpu.dot_dimension_numbers<[1], [0], [0], [1], [0, 0, 1, 1], [], []>} : vector<16x32xbf16>, vector<32x16xbf16>, vector<16x16xf32> -> vector<16x16xf32>
    %199 = arith.truncf %196 : vector<16x16xf32> to vector<16x16xbf16>
    %200 = vector.shape_cast %199 : vector<16x16xbf16> to vector<2x8x16xbf16>
    %201 = arith.truncf %197 : vector<16x16xf32> to vector<16x16xbf16>
    %202 = vector.shape_cast %201 : vector<16x16xbf16> to vector<2x8x16xbf16>
    %203 = arith.truncf %198 : vector<16x16xf32> to vector<16x16xbf16>
    %204 = vector.shape_cast %203 : vector<16x16xbf16> to vector<2x8x16xbf16>
    %cst_132 = arith.constant dense<0.000000e+00> : vector<2x8x8xf32>
    %205 = tpu.matmul %200, %202, %cst_132 {dimension_numbers = #tpu.dot_dimension_numbers<[2], [2], [1], [1], [0, 0, 0, 1, 1, 1], [0], [0]>} : vector<2x8x16xbf16>, vector<2x8x16xbf16>, vector<2x8x8xf32> -> vector<2x8x8xf32>
    %cst_133 = arith.constant dense<0xFF800000> : vector<2x8xf32>
    %206 = vector.multi_reduction <maximumf>, %205, %cst_133 [2] : vector<2x8x8xf32> to vector<2x8xf32>
    %207 = vector.shape_cast %206 : vector<2x8xf32> to vector<2x8x1xf32>
    %208 = vector.broadcast %207 : vector<2x8x1xf32> to vector<2x8x8xf32>
    %209 = arith.subf %205, %208 : vector<2x8x8xf32>
    %210 = math.exp %209 : vector<2x8x8xf32>
    %cst_134 = arith.constant dense<0.000000e+00> : vector<2x8xf32>
    %211 = vector.multi_reduction <add>, %210, %cst_134 [2] : vector<2x8x8xf32> to vector<2x8xf32>
    %212 = vector.shape_cast %211 : vector<2x8xf32> to vector<2x8x1xf32>
    %213 = tpu.reciprocal %212 : vector<2x8x1xf32> -> vector<2x8x1xf32>
    %214 = vector.broadcast %213 : vector<2x8x1xf32> to vector<2x8x8xf32>
    %215 = arith.mulf %210, %214 : vector<2x8x8xf32>
    %c0_135 = arith.constant 0 : index
    %c5_136 = arith.constant 5 : index
    %c0_137 = arith.constant 0 : index
    %c0_138 = arith.constant 0 : index
    %216 = vector.load %arg8[%c0_135, %c5_136, %c0_137, %c0_138] : memref<2x8x8x8xf32, #tpu.memory_space<vmem>>, vector<2x1x8x8xf32>
    %217 = vector.shape_cast %216 : vector<2x1x8x8xf32> to vector<2x8x8xf32>
    %218 = vector.shape_cast %215 : vector<2x8x8xf32> to vector<2x1x8x8xf32>
    tpu.vector_store %arg8[%c0_135, %c5_136, %c0_137, %c0_138], %218 {strides = array<i32>} : memref<2x8x8x8xf32, #tpu.memory_space<vmem>>, vector<2x1x8x8xf32>,
    %219 = arith.truncf %215 : vector<2x8x8xf32> to vector<2x8x8xbf16>
    %cst_139 = arith.constant dense<0.000000e+00> : vector<2x8x16xf32>
    %220 = tpu.matmul %219, %204, %cst_139 {dimension_numbers = #tpu.dot_dimension_numbers<[2], [1], [1], [2], [0, 0, 0, 1, 1, 2], [0], [0]>} : vector<2x8x8xbf16>, vector<2x8x16xbf16>, vector<2x8x16xf32> -> vector<2x8x16xf32>
    %221 = vector.shape_cast %220 : vector<2x8x16xf32> to vector<16x16xf32>
    %222 = arith.truncf %221 : vector<16x16xf32> to vector<16x16xbf16>
    %cst_140 = arith.constant dense<0.000000e+00> : vector<16x32xf32>
    %223 = tpu.matmul %222, %195, %cst_140 {dimension_numbers = #tpu.dot_dimension_numbers<[1], [0], [0], [1], [0, 0, 1, 1], [], []>} : vector<16x16xbf16>, vector<16x32xbf16>, vector<16x32xf32> -> vector<16x32xf32>
    %224 = arith.addf %187, %223 : vector<16x32xf32>
    %c6 = arith.constant 6 : index
    %c0_141 = arith.constant 0 : index
    %c0_142 = arith.constant 0 : index
    %225 = vector.load %arg2[%c6, %c0_141, %c0_142] : memref<8x32x16xbf16, #tpu.memory_space<vmem>>, vector<1x32x16xbf16>
    %226 = vector.shape_cast %225 : vector<1x32x16xbf16> to vector<32x16xbf16>
    %c6_143 = arith.constant 6 : index
    %c0_144 = arith.constant 0 : index
    %c0_145 = arith.constant 0 : index
    %227 = vector.load %arg3[%c6_143, %c0_144, %c0_145] : memref<8x32x16xbf16, #tpu.memory_space<vmem>>, vector<1x32x16xbf16>
    %228 = vector.shape_cast %227 : vector<1x32x16xbf16> to vector<32x16xbf16>
    %c6_146 = arith.constant 6 : index
    %c0_147 = arith.constant 0 : index
    %c0_148 = arith.constant 0 : index
    %229 = vector.load %arg4[%c6_146, %c0_147, %c0_148] : memref<8x32x16xbf16, #tpu.memory_space<vmem>>, vector<1x32x16xbf16>
    %230 = vector.shape_cast %229 : vector<1x32x16xbf16> to vector<32x16xbf16>
    %c6_149 = arith.constant 6 : index
    %c0_150 = arith.constant 0 : index
    %c0_151 = arith.constant 0 : index
    %231 = vector.load %arg5[%c6_149, %c0_150, %c0_151] : memref<8x16x32xbf16, #tpu.memory_space<vmem>>, vector<1x16x32xbf16>
    %232 = vector.shape_cast %231 : vector<1x16x32xbf16> to vector<16x32xbf16>
    %cst_152 = arith.constant dense<0.000000e+00> : vector<16x16xf32>
    %233 = tpu.matmul %1, %226, %cst_152 {dimension_numbers = #tpu.dot_dimension_numbers<[1], [0], [0], [1], [0, 0, 1, 1], [], []>} : vector<16x32xbf16>, vector<32x16xbf16>, vector<16x16xf32> -> vector<16x16xf32>
    %cst_153 = arith.constant dense<0.000000e+00> : vector<16x16xf32>
    %234 = tpu.matmul %1, %228, %cst_153 {dimension_numbers = #tpu.dot_dimension_numbers<[1], [0], [0], [1], [0, 0, 1, 1], [], []>} : vector<16x32xbf16>, vector<32x16xbf16>, vector<16x16xf32> -> vector<16x16xf32>
    %cst_154 = arith.constant dense<0.000000e+00> : vector<16x16xf32>
    %235 = tpu.matmul %1, %230, %cst_154 {dimension_numbers = #tpu.dot_dimension_numbers<[1], [0], [0], [1], [0, 0, 1, 1], [], []>} : vector<16x32xbf16>, vector<32x16xbf16>, vector<16x16xf32> -> vector<16x16xf32>
    %236 = arith.truncf %233 : vector<16x16xf32> to vector<16x16xbf16>
    %237 = vector.shape_cast %236 : vector<16x16xbf16> to vector<2x8x16xbf16>
    %238 = arith.truncf %234 : vector<16x16xf32> to vector<16x16xbf16>
    %239 = vector.shape_cast %238 : vector<16x16xbf16> to vector<2x8x16xbf16>
    %240 = arith.truncf %235 : vector<16x16xf32> to vector<16x16xbf16>
    %241 = vector.shape_cast %240 : vector<16x16xbf16> to vector<2x8x16xbf16>
    %cst_155 = arith.constant dense<0.000000e+00> : vector<2x8x8xf32>
    %242 = tpu.matmul %237, %239, %cst_155 {dimension_numbers = #tpu.dot_dimension_numbers<[2], [2], [1], [1], [0, 0, 0, 1, 1, 1], [0], [0]>} : vector<2x8x16xbf16>, vector<2x8x16xbf16>, vector<2x8x8xf32> -> vector<2x8x8xf32>
    %cst_156 = arith.constant dense<0xFF800000> : vector<2x8xf32>
    %243 = vector.multi_reduction <maximumf>, %242, %cst_156 [2] : vector<2x8x8xf32> to vector<2x8xf32>
    %244 = vector.shape_cast %243 : vector<2x8xf32> to vector<2x8x1xf32>
    %245 = vector.broadcast %244 : vector<2x8x1xf32> to vector<2x8x8xf32>
    %246 = arith.subf %242, %245 : vector<2x8x8xf32>
    %247 = math.exp %246 : vector<2x8x8xf32>
    %cst_157 = arith.constant dense<0.000000e+00> : vector<2x8xf32>
    %248 = vector.multi_reduction <add>, %247, %cst_157 [2] : vector<2x8x8xf32> to vector<2x8xf32>
    %249 = vector.shape_cast %248 : vector<2x8xf32> to vector<2x8x1xf32>
    %250 = tpu.reciprocal %249 : vector<2x8x1xf32> -> vector<2x8x1xf32>
    %251 = vector.broadcast %250 : vector<2x8x1xf32> to vector<2x8x8xf32>
    %252 = arith.mulf %247, %251 : vector<2x8x8xf32>
    %c0_158 = arith.constant 0 : index
    %c6_159 = arith.constant 6 : index
    %c0_160 = arith.constant 0 : index
    %c0_161 = arith.constant 0 : index
    %253 = vector.load %arg8[%c0_158, %c6_159, %c0_160, %c0_161] : memref<2x8x8x8xf32, #tpu.memory_space<vmem>>, vector<2x1x8x8xf32>
    %254 = vector.shape_cast %253 : vector<2x1x8x8xf32> to vector<2x8x8xf32>
    %255 = vector.shape_cast %252 : vector<2x8x8xf32> to vector<2x1x8x8xf32>
    tpu.vector_store %arg8[%c0_158, %c6_159, %c0_160, %c0_161], %255 {strides = array<i32>} : memref<2x8x8x8xf32, #tpu.memory_space<vmem>>, vector<2x1x8x8xf32>,
    %256 = arith.truncf %252 : vector<2x8x8xf32> to vector<2x8x8xbf16>
    %cst_162 = arith.constant dense<0.000000e+00> : vector<2x8x16xf32>
    %257 = tpu.matmul %256, %241, %cst_162 {dimension_numbers = #tpu.dot_dimension_numbers<[2], [1], [1], [2], [0, 0, 0, 1, 1, 2], [0], [0]>} : vector<2x8x8xbf16>, vector<2x8x16xbf16>, vector<2x8x16xf32> -> vector<2x8x16xf32>
    %258 = vector.shape_cast %257 : vector<2x8x16xf32> to vector<16x16xf32>
    %259 = arith.truncf %258 : vector<16x16xf32> to vector<16x16xbf16>
    %cst_163 = arith.constant dense<0.000000e+00> : vector<16x32xf32>
    %260 = tpu.matmul %259, %232, %cst_163 {dimension_numbers = #tpu.dot_dimension_numbers<[1], [0], [0], [1], [0, 0, 1, 1], [], []>} : vector<16x16xbf16>, vector<16x32xbf16>, vector<16x32xf32> -> vector<16x32xf32>
    %261 = arith.addf %224, %260 : vector<16x32xf32>
    %c7 = arith.constant 7 : index
    %c0_164 = arith.constant 0 : index
    %c0_165 = arith.constant 0 : index
    %262 = vector.load %arg2[%c7, %c0_164, %c0_165] : memref<8x32x16xbf16, #tpu.memory_space<vmem>>, vector<1x32x16xbf16>
    %263 = vector.shape_cast %262 : vector<1x32x16xbf16> to vector<32x16xbf16>
    %c7_166 = arith.constant 7 : index
    %c0_167 = arith.constant 0 : index
    %c0_168 = arith.constant 0 : index
    %264 = vector.load %arg3[%c7_166, %c0_167, %c0_168] : memref<8x32x16xbf16, #tpu.memory_space<vmem>>, vector<1x32x16xbf16>
    %265 = vector.shape_cast %264 : vector<1x32x16xbf16> to vector<32x16xbf16>
    %c7_169 = arith.constant 7 : index
    %c0_170 = arith.constant 0 : index
    %c0_171 = arith.constant 0 : index
    %266 = vector.load %arg4[%c7_169, %c0_170, %c0_171] : memref<8x32x16xbf16, #tpu.memory_space<vmem>>, vector<1x32x16xbf16>
    %267 = vector.shape_cast %266 : vector<1x32x16xbf16> to vector<32x16xbf16>
    %c7_172 = arith.constant 7 : index
    %c0_173 = arith.constant 0 : index
    %c0_174 = arith.constant 0 : index
    %268 = vector.load %arg5[%c7_172, %c0_173, %c0_174] : memref<8x16x32xbf16, #tpu.memory_space<vmem>>, vector<1x16x32xbf16>
    %269 = vector.shape_cast %268 : vector<1x16x32xbf16> to vector<16x32xbf16>
    %cst_175 = arith.constant dense<0.000000e+00> : vector<16x16xf32>
    %270 = tpu.matmul %1, %263, %cst_175 {dimension_numbers = #tpu.dot_dimension_numbers<[1], [0], [0], [1], [0, 0, 1, 1], [], []>} : vector<16x32xbf16>, vector<32x16xbf16>, vector<16x16xf32> -> vector<16x16xf32>
    %cst_176 = arith.constant dense<0.000000e+00> : vector<16x16xf32>
    %271 = tpu.matmul %1, %265, %cst_176 {dimension_numbers = #tpu.dot_dimension_numbers<[1], [0], [0], [1], [0, 0, 1, 1], [], []>} : vector<16x32xbf16>, vector<32x16xbf16>, vector<16x16xf32> -> vector<16x16xf32>
    %cst_177 = arith.constant dense<0.000000e+00> : vector<16x16xf32>
    %272 = tpu.matmul %1, %267, %cst_177 {dimension_numbers = #tpu.dot_dimension_numbers<[1], [0], [0], [1], [0, 0, 1, 1], [], []>} : vector<16x32xbf16>, vector<32x16xbf16>, vector<16x16xf32> -> vector<16x16xf32>
    %273 = arith.truncf %270 : vector<16x16xf32> to vector<16x16xbf16>
    %274 = vector.shape_cast %273 : vector<16x16xbf16> to vector<2x8x16xbf16>
    %275 = arith.truncf %271 : vector<16x16xf32> to vector<16x16xbf16>
    %276 = vector.shape_cast %275 : vector<16x16xbf16> to vector<2x8x16xbf16>
    %277 = arith.truncf %272 : vector<16x16xf32> to vector<16x16xbf16>
    %278 = vector.shape_cast %277 : vector<16x16xbf16> to vector<2x8x16xbf16>
    %cst_178 = arith.constant dense<0.000000e+00> : vector<2x8x8xf32>
    %279 = tpu.matmul %274, %276, %cst_178 {dimension_numbers = #tpu.dot_dimension_numbers<[2], [2], [1], [1], [0, 0, 0, 1, 1, 1], [0], [0]>} : vector<2x8x16xbf16>, vector<2x8x16xbf16>, vector<2x8x8xf32> -> vector<2x8x8xf32>
    %cst_179 = arith.constant dense<0xFF800000> : vector<2x8xf32>
    %280 = vector.multi_reduction <maximumf>, %279, %cst_179 [2] : vector<2x8x8xf32> to vector<2x8xf32>
    %281 = vector.shape_cast %280 : vector<2x8xf32> to vector<2x8x1xf32>
    %282 = vector.broadcast %281 : vector<2x8x1xf32> to vector<2x8x8xf32>
    %283 = arith.subf %279, %282 : vector<2x8x8xf32>
    %284 = math.exp %283 : vector<2x8x8xf32>
    %cst_180 = arith.constant dense<0.000000e+00> : vector<2x8xf32>
    %285 = vector.multi_reduction <add>, %284, %cst_180 [2] : vector<2x8x8xf32> to vector<2x8xf32>
    %286 = vector.shape_cast %285 : vector<2x8xf32> to vector<2x8x1xf32>
    %287 = tpu.reciprocal %286 : vector<2x8x1xf32> -> vector<2x8x1xf32>
    %288 = vector.broadcast %287 : vector<2x8x1xf32> to vector<2x8x8xf32>
    %289 = arith.mulf %284, %288 : vector<2x8x8xf32>
    %c0_181 = arith.constant 0 : index
    %c7_182 = arith.constant 7 : index
    %c0_183 = arith.constant 0 : index
    %c0_184 = arith.constant 0 : index
    %290 = vector.load %arg8[%c0_181, %c7_182, %c0_183, %c0_184] : memref<2x8x8x8xf32, #tpu.memory_space<vmem>>, vector<2x1x8x8xf32>
    %291 = vector.shape_cast %290 : vector<2x1x8x8xf32> to vector<2x8x8xf32>
    %292 = vector.shape_cast %289 : vector<2x8x8xf32> to vector<2x1x8x8xf32>
    tpu.vector_store %arg8[%c0_181, %c7_182, %c0_183, %c0_184], %292 {strides = array<i32>} : memref<2x8x8x8xf32, #tpu.memory_space<vmem>>, vector<2x1x8x8xf32>,
    %293 = arith.truncf %289 : vector<2x8x8xf32> to vector<2x8x8xbf16>
    %cst_185 = arith.constant dense<0.000000e+00> : vector<2x8x16xf32>
    %294 = tpu.matmul %293, %278, %cst_185 {dimension_numbers = #tpu.dot_dimension_numbers<[2], [1], [1], [2], [0, 0, 0, 1, 1, 2], [0], [0]>} : vector<2x8x8xbf16>, vector<2x8x16xbf16>, vector<2x8x16xf32> -> vector<2x8x16xf32>
    %295 = vector.shape_cast %294 : vector<2x8x16xf32> to vector<16x16xf32>
    %296 = arith.truncf %295 : vector<16x16xf32> to vector<16x16xbf16>
    %cst_186 = arith.constant dense<0.000000e+00> : vector<16x32xf32>
    %297 = tpu.matmul %296, %269, %cst_186 {dimension_numbers = #tpu.dot_dimension_numbers<[1], [0], [0], [1], [0, 0, 1, 1], [], []>} : vector<16x16xbf16>, vector<16x32xbf16>, vector<16x32xf32> -> vector<16x32xf32>
    %298 = arith.addf %261, %297 : vector<16x32xf32>
    %c0_187 = arith.constant 0 : index
    %c0_188 = arith.constant 0 : index
    %299 = vector.load %arg6[%c0_187, %c0_188] : memref<1x32xf32, #tpu.memory_space<vmem>>, vector<1x32xf32>
    %300 = vector.broadcast %299 : vector<1x32xf32> to vector<16x32xf32>
    %301 = arith.addf %298, %300 : vector<16x32xf32>
    %302 = vector.shape_cast %301 : vector<16x32xf32> to vector<2x8x32xf32>
    %c0_189 = arith.constant 0 : index
    %c0_190 = arith.constant 0 : index
    %c0_191 = arith.constant 0 : index
    %303 = vector.load %arg7[%c0_189, %c0_190, %c0_191] : memref<2x8x32xf32, #tpu.memory_space<vmem>>, vector<2x8x32xf32>
    tpu.vector_store %arg7[%c0_189, %c0_190, %c0_191], %302 {strides = array<i32>} : memref<2x8x32xf32, #tpu.memory_space<vmem>>, vector<2x8x32xf32>,
    return
  }
  func.func @transform_0(%arg0: i32) -> (i32, i32, i32) {
    %c0_i32 = arith.constant 0 : i32
    %c0_i32_0 = arith.constant 0 : i32
    %c0_i32_1 = arith.constant 0 : i32
    return %arg0, %c0_i32, %c0_i32_0 : i32, i32, i32
  }
  func.func @transform_1(%arg0: i32) -> (i32, i32, i32) {
    %c0_i32 = arith.constant 0 : i32
    %c0_i32_0 = arith.constant 0 : i32
    %c0_i32_1 = arith.constant 0 : i32
    %c0_i32_2 = arith.constant 0 : i32
    return %c0_i32, %c0_i32_0, %c0_i32_1 : i32, i32, i32
  }
  func.func @transform_2(%arg0: i32) -> (i32, i32, i32) {
    %c0_i32 = arith.constant 0 : i32
    %c0_i32_0 = arith.constant 0 : i32
    %c0_i32_1 = arith.constant 0 : i32
    %c0_i32_2 = arith.constant 0 : i32
    return %c0_i32, %c0_i32_0, %c0_i32_1 : i32, i32, i32
  }
  func.func @transform_3(%arg0: i32) -> (i32, i32, i32) {
    %c0_i32 = arith.constant 0 : i32
    %c0_i32_0 = arith.constant 0 : i32
    %c0_i32_1 = arith.constant 0 : i32
    %c0_i32_2 = arith.constant 0 : i32
    return %c0_i32, %c0_i32_0, %c0_i32_1 : i32, i32, i32
  }
  func.func @transform_4(%arg0: i32) -> (i32, i32, i32) {
    %c0_i32 = arith.constant 0 : i32
    %c0_i32_0 = arith.constant 0 : i32
    %c0_i32_1 = arith.constant 0 : i32
    %c0_i32_2 = arith.constant 0 : i32
    return %c0_i32, %c0_i32_0, %c0_i32_1 : i32, i32, i32
  }
  func.func @transform_5(%arg0: i32) -> (i32, i32) {
    %c0_i32 = arith.constant 0 : i32
    %c0_i32_0 = arith.constant 0 : i32
    %c0_i32_1 = arith.constant 0 : i32
    return %c0_i32, %c0_i32_0 : i32, i32
  }
  func.func @transform_6(%arg0: i32) -> (i32, i32, i32) {
    %c0_i32 = arith.constant 0 : i32
    %c0_i32_0 = arith.constant 0 : i32
    %c0_i32_1 = arith.constant 0 : i32
    return %arg0, %c0_i32, %c0_i32_0 : i32, i32, i32
  }
  func.func @transform_7(%arg0: i32) -> (i32, i32, i32, i32) {
    %c0_i32 = arith.constant 0 : i32
    %c0_i32_0 = arith.constant 0 : i32
    %c0_i32_1 = arith.constant 0 : i32
    %c0_i32_2 = arith.constant 0 : i32
    return %arg0, %c0_i32, %c0_i32_0, %c0_i32_1 : i32, i32, i32, i32
  }
}

</mosaic_0001>

<llo_original>
// kernel: tpu_custom_call.1
$region0: #{tpu_custom_call.1}
  #allocation0 [shape = 'u32[]', space=smem, size = 0x4, offset = 0x4, fixed_abs, tag = 'smem constant byte address 0x4 - core index']
  #allocation1 [shape = 'u32[72,128]{1,0:T(1,128)}', space=vmem, size = 0x9000, scoped, tag = 'internal scratch']
  %s0 = inlined_call_operand.vmem [shape: bf16[4,8,32], index: 0, kind: input, shape index: {}]
  %s1 = inlined_call_operand.vmem [shape: bf16[8,32,16], index: 1, kind: input, shape index: {}]
  %s2 = inlined_call_operand.vmem [shape: bf16[8,32,16], index: 2, kind: input, shape index: {}]
  %s3 = inlined_call_operand.vmem [shape: bf16[8,32,16], index: 3, kind: input, shape index: {}]
  %s4 = inlined_call_operand.vmem [shape: bf16[8,16,32], index: 4, kind: input, shape index: {}]
  %s5 = inlined_call_operand.vmem [shape: f32[1,32], index: 5, kind: input, shape index: {}]
  %s6 = inlined_call_operand.hbm [shape: f32[4,8,32], index: 6, kind: output, shape index: {0}]
  %s7 = inlined_call_operand.hbm [shape: f32[4,8,8,8], index: 7, kind: output, shape index: {1}]
  %8 = xla_tuple %s6, %s7
  %s9 = sld [smem:[#allocation0]]
  $region65: #{tpu_custom_call.1} parent=0
    _
  %s11 = ssub.s32 1, %s9
  %s12 = scalar_select 0, %s11, %s9
  $region1: #{tpu_custom_call.1} parent=0
    #allocation2 [shape = 'u8[16384]{0}', space=vmem, size = 0x4000, scoped, tag = 'output window, operand 0']
    #allocation3 [shape = 's32[2]{0}', space=sflag, size = 0x8, scoped, tag = 'scoped memory for tpu_custom_call.1']
    #allocation4 [shape = 'u8[131072]{0}', space=vmem, size = 0x20000, scoped, tag = 'output window, operand 1']
    #allocation5 [shape = 's32[2]{0}', space=sflag, size = 0x8, scoped, tag = 'scoped memory for tpu_custom_call.1']
    %13 = vsyncpa [#allocation3], 0
    %s14 = scalar_lea.sflag [#allocation3], 1
    %15 = vsyncpa %s14, 0
    %16 = vsyncpa [#allocation5], 0
    %s17 = scalar_lea.sflag [#allocation5], 1
    %18 = vsyncpa %s17, 0
    loop: start=0, step=1, limit=4
    $region2: #{tpu_custom_call.1} parent=1 // loop_pre_header
      _
    $region3: #{tpu_custom_call.1} parent=1 // loop_header
      %s20 = sphi 0, %s24
      %p21 = scmp.ge.s32.totalorder %s20, 4
      %s30 = sphi 0, %s32
      %s33 = sphi 0, %s30
      %s34 = sphi 0, %s33
      %s50 = sphi 0, %s34
      %s54 = sphi 0, %s54
      %s56 = sphi 0, %s54
      %s57 = sphi 0, %s56
      %s71 = sphi 0, %s57
      %s75 = sphi 0, %s75
      %s77 = sphi 0, %s75
      %s78 = sphi 0, %s77
      %s92 = sphi 0, %s78
      %s96 = sphi 0, %s96
      %s98 = sphi 0, %s96
      %s99 = sphi 0, %s98
      %s113 = sphi 0, %s99
      %s117 = sphi 0, %s117
      %s119 = sphi 0, %s117
      %s120 = sphi 0, %s119
      %s134 = sphi 0, %s120
      %s138 = sphi 0, %s138
      %s140 = sphi 0, %s138
      %s141 = sphi 0, %s140
      %s155 = sphi 0, %s141
      %s161 = sphi 0, %s163
      %s164 = sphi 0, %s161
      %s165 = sphi 0, %s164
      %s181 = sphi 0, %s165
      %s187 = sphi 0, %s189
      %s190 = sphi 0, %s187
      %s191 = sphi 0, %s190
      %s207 = sphi 0, %s191
    $region4: #{tpu_custom_call.1} parent=1 // loop_header_branch
      %23 = sbr.rel (%p21) target = $region8
    $region5: #{tpu_custom_call.1} parent=1 // loop_body
      %s25 = ssub.s32 %s20, 1
      %s26 = ssub.s32 %s20, 2
      %s27 = sadd.s32 %s20, 1
      %s28 = ssub.s32 %s20, %s27
      %p29 = scmp.eq.s32.totalorder %s28, 0
      %s31 = sadd.s32 %s30, 1
      %s32 = scalar_select %p29, %s30, %s31
      %p35 = pneg %p29
      %p36 = scmp.eq.s32.totalorder %s20, 1
      %p37 = por %p35, %p36
      %p38 = scmp.ne.s32.totalorder %s30, %s33
      %p39 = scmp.eq.s32.totalorder %s20, 0
      %p40 = por %p38, %p39
      %p41 = scmp.ne.s32.totalorder %s30, %s33
      %p42 = scmp.eq.s32.totalorder %s25, 1
      %p43 = por %p41, %p42
      %p44 = scmp.ne.s32.totalorder %s33, %s34
      %p45 = scmp.eq.s32.totalorder %s25, 0
      %p46 = por %p44, %p45
      %p47 = scmp.ne.s32.totalorder %s33, %s34
      %p48 = scmp.eq.s32.totalorder %s26, 1
      %p49 = por %p47, %p48
      %p51 = scmp.ne.s32.totalorder %s34, %s50
      %p52 = scmp.eq.s32.totalorder %s26, 0
      %p53 = por %p51, %p52
      %s55 = sadd.s32 %s54, 1
      %p58 = scmp.eq.s32.totalorder %s20, 1
      %p59 = scmp.ne.s32.totalorder %s54, %s56
      %p60 = scmp.eq.s32.totalorder %s20, 0
      %p61 = por %p59, %p60
      %p62 = scmp.ne.s32.totalorder %s54, %s56
      %p63 = scmp.eq.s32.totalorder %s25, 1
      %p64 = por %p62, %p63
      %p65 = scmp.ne.s32.totalorder %s56, %s57
      %p66 = scmp.eq.s32.totalorder %s25, 0
      %p67 = por %p65, %p66
      %p68 = scmp.ne.s32.totalorder %s56, %s57
      %p69 = scmp.eq.s32.totalorder %s26, 1
      %p70 = por %p68, %p69
      %p72 = scmp.ne.s32.totalorder %s57, %s71
      %p73 = scmp.eq.s32.totalorder %s26, 0
      %p74 = por %p72, %p73
      %s76 = sadd.s32 %s75, 1
      %p79 = scmp.eq.s32.totalorder %s20, 1
      %p80 = scmp.ne.s32.totalorder %s75, %s77
      %p81 = scmp.eq.s32.totalorder %s20, 0
      %p82 = por %p80, %p81
      %p83 = scmp.ne.s32.totalorder %s75, %s77
      %p84 = scmp.eq.s32.totalorder %s25, 1
      %p85 = por %p83, %p84
      %p86 = scmp.ne.s32.totalorder %s77, %s78
      %p87 = scmp.eq.s32.totalorder %s25, 0
      %p88 = por %p86, %p87
      %p89 = scmp.ne.s32.totalorder %s77, %s78
      %p90 = scmp.eq.s32.totalorder %s26, 1
      %p91 = por %p89, %p90
      %p93 = scmp.ne.s32.totalorder %s78, %s92
      %p94 = scmp.eq.s32.totalorder %s26, 0
      %p95 = por %p93, %p94
      %s97 = sadd.s32 %s96, 1
      %p100 = scmp.eq.s32.totalorder %s20, 1
      %p101 = scmp.ne.s32.totalorder %s96, %s98
      %p102 = scmp.eq.s32.totalorder %s20, 0
      %p103 = por %p101, %p102
      %p104 = scmp.ne.s32.totalorder %s96, %s98
      %p105 = scmp.eq.s32.totalorder %s25, 1
      %p106 = por %p104, %p105
      %p107 = scmp.ne.s32.totalorder %s98, %s99
      %p108 = scmp.eq.s32.totalorder %s25, 0
      %p109 = por %p107, %p108
      %p110 = scmp.ne.s32.totalorder %s98, %s99
      %p111 = scmp.eq.s32.totalorder %s26, 1
      %p112 = por %p110, %p111
      %p114 = scmp.ne.s32.totalorder %s99, %s113
      %p115 = scmp.eq.s32.totalorder %s26, 0
      %p116 = por %p114, %p115
      %s118 = sadd.s32 %s117, 1
      %p121 = scmp.eq.s32.totalorder %s20, 1
      %p122 = scmp.ne.s32.totalorder %s117, %s119
      %p123 = scmp.eq.s32.totalorder %s20, 0
      %p124 = por %p122, %p123
      %p125 = scmp.ne.s32.totalorder %s117, %s119
      %p126 = scmp.eq.s32.totalorder %s25, 1
      %p127 = por %p125, %p126
      %p128 = scmp.ne.s32.totalorder %s119, %s120
      %p129 = scmp.eq.s32.totalorder %s25, 0
      %p130 = por %p128, %p129
      %p131 = scmp.ne.s32.totalorder %s119, %s120
      %p132 = scmp.eq.s32.totalorder %s26, 1
      %p133 = por %p131, %p132
      %p135 = scmp.ne.s32.totalorder %s120, %s134
      %p136 = scmp.eq.s32.totalorder %s26, 0
      %p137 = por %p135, %p136
      %s139 = sadd.s32 %s138, 1
      %p142 = scmp.eq.s32.totalorder %s20, 1
      %p143 = scmp.ne.s32.totalorder %s138, %s140
      %p144 = scmp.eq.s32.totalorder %s20, 0
      %p145 = por %p143, %p144
      %p146 = scmp.ne.s32.totalorder %s138, %s140
      %p147 = scmp.eq.s32.totalorder %s25, 1
      %p148 = por %p146, %p147
      %p149 = scmp.ne.s32.totalorder %s140, %s141
      %p150 = scmp.eq.s32.totalorder %s25, 0
      %p151 = por %p149, %p150
      %p152 = scmp.ne.s32.totalorder %s140, %s141
      %p153 = scmp.eq.s32.totalorder %s26, 1
      %p154 = por %p152, %p153
      %p156 = scmp.ne.s32.totalorder %s141, %s155
      %p157 = scmp.eq.s32.totalorder %s26, 0
      %p158 = por %p156, %p157
      %s159 = ssub.s32 %s20, %s27
      %p160 = scmp.eq.s32.totalorder %s159, 0
      %s162 = sadd.s32 %s161, 1
      %s163 = scalar_select %p160, %s161, %s162
      %p166 = pneg %p160
      %p167 = scmp.eq.s32.totalorder %s20, 1
      %p168 = por %p166, %p167
      %p169 = scmp.ne.s32.totalorder %s161, %s164
      %p170 = scmp.eq.s32.totalorder %s20, 0
      %p171 = por %p169, %p170
      %p172 = scmp.ne.s32.totalorder %s161, %s164
      %p173 = scmp.eq.s32.totalorder %s25, 1
      %p174 = por %p172, %p173
      %p175 = scmp.ne.s32.totalorder %s164, %s165
      %p176 = scmp.eq.s32.totalorder %s25, 0
      %p177 = por %p175, %p176
      %p178 = scmp.ne.s32.totalorder %s164, %s165
      %p179 = scmp.eq.s32.totalorder %s26, 1
      %p180 = por %p178, %p179
      %p182 = scmp.ne.s32.totalorder %s165, %s181
      %p183 = scmp.eq.s32.totalorder %s26, 0
      %p184 = por %p182, %p183
      %s185 = ssub.s32 %s20, %s27
      %p186 = scmp.eq.s32.totalorder %s185, 0
      %s188 = sadd.s32 %s187, 1
      %s189 = scalar_select %p186, %s187, %s188
      %p192 = pneg %p186
      %p193 = scmp.eq.s32.totalorder %s20, 1
      %p194 = por %p192, %p193
      %p195 = scmp.ne.s32.totalorder %s187, %s190
      %p196 = scmp.eq.s32.totalorder %s20, 0
      %p197 = por %p195, %p196
      %p198 = scmp.ne.s32.totalorder %s187, %s190
      %p199 = scmp.eq.s32.totalorder %s25, 1
      %p200 = por %p198, %p199
      %p201 = scmp.ne.s32.totalorder %s190, %s191
      %p202 = scmp.eq.s32.totalorder %s25, 0
      %p203 = por %p201, %p202
      %p204 = scmp.ne.s32.totalorder %s190, %s191
      %p205 = scmp.eq.s32.totalorder %s26, 1
      %p206 = por %p204, %p205
      %p208 = scmp.ne.s32.totalorder %s191, %s207
      %p209 = scmp.eq.s32.totalorder %s26, 0
      %p210 = por %p208, %p209
      %p211 = scmp.le.s32.totalorder 1, %s20
      %p212 = scmp.lt.s32.totalorder %s20, 3
      %p213 = pnand %p211, %p212
      %p214 = pneg %p213
      // Predicated region
      $region9: #{tpu_custom_call.1} parent=5 // pred_check
        _
      $region10: #{tpu_custom_call.1} parent=5 // pred_check_branch
        %216 = sbr.rel (%p213) target = $region12
      $region11: #{tpu_custom_call.1} parent=5 // pred_region
        %s217 = ssub.s32 %s20, 1
        // Predicated region
        $region13: #{tpu_custom_call.1} parent=11 // pred_check
          %p218 = pneg %p67
        $region14: #{tpu_custom_call.1} parent=11 // pred_check_branch
          %220 = sbr.rel (%p218) target = $region16
        $region15: #{tpu_custom_call.1} parent=11 // pred_region
          _
        $region16: #{tpu_custom_call.1} parent=11 // pred_fallthru
          _
        // Predicated region
        $region17: #{tpu_custom_call.1} parent=11 // pred_check
          %p221 = pneg %p88
        $region18: #{tpu_custom_call.1} parent=11 // pred_check_branch
          %223 = sbr.rel (%p221) target = $region20
        $region19: #{tpu_custom_call.1} parent=11 // pred_region
          _
        $region20: #{tpu_custom_call.1} parent=11 // pred_fallthru
          _
        // Predicated region
        $region21: #{tpu_custom_call.1} parent=11 // pred_check
          %p224 = pneg %p109
        $region22: #{tpu_custom_call.1} parent=11 // pred_check_branch
          %226 = sbr.rel (%p224) target = $region24
        $region23: #{tpu_custom_call.1} parent=11 // pred_region
          _
        $region24: #{tpu_custom_call.1} parent=11 // pred_fallthru
          _
        // Predicated region
        $region25: #{tpu_custom_call.1} parent=11 // pred_check
          %p227 = pneg %p130
        $region26: #{tpu_custom_call.1} parent=11 // pred_check_branch
          %229 = sbr.rel (%p227) target = $region28
        $region27: #{tpu_custom_call.1} parent=11 // pred_region
          _
        $region28: #{tpu_custom_call.1} parent=11 // pred_fallthru
          _
        // Predicated region
        $region29: #{tpu_custom_call.1} parent=11 // pred_check
          %p230 = pneg %p151
        $region30: #{tpu_custom_call.1} parent=11 // pred_check_branch
          %232 = sbr.rel (%p230) target = $region32
        $region31: #{tpu_custom_call.1} parent=11 // pred_region
          _
        $region32: #{tpu_custom_call.1} parent=11 // pred_fallthru
          _
      $region12: #{tpu_custom_call.1} parent=5 // pred_fallthru
        _
      %p233 = scmp.lt.s32.totalorder %s20, 2
      // Predicated region
      $region33: #{tpu_custom_call.1} parent=5 // pred_check
        %p234 = pneg %p233
      $region34: #{tpu_custom_call.1} parent=5 // pred_check_branch
        %236 = sbr.rel (%p234) target = $region36
      $region35: #{tpu_custom_call.1} parent=5 // pred_region
        // Predicated region
        $region37: #{tpu_custom_call.1} parent=35 // pred_check
          %p237 = pneg %p40
        $region38: #{tpu_custom_call.1} parent=35 // pred_check_branch
          %239 = sbr.rel (%p237) target = $region40
        $region39: #{tpu_custom_call.1} parent=35 // pred_region
          %s240 = smul.u32 2, %s20
          %p241 = scmp.lt.s32.totalorder %s240, 3
          %s242 = scalar_select %p241, %s240, 3
          %s243 = smul.addr %s242, 4
          %s244 = scalar_lea.vmem %s0, %s243
          %s245 = smul.u32 2, %s20
        $region40: #{tpu_custom_call.1} parent=35 // pred_fallthru
          _
      $region36: #{tpu_custom_call.1} parent=5 // pred_fallthru
        _
      %p246 = scmp.le.s32.totalorder 1, %s20
      %p247 = scmp.lt.s32.totalorder %s20, 3
      %p248 = pnand %p246, %p247
      %p249 = pneg %p248
      // Predicated region
      $region41: #{tpu_custom_call.1} parent=5 // pred_check
        _
      $region42: #{tpu_custom_call.1} parent=5 // pred_check_branch
        %251 = sbr.rel (%p248) target = $region44
      $region43: #{tpu_custom_call.1} parent=5 // pred_region
        %s252 = ssub.s32 %s20, 1
        %s253 = smul.u32 2, %s25
        %p254 = scmp.lt.s32.totalorder %s253, 3
        %s255 = scalar_select %p254, %s253, 3
        %s256 = smul.addr %s255, 4
        %s257 = scalar_lea.vmem %s0, %s256
        %p258 = pneg %p46
        %p259 = pneg %p43
        %p260 = pneg %p67
        %p261 = pneg %p64
        %p262 = pneg %p88
        %p263 = pneg %p85
        %p264 = pneg %p109
        %p265 = pneg %p106
        %p266 = pneg %p130
        %p267 = pneg %p127
        %p268 = pneg %p151
        %p269 = pneg %p148
        %p270 = pneg %p177
        %p271 = pneg %p174
        %s272 = sand.u32 %s164, 1
        %s273 = scalar_lea.sflag [#allocation3], %s272
        %s274 = sand.u32 %s164, 1
        %s275 = smul.addr %s274, 16
        %s276 = scalar_lea.vmem [#allocation2], %s275
        %p277 = pneg %p203
        %p278 = pneg %p200
        %s279 = sand.u32 %s190, 1
        %s280 = scalar_lea.sflag [#allocation5], %s279
        %s281 = sand.u32 %s190, 1
        %s282 = smul.addr %s281, 128
        %s283 = scalar_lea.vmem [#allocation4], %s282
        %s284 = smul.u32 2, %s25
        %p285 = scmp.lt.s32.totalorder %s284, 3
        %s286 = scalar_select %p285, %s284, 3
        %s287 = smul.addr %s286, 4
        %s288 = scalar_lea.vmem %s0, %s287
        %s289 = smul.u32 2, %s25
        %s290 = smul.u32 2, %s25
        %s291 = smul.u32 2, %s25
        %v293 = vld [vmem:[%s288] sm:$0xf]
        %v294 = vld [vmem:[%s288 + $0x4] sm:$0xf]
        %v295 = vld [vmem:[%s1] sm:$0xf]
        %v296 = vld [vmem:[%s1 + $0x4] sm:$0xf]
        %v297 = vld [vmem:[%s1 + $0x8] sm:$0xf]
        %v298 = vld [vmem:[%s1 + $0xc] sm:$0xf]
        %v299 = vld [vmem:[%s2] sm:$0xf]
        %v300 = vld [vmem:[%s2 + $0x4] sm:$0xf]
        %v301 = vld [vmem:[%s2 + $0x8] sm:$0xf]
        %v302 = vld [vmem:[%s2 + $0xc] sm:$0xf]
        %v303 = vld [vmem:[%s3] sm:$0xf]
        %v304 = vld [vmem:[%s3 + $0x4] sm:$0xf]
        %v305 = vld [vmem:[%s3 + $0x8] sm:$0xf]
        %v306 = vld [vmem:[%s3 + $0xc] sm:$0xf]
        %v307 = vld [vmem:[%s4] sm:$0xf]
        %v308 = vld [vmem:[%s4 + $0x4] sm:$0xf]
        %v311 = vunpack.c.l.b16 %v293
        %v312 = vunpack.c.l.b16 %v294
        %v313 = vpack.c.b16 %v312, %v311
        %v318 = vunpack.c.l.b16 %v295
        %v319 = vunpack.c.l.b16 %v296
        %v320 = vunpack.c.l.b16 %v297
        %v321 = vunpack.c.l.b16 %v298
        %v322 = vpack.c.b16 %v319, %v318
        %v323 = vpack.c.b16 %v321, %v320
        %vm326 = vcmask 261120
        %v328 = vsel %vm326, %v313, 0
        %330 = vmatpush.bf16.msra.mxu0 0
        %331 = vmatpush.bf16.msra.mxu0 0
        %332 = vmatpush.bf16.msra.mxu0 0
        %333 = vmatpush.bf16.msra.mxu0 0
        %334 = vmatpush.bf16.msra.mxu0 0
        %335 = vmatpush.bf16.msra.mxu0 0
        %336 = vmatpush.bf16.msra.mxu0 %v323
        %337 = vmatpush.bf16.msra.mxu0 %v322
        %338 = vmatmul.bf16.gmra.mxu0 %v328
        %v339 = vpop.f32.mrf.mxu0
        %v340 = vadd.f32 0.0, %v339
        %v341 = vpop.f32.mrf.mxu0
        %v342 = vadd.f32 0.0, %v341
        %343 = vdwg.mxu0
        %v348 = vunpack.c.l.b16 %v299
        %v349 = vunpack.c.l.b16 %v300
        %v350 = vunpack.c.l.b16 %v301
        %v351 = vunpack.c.l.b16 %v302
        %v352 = vpack.c.b16 %v349, %v348
        %v353 = vpack.c.b16 %v351, %v350
        %356 = vmatpush.bf16.msra.mxu0 0
        %357 = vmatpush.bf16.msra.mxu0 0
        %358 = vmatpush.bf16.msra.mxu0 0
        %359 = vmatpush.bf16.msra.mxu0 0
        %360 = vmatpush.bf16.msra.mxu0 0
        %361 = vmatpush.bf16.msra.mxu0 0
        %362 = vmatpush.bf16.msra.mxu0 %v353
        %363 = vmatpush.bf16.msra.mxu0 %v352
        %364 = vmatmul.bf16.gmra.mxu0 %v328
        %v365 = vpop.f32.mrf.mxu0
        %v366 = vadd.f32 0.0, %v365
        %v367 = vpop.f32.mrf.mxu0
        %v368 = vadd.f32 0.0, %v367
        %369 = vdwg.mxu0
        %v374 = vunpack.c.l.b16 %v303
        %v375 = vunpack.c.l.b16 %v304
        %v376 = vunpack.c.l.b16 %v305
        %v377 = vunpack.c.l.b16 %v306
        %v378 = vpack.c.b16 %v375, %v374
        %v379 = vpack.c.b16 %v377, %v376
        %382 = vmatpush.bf16.msra.mxu0 0
        %383 = vmatpush.bf16.msra.mxu0 0
        %384 = vmatpush.bf16.msra.mxu0 0
        %385 = vmatpush.bf16.msra.mxu0 0
        %386 = vmatpush.bf16.msra.mxu0 0
        %387 = vmatpush.bf16.msra.mxu0 0
        %388 = vmatpush.bf16.msra.mxu0 %v379
        %389 = vmatpush.bf16.msra.mxu0 %v378
        %390 = vmatmul.bf16.gmra.mxu0 %v328
        %v391 = vpop.f32.mrf.mxu0
        %v392 = vadd.f32 0.0, %v391
        %v393 = vpop.f32.mrf.mxu0
        %v394 = vadd.f32 0.0, %v393
        %395 = vdwg.mxu0
        %v396 = vpack.c.bf16 %v340, %v340
        %v397 = vpack.c.bf16 %v342, %v342
        %v398 = vpack.c.bf16 %v366, %v366
        %v399 = vpack.c.bf16 %v368, %v368
        %v400 = vpack.c.bf16 %v392, %v392
        %v401 = vpack.c.bf16 %v394, %v394
        %vm402 = vcmask 130048
        %v404 = vsel %vm402, %v396, 0
        %v407 = vsel %vm402, %v398, 0
        %409 = vmatpush.bf16.xpose.msra.mxu0 0
        %410 = vmatpush.bf16.xpose.msra.mxu0 0
        %411 = vmatpush.bf16.xpose.msra.mxu0 0
        %412 = vmatpush.bf16.xpose.msra.mxu0 0
        %413 = vmatpush.bf16.xpose.msra.mxu0 0
        %414 = vmatpush.bf16.xpose.msra.mxu0 0
        %415 = vmatpush.bf16.xpose.msra.mxu0 0
        %416 = vmatpush.bf16.xpose.msra.mxu0 %v407
        %417 = vmatmul.bf16.gmra.mxu0 %v404
        %v418 = vpop.f32.mrf.mxu0
        %v419 = vadd.f32 0.0, %v418
        %v420 = vpop.f32.mrf.mxu0
        %421 = vdwg.mxu0
        %v423 = vsel %vm402, %v397, 0
        %v426 = vsel %vm402, %v399, 0
        %428 = vmatpush.bf16.xpose.msra.mxu0 0
        %429 = vmatpush.bf16.xpose.msra.mxu0 0
        %430 = vmatpush.bf16.xpose.msra.mxu0 0
        %431 = vmatpush.bf16.xpose.msra.mxu0 0
        %432 = vmatpush.bf16.xpose.msra.mxu0 0
        %433 = vmatpush.bf16.xpose.msra.mxu0 0
        %434 = vmatpush.bf16.xpose.msra.mxu0 0
        %435 = vmatpush.bf16.xpose.msra.mxu0 %v426
        %436 = vmatmul.bf16.gmra.mxu0 %v423
        %v437 = vpop.f32.mrf.mxu0
        %v438 = vadd.f32 0.0, %v437
        %v439 = vpop.f32.mrf.mxu0
        %440 = vdwg.mxu0
        %vm441 = vcmask 64512
        %v442 = vsel %vm441, %v419, -inf
        %443 = vmax.xlane.f32.xlu0 %v442
        %v444 = vpop.xlane.xlu0 %443
        %v445 = vsel %vm441, %v438, -inf
        %446 = vmax.xlane.f32.xlu0 %v445
        %v447 = vpop.xlane.xlu0 %446
        %v448 = vsub.f32 %v419, %v444
        %v449 = vsub.f32 %v438, %v447
        %v450 = vmul.f32 %v448, 1.442695
        %v451 = vpow.pop %v450
        %v452 = vmul.f32 %v449, 1.442695
        %v453 = vpow.pop %v452
        %v454 = vsel %vm441, %v451, 0.0
        %455 = vadd.xlane.f32.xlu0 %v454
        %v456 = vpop.xlane.xlu0 %455
        %v457 = vsel %vm441, %v453, 0.0
        %458 = vadd.xlane.f32.xlu0 %v457
        %v459 = vpop.xlane.xlu0 %458
        %v460 = vrcp.pop %v456
        %v461 = vmul.f32 %v456, %v460
        %v462 = vsub.f32 1.0, %v461
        %v463 = vmul.f32 %v460, %v462
        %v464 = vadd.f32 %v460, %v463
        %vm465 = vweird.f32 %v456
        %vm466 = vweird.f32 %v460
        %vm467 = vmor %vm465, %vm466
        %v468 = vsel %vm467, %v460, %v464
        %v469 = vand.u32 2147483647, %v456
        %vm470 = vcmp.eq.f32.partialorder %v469, 8.507059e+37
        %v471 = vand.u32 %v456, 2147483648
        %v472 = vor.u32 1.1754944e-38, %v471
        %v473 = vsel %vm470, %v472, %v468
        %v474 = vrcp.pop %v459
        %v475 = vmul.f32 %v459, %v474
        %v476 = vsub.f32 1.0, %v475
        %v477 = vmul.f32 %v474, %v476
        %v478 = vadd.f32 %v474, %v477
        %vm479 = vweird.f32 %v459
        %vm480 = vweird.f32 %v474
        %vm481 = vmor %vm479, %vm480
        %v482 = vsel %vm481, %v474, %v478
        %v483 = vand.u32 2147483647, %v459
        %vm484 = vcmp.eq.f32.partialorder %v483, 8.507059e+37
        %v485 = vand.u32 %v459, 2147483648
        %v486 = vor.u32 1.1754944e-38, %v485
        %v487 = vsel %vm484, %v486, %v482
        %v488 = vmul.f32 %v451, %v473
        %v489 = vmul.f32 %v453, %v487
        %490 = vst.msk [vmem:[%s283] sm:$0xff] %vm441, %v488
        %491 = vst.msk [vmem:[%s283 + $0x40] sm:$0xff] %vm441, %v489
        %v492 = vpack.c.bf16 %v488, %v488
        %v493 = vpack.c.bf16 %v489, %v489
        %v495 = vsel %vm441, %v492, 0
        %vm497 = vcmask 1043456
        %v499 = vsel %vm497, %v400, 0
        %501 = vmatpush.bf16.msra.mxu0 0
        %502 = vmatpush.bf16.msra.mxu0 0
        %503 = vmatpush.bf16.msra.mxu0 0
        %504 = vmatpush.bf16.msra.mxu0 0
        %505 = vmatpush.bf16.msra.mxu0 0
        %506 = vmatpush.bf16.msra.mxu0 0
        %507 = vmatpush.bf16.msra.mxu0 0
        %508 = vmatpush.bf16.msra.mxu0 %v499
        %509 = vmatmul.bf16.gmra.mxu0 %v495
        %v510 = vpop.f32.mrf.mxu0
        %v511 = vadd.f32 0.0, %v510
        %v512 = vpop.f32.mrf.mxu0
        %513 = vdwg.mxu0
        %v515 = vsel %vm441, %v493, 0
        %v518 = vsel %vm497, %v401, 0
        %520 = vmatpush.bf16.msra.mxu0 0
        %521 = vmatpush.bf16.msra.mxu0 0
        %522 = vmatpush.bf16.msra.mxu0 0
        %523 = vmatpush.bf16.msra.mxu0 0
        %524 = vmatpush.bf16.msra.mxu0 0
        %525 = vmatpush.bf16.msra.mxu0 0
        %526 = vmatpush.bf16.msra.mxu0 0
        %527 = vmatpush.bf16.msra.mxu0 %v518
        %528 = vmatmul.bf16.gmra.mxu0 %v515
        %v529 = vpop.f32.mrf.mxu0
        %v530 = vadd.f32 0.0, %v529
        %v531 = vpop.f32.mrf.mxu0
        %532 = vdwg.mxu0
        %v533 = vpack.c.bf16 %v530, %v511
        %s534 = scalar_lea.vmem %s1, 16
        %v535 = vld [vmem:[%s534] sm:$0xf]
        %v536 = vld [vmem:[%s534 + $0x4] sm:$0xf]
        %v537 = vld [vmem:[%s534 + $0x8] sm:$0xf]
        %v538 = vld [vmem:[%s534 + $0xc] sm:$0xf]
        %s539 = scalar_lea.vmem %s2, 16
        %v540 = vld [vmem:[%s539] sm:$0xf]
        %v541 = vld [vmem:[%s539 + $0x4] sm:$0xf]
        %v542 = vld [vmem:[%s539 + $0x8] sm:$0xf]
        %v543 = vld [vmem:[%s539 + $0xc] sm:$0xf]
        %s544 = scalar_lea.vmem %s3, 16
        %v545 = vld [vmem:[%s544] sm:$0xf]
        %v546 = vld [vmem:[%s544 + $0x4] sm:$0xf]
        %v547 = vld [vmem:[%s544 + $0x8] sm:$0xf]
        %v548 = vld [vmem:[%s544 + $0xc] sm:$0xf]
        %s549 = scalar_lea.vmem %s4, 8
        %v550 = vld [vmem:[%s549] sm:$0xf]
        %v551 = vld [vmem:[%s549 + $0x4] sm:$0xf]
        %v556 = vunpack.c.l.b16 %v535
        %v557 = vunpack.c.l.b16 %v536
        %v558 = vunpack.c.l.b16 %v537
        %v559 = vunpack.c.l.b16 %v538
        %v560 = vpack.c.b16 %v557, %v556
        %v561 = vpack.c.b16 %v559, %v558
        %564 = vmatpush.bf16.msra.mxu0 0
        %565 = vmatpush.bf16.msra.mxu0 0
        %566 = vmatpush.bf16.msra.mxu0 0
        %567 = vmatpush.bf16.msra.mxu0 0
        %568 = vmatpush.bf16.msra.mxu0 0
        %569 = vmatpush.bf16.msra.mxu0 0
        %570 = vmatpush.bf16.msra.mxu0 %v561
        %571 = vmatpush.bf16.msra.mxu0 %v560
        %572 = vmatmul.bf16.gmra.mxu0 %v328
        %v573 = vpop.f32.mrf.mxu0
        %v574 = vadd.f32 0.0, %v573
        %v575 = vpop.f32.mrf.mxu0
        %v576 = vadd.f32 0.0, %v575
        %577 = vdwg.mxu0
        %v582 = vunpack.c.l.b16 %v540
        %v583 = vunpack.c.l.b16 %v541
        %v584 = vunpack.c.l.b16 %v542
        %v585 = vunpack.c.l.b16 %v543
        %v586 = vpack.c.b16 %v583, %v582
        %v587 = vpack.c.b16 %v585, %v584
        %590 = vmatpush.bf16.msra.mxu0 0
        %591 = vmatpush.bf16.msra.mxu0 0
        %592 = vmatpush.bf16.msra.mxu0 0
        %593 = vmatpush.bf16.msra.mxu0 0
        %594 = vmatpush.bf16.msra.mxu0 0
        %595 = vmatpush.bf16.msra.mxu0 0
        %596 = vmatpush.bf16.msra.mxu0 %v587
        %597 = vmatpush.bf16.msra.mxu0 %v586
        %598 = vmatmul.bf16.gmra.mxu0 %v328
        %v599 = vpop.f32.mrf.mxu0
        %v600 = vadd.f32 0.0, %v599
        %v601 = vpop.f32.mrf.mxu0
        %v602 = vadd.f32 0.0, %v601
        %603 = vdwg.mxu0
        %v608 = vunpack.c.l.b16 %v545
        %v609 = vunpack.c.l.b16 %v546
        %v610 = vunpack.c.l.b16 %v547
        %v611 = vunpack.c.l.b16 %v548
        %v612 = vpack.c.b16 %v609, %v608
        %v613 = vpack.c.b16 %v611, %v610
        %616 = vmatpush.bf16.msra.mxu0 0
        %617 = vmatpush.bf16.msra.mxu0 0
        %618 = vmatpush.bf16.msra.mxu0 0
        %619 = vmatpush.bf16.msra.mxu0 0
        %620 = vmatpush.bf16.msra.mxu0 0
        %621 = vmatpush.bf16.msra.mxu0 0
        %622 = vmatpush.bf16.msra.mxu0 %v613
        %623 = vmatpush.bf16.msra.mxu0 %v612
        %624 = vmatmul.bf16.gmra.mxu0 %v328
        %v625 = vpop.f32.mrf.mxu0
        %v626 = vadd.f32 0.0, %v625
        %v627 = vpop.f32.mrf.mxu0
        %v628 = vadd.f32 0.0, %v627
        %629 = vdwg.mxu0
        %v630 = vpack.c.bf16 %v574, %v574
        %v631 = vpack.c.bf16 %v576, %v576
        %v632 = vpack.c.bf16 %v600, %v600
        %v633 = vpack.c.bf16 %v602, %v602
        %v634 = vpack.c.bf16 %v626, %v626
        %v635 = vpack.c.bf16 %v628, %v628
        %v637 = vsel %vm402, %v630, 0
        %v640 = vsel %vm402, %v632, 0
        %642 = vmatpush.bf16.xpose.msra.mxu0 0
        %643 = vmatpush.bf16.xpose.msra.mxu0 0
        %644 = vmatpush.bf16.xpose.msra.mxu0 0
        %645 = vmatpush.bf16.xpose.msra.mxu0 0
        %646 = vmatpush.bf16.xpose.msra.mxu0 0
        %647 = vmatpush.bf16.xpose.msra.mxu0 0
        %648 = vmatpush.bf16.xpose.msra.mxu0 0
        %649 = vmatpush.bf16.xpose.msra.mxu0 %v640
        %650 = vmatmul.bf16.gmra.mxu0 %v637
        %v651 = vpop.f32.mrf.mxu0
        %v652 = vadd.f32 0.0, %v651
        %v653 = vpop.f32.mrf.mxu0
        %654 = vdwg.mxu0
        %v656 = vsel %vm402, %v631, 0
        %v659 = vsel %vm402, %v633, 0
        %661 = vmatpush.bf16.xpose.msra.mxu0 0
        %662 = vmatpush.bf16.xpose.msra.mxu0 0
        %663 = vmatpush.bf16.xpose.msra.mxu0 0
        %664 = vmatpush.bf16.xpose.msra.mxu0 0
        %665 = vmatpush.bf16.xpose.msra.mxu0 0
        %666 = vmatpush.bf16.xpose.msra.mxu0 0
        %667 = vmatpush.bf16.xpose.msra.mxu0 0
        %668 = vmatpush.bf16.xpose.msra.mxu0 %v659
        %669 = vmatmul.bf16.gmra.mxu0 %v656
        %v670 = vpop.f32.mrf.mxu0
        %v671 = vadd.f32 0.0, %v670
        %v672 = vpop.f32.mrf.mxu0
        %673 = vdwg.mxu0
        %v674 = vsel %vm441, %v652, -inf
        %675 = vmax.xlane.f32.xlu0 %v674
        %v676 = vpop.xlane.xlu0 %675
        %v677 = vsel %vm441, %v671, -inf
        %678 = vmax.xlane.f32.xlu0 %v677
        %v679 = vpop.xlane.xlu0 %678
        %v680 = vsub.f32 %v652, %v676
        %v681 = vsub.f32 %v671, %v679
        %v682 = vmul.f32 %v680, 1.442695
        %v683 = vpow.pop %v682
        %v684 = vmul.f32 %v681, 1.442695
        %v685 = vpow.pop %v684
        %v686 = vsel %vm441, %v683, 0.0
        %687 = vadd.xlane.f32.xlu0 %v686
        %v688 = vpop.xlane.xlu0 %687
        %v689 = vsel %vm441, %v685, 0.0
        %690 = vadd.xlane.f32.xlu0 %v689
        %v691 = vpop.xlane.xlu0 %690
        %v692 = vrcp.pop %v688
        %v693 = vmul.f32 %v688, %v692
        %v694 = vsub.f32 1.0, %v693
        %v695 = vmul.f32 %v692, %v694
        %v696 = vadd.f32 %v692, %v695
        %vm697 = vweird.f32 %v688
        %vm698 = vweird.f32 %v692
        %vm699 = vmor %vm697, %vm698
        %v700 = vsel %vm699, %v692, %v696
        %v701 = vand.u32 2147483647, %v688
        %vm702 = vcmp.eq.f32.partialorder %v701, 8.507059e+37
        %v703 = vand.u32 %v688, 2147483648
        %v704 = vor.u32 1.1754944e-38, %v703
        %v705 = vsel %vm702, %v704, %v700
        %v706 = vrcp.pop %v691
        %v707 = vmul.f32 %v691, %v706
        %v708 = vsub.f32 1.0, %v707
        %v709 = vmul.f32 %v706, %v708
        %v710 = vadd.f32 %v706, %v709
        %vm711 = vweird.f32 %v691
        %vm712 = vweird.f32 %v706
        %vm713 = vmor %vm711, %vm712
        %v714 = vsel %vm713, %v706, %v710
        %v715 = vand.u32 2147483647, %v691
        %vm716 = vcmp.eq.f32.partialorder %v715, 8.507059e+37
        %v717 = vand.u32 %v691, 2147483648
        %v718 = vor.u32 1.1754944e-38, %v717
        %v719 = vsel %vm716, %v718, %v714
        %v720 = vmul.f32 %v683, %v705
        %v721 = vmul.f32 %v685, %v719
        %s722 = scalar_lea.vmem %s283, 8 [#allocation4]
        %723 = vst.msk [vmem:[%s722] sm:$0xff] %vm441, %v720
        %724 = vst.msk [vmem:[%s722 + $0x40] sm:$0xff] %vm441, %v721
        %v725 = vpack.c.bf16 %v720, %v720
        %v726 = vpack.c.bf16 %v721, %v721
        %v728 = vsel %vm441, %v725, 0
        %v731 = vsel %vm497, %v634, 0
        %733 = vmatpush.bf16.msra.mxu0 0
        %734 = vmatpush.bf16.msra.mxu0 0
        %735 = vmatpush.bf16.msra.mxu0 0
        %736 = vmatpush.bf16.msra.mxu0 0
        %737 = vmatpush.bf16.msra.mxu0 0
        %738 = vmatpush.bf16.msra.mxu0 0
        %739 = vmatpush.bf16.msra.mxu0 0
        %740 = vmatpush.bf16.msra.mxu0 %v731
        %741 = vmatmul.bf16.gmra.mxu0 %v728
        %v742 = vpop.f32.mrf.mxu0
        %v743 = vadd.f32 0.0, %v742
        %v744 = vpop.f32.mrf.mxu0
        %745 = vdwg.mxu0
        %v747 = vsel %vm441, %v726, 0
        %v750 = vsel %vm497, %v635, 0
        %752 = vmatpush.bf16.msra.mxu0 0
        %753 = vmatpush.bf16.msra.mxu0 0
        %754 = vmatpush.bf16.msra.mxu0 0
        %755 = vmatpush.bf16.msra.mxu0 0
        %756 = vmatpush.bf16.msra.mxu0 0
        %757 = vmatpush.bf16.msra.mxu0 0
        %758 = vmatpush.bf16.msra.mxu0 0
        %759 = vmatpush.bf16.msra.mxu0 %v750
        %760 = vmatmul.bf16.gmra.mxu0 %v747
        %v761 = vpop.f32.mrf.mxu0
        %v762 = vadd.f32 0.0, %v761
        %v763 = vpop.f32.mrf.mxu0
        %764 = vdwg.mxu0
        %v765 = vpack.c.bf16 %v762, %v743
        %v768 = vunpack.c.l.b16 %v550
        %v769 = vunpack.c.l.b16 %v551
        %v770 = vpack.c.b16 %v769, %v768
        %v773 = vsel %vm402, %v765, 0
        %775 = vmatpush.bf16.msra.mxu0 0
        %776 = vmatpush.bf16.msra.mxu0 0
        %777 = vmatpush.bf16.msra.mxu0 0
        %778 = vmatpush.bf16.msra.mxu0 0
        %779 = vmatpush.bf16.msra.mxu0 0
        %780 = vmatpush.bf16.msra.mxu0 0
        %781 = vmatpush.bf16.msra.mxu0 0
        %782 = vmatpush.bf16.msra.mxu0 %v770
        %783 = vmatmul.bf16.gmra.mxu0 %v773
        %v784 = vpop.f32.mrf.mxu0
        %v785 = vadd.f32 0.0, %v784
        %v786 = vpop.f32.mrf.mxu0
        %v787 = vadd.f32 0.0, %v786
        %788 = vdwg.mxu0
        %v791 = vunpack.c.l.b16 %v307
        %v792 = vunpack.c.l.b16 %v308
        %v793 = vpack.c.b16 %v792, %v791
        %v796 = vsel %vm402, %v533, 0
        %798 = vmatpush.bf16.msra.mxu0 0
        %799 = vmatpush.bf16.msra.mxu0 0
        %800 = vmatpush.bf16.msra.mxu0 0
        %801 = vmatpush.bf16.msra.mxu0 0
        %802 = vmatpush.bf16.msra.mxu0 0
        %803 = vmatpush.bf16.msra.mxu0 0
        %804 = vmatpush.bf16.msra.mxu0 0
        %805 = vmatpush.bf16.msra.mxu0 %v793
        %806 = vmatmul.bf16.gmra.mxu0 %v796
        %v807 = vpop.f32.mrf.mxu0
        %v808 = vadd.f32 %v785, %v807
        %v809 = vpop.f32.mrf.mxu0
        %v810 = vadd.f32 %v787, %v809
        %811 = vdwg.mxu0
        %s812 = scalar_lea.vmem %s1, 32
        %v813 = vld [vmem:[%s812] sm:$0xf]
        %v814 = vld [vmem:[%s812 + $0x4] sm:$0xf]
        %v815 = vld [vmem:[%s812 + $0x8] sm:$0xf]
        %v816 = vld [vmem:[%s812 + $0xc] sm:$0xf]
        %s817 = scalar_lea.vmem %s2, 32
        %v818 = vld [vmem:[%s817] sm:$0xf]
        %v819 = vld [vmem:[%s817 + $0x4] sm:$0xf]
        %v820 = vld [vmem:[%s817 + $0x8] sm:$0xf]
        %v821 = vld [vmem:[%s817 + $0xc] sm:$0xf]
        %s822 = scalar_lea.vmem %s3, 32
        %v823 = vld [vmem:[%s822] sm:$0xf]
        %v824 = vld [vmem:[%s822 + $0x4] sm:$0xf]
        %v825 = vld [vmem:[%s822 + $0x8] sm:$0xf]
        %v826 = vld [vmem:[%s822 + $0xc] sm:$0xf]
        %s827 = scalar_lea.vmem %s4, 16
        %v828 = vld [vmem:[%s827] sm:$0xf]
        %v829 = vld [vmem:[%s827 + $0x4] sm:$0xf]
        %v834 = vunpack.c.l.b16 %v813
        %v835 = vunpack.c.l.b16 %v814
        %v836 = vunpack.c.l.b16 %v815
        %v837 = vunpack.c.l.b16 %v816
        %v838 = vpack.c.b16 %v835, %v834
        %v839 = vpack.c.b16 %v837, %v836
        %842 = vmatpush.bf16.msra.mxu0 0
        %843 = vmatpush.bf16.msra.mxu0 0
        %844 = vmatpush.bf16.msra.mxu0 0
        %845 = vmatpush.bf16.msra.mxu0 0
        %846 = vmatpush.bf16.msra.mxu0 0
        %847 = vmatpush.bf16.msra.mxu0 0
        %848 = vmatpush.bf16.msra.mxu0 %v839
        %849 = vmatpush.bf16.msra.mxu0 %v838
        %850 = vmatmul.bf16.gmra.mxu0 %v328
        %v851 = vpop.f32.mrf.mxu0
        %v852 = vadd.f32 0.0, %v851
        %v853 = vpop.f32.mrf.mxu0
        %v854 = vadd.f32 0.0, %v853
        %855 = vdwg.mxu0
        %v860 = vunpack.c.l.b16 %v818
        %v861 = vunpack.c.l.b16 %v819
        %v862 = vunpack.c.l.b16 %v820
        %v863 = vunpack.c.l.b16 %v821
        %v864 = vpack.c.b16 %v861, %v860
        %v865 = vpack.c.b16 %v863, %v862
        %868 = vmatpush.bf16.msra.mxu0 0
        %869 = vmatpush.bf16.msra.mxu0 0
        %870 = vmatpush.bf16.msra.mxu0 0
        %871 = vmatpush.bf16.msra.mxu0 0
        %872 = vmatpush.bf16.msra.mxu0 0
        %873 = vmatpush.bf16.msra.mxu0 0
        %874 = vmatpush.bf16.msra.mxu0 %v865
        %875 = vmatpush.bf16.msra.mxu0 %v864
        %876 = vmatmul.bf16.gmra.mxu0 %v328
        %v877 = vpop.f32.mrf.mxu0
        %v878 = vadd.f32 0.0, %v877
        %v879 = vpop.f32.mrf.mxu0
        %v880 = vadd.f32 0.0, %v879
        %881 = vdwg.mxu0
        %v886 = vunpack.c.l.b16 %v823
        %v887 = vunpack.c.l.b16 %v824
        %v888 = vunpack.c.l.b16 %v825
        %v889 = vunpack.c.l.b16 %v826
        %v890 = vpack.c.b16 %v887, %v886
        %v891 = vpack.c.b16 %v889, %v888
        %894 = vmatpush.bf16.msra.mxu0 0
        %895 = vmatpush.bf16.msra.mxu0 0
        %896 = vmatpush.bf16.msra.mxu0 0
        %897 = vmatpush.bf16.msra.mxu0 0
        %898 = vmatpush.bf16.msra.mxu0 0
        %899 = vmatpush.bf16.msra.mxu0 0
        %900 = vmatpush.bf16.msra.mxu0 %v891
        %901 = vmatpush.bf16.msra.mxu0 %v890
        %902 = vmatmul.bf16.gmra.mxu0 %v328
        %v903 = vpop.f32.mrf.mxu0
        %v904 = vadd.f32 0.0, %v903
        %v905 = vpop.f32.mrf.mxu0
        %v906 = vadd.f32 0.0, %v905
        %907 = vdwg.mxu0
        %v908 = vpack.c.bf16 %v852, %v852
        %v909 = vpack.c.bf16 %v854, %v854
        %v910 = vpack.c.bf16 %v878, %v878
        %v911 = vpack.c.bf16 %v880, %v880
        %v912 = vpack.c.bf16 %v904, %v904
        %v913 = vpack.c.bf16 %v906, %v906
        %v915 = vsel %vm402, %v908, 0
        %v918 = vsel %vm402, %v910, 0
        %920 = vmatpush.bf16.xpose.msra.mxu0 0
        %921 = vmatpush.bf16.xpose.msra.mxu0 0
        %922 = vmatpush.bf16.xpose.msra.mxu0 0
        %923 = vmatpush.bf16.xpose.msra.mxu0 0
        %924 = vmatpush.bf16.xpose.msra.mxu0 0
        %925 = vmatpush.bf16.xpose.msra.mxu0 0
        %926 = vmatpush.bf16.xpose.msra.mxu0 0
        %927 = vmatpush.bf16.xpose.msra.mxu0 %v918
        %928 = vmatmul.bf16.gmra.mxu0 %v915
        %v929 = vpop.f32.mrf.mxu0
        %v930 = vadd.f32 0.0, %v929
        %v931 = vpop.f32.mrf.mxu0
        %932 = vdwg.mxu0
        %v934 = vsel %vm402, %v909, 0
        %v937 = vsel %vm402, %v911, 0
        %939 = vmatpush.bf16.xpose.msra.mxu0 0
        %940 = vmatpush.bf16.xpose.msra.mxu0 0
        %941 = vmatpush.bf16.xpose.msra.mxu0 0
        %942 = vmatpush.bf16.xpose.msra.mxu0 0
        %943 = vmatpush.bf16.xpose.msra.mxu0 0
        %944 = vmatpush.bf16.xpose.msra.mxu0 0
        %945 = vmatpush.bf16.xpose.msra.mxu0 0
        %946 = vmatpush.bf16.xpose.msra.mxu0 %v937
        %947 = vmatmul.bf16.gmra.mxu0 %v934
        %v948 = vpop.f32.mrf.mxu0
        %v949 = vadd.f32 0.0, %v948
        %v950 = vpop.f32.mrf.mxu0
        %951 = vdwg.mxu0
        %v952 = vsel %vm441, %v930, -inf
        %953 = vmax.xlane.f32.xlu0 %v952
        %v954 = vpop.xlane.xlu0 %953
        %v955 = vsel %vm441, %v949, -inf
        %956 = vmax.xlane.f32.xlu0 %v955
        %v957 = vpop.xlane.xlu0 %956
        %v958 = vsub.f32 %v930, %v954
        %v959 = vsub.f32 %v949, %v957
        %v960 = vmul.f32 %v958, 1.442695
        %v961 = vpow.pop %v960
        %v962 = vmul.f32 %v959, 1.442695
        %v963 = vpow.pop %v962
        %v964 = vsel %vm441, %v961, 0.0
        %965 = vadd.xlane.f32.xlu0 %v964
        %v966 = vpop.xlane.xlu0 %965
        %v967 = vsel %vm441, %v963, 0.0
        %968 = vadd.xlane.f32.xlu0 %v967
        %v969 = vpop.xlane.xlu0 %968
        %v970 = vrcp.pop %v966
        %v971 = vmul.f32 %v966, %v970
        %v972 = vsub.f32 1.0, %v971
        %v973 = vmul.f32 %v970, %v972
        %v974 = vadd.f32 %v970, %v973
        %vm975 = vweird.f32 %v966
        %vm976 = vweird.f32 %v970
        %vm977 = vmor %vm975, %vm976
        %v978 = vsel %vm977, %v970, %v974
        %v979 = vand.u32 2147483647, %v966
        %vm980 = vcmp.eq.f32.partialorder %v979, 8.507059e+37
        %v981 = vand.u32 %v966, 2147483648
        %v982 = vor.u32 1.1754944e-38, %v981
        %v983 = vsel %vm980, %v982, %v978
        %v984 = vrcp.pop %v969
        %v985 = vmul.f32 %v969, %v984
        %v986 = vsub.f32 1.0, %v985
        %v987 = vmul.f32 %v984, %v986
        %v988 = vadd.f32 %v984, %v987
        %vm989 = vweird.f32 %v969
        %vm990 = vweird.f32 %v984
        %vm991 = vmor %vm989, %vm990
        %v992 = vsel %vm991, %v984, %v988
        %v993 = vand.u32 2147483647, %v969
        %vm994 = vcmp.eq.f32.partialorder %v993, 8.507059e+37
        %v995 = vand.u32 %v969, 2147483648
        %v996 = vor.u32 1.1754944e-38, %v995
        %v997 = vsel %vm994, %v996, %v992
        %v998 = vmul.f32 %v961, %v983
        %v999 = vmul.f32 %v963, %v997
        %s1000 = scalar_lea.vmem %s283, 16 [#allocation4]
        %1001 = vst.msk [vmem:[%s1000] sm:$0xff] %vm441, %v998
        %1002 = vst.msk [vmem:[%s1000 + $0x40] sm:$0xff] %vm441, %v999
        %v1003 = vpack.c.bf16 %v998, %v998
        %v1004 = vpack.c.bf16 %v999, %v999
        %v1006 = vsel %vm441, %v1003, 0
        %v1009 = vsel %vm497, %v912, 0
        %1011 = vmatpush.bf16.msra.mxu0 0
        %1012 = vmatpush.bf16.msra.mxu0 0
        %1013 = vmatpush.bf16.msra.mxu0 0
        %1014 = vmatpush.bf16.msra.mxu0 0
        %1015 = vmatpush.bf16.msra.mxu0 0
        %1016 = vmatpush.bf16.msra.mxu0 0
        %1017 = vmatpush.bf16.msra.mxu0 0
        %1018 = vmatpush.bf16.msra.mxu0 %v1009
        %1019 = vmatmul.bf16.gmra.mxu0 %v1006
        %v1020 = vpop.f32.mrf.mxu0
        %v1021 = vadd.f32 0.0, %v1020
        %v1022 = vpop.f32.mrf.mxu0
        %1023 = vdwg.mxu0
        %v1025 = vsel %vm441, %v1004, 0
        %v1028 = vsel %vm497, %v913, 0
        %1030 = vmatpush.bf16.msra.mxu0 0
        %1031 = vmatpush.bf16.msra.mxu0 0
        %1032 = vmatpush.bf16.msra.mxu0 0
        %1033 = vmatpush.bf16.msra.mxu0 0
        %1034 = vmatpush.bf16.msra.mxu0 0
        %1035 = vmatpush.bf16.msra.mxu0 0
        %1036 = vmatpush.bf16.msra.mxu0 0
        %1037 = vmatpush.bf16.msra.mxu0 %v1028
        %1038 = vmatmul.bf16.gmra.mxu0 %v1025
        %v1039 = vpop.f32.mrf.mxu0
        %v1040 = vadd.f32 0.0, %v1039
        %v1041 = vpop.f32.mrf.mxu0
        %1042 = vdwg.mxu0
        %v1043 = vpack.c.bf16 %v1040, %v1021
        %v1046 = vunpack.c.l.b16 %v828
        %v1047 = vunpack.c.l.b16 %v829
        %v1048 = vpack.c.b16 %v1047, %v1046
        %v1051 = vsel %vm402, %v1043, 0
        %1053 = vmatpush.bf16.msra.mxu0 0
        %1054 = vmatpush.bf16.msra.mxu0 0
        %1055 = vmatpush.bf16.msra.mxu0 0
        %1056 = vmatpush.bf16.msra.mxu0 0
        %1057 = vmatpush.bf16.msra.mxu0 0
        %1058 = vmatpush.bf16.msra.mxu0 0
        %1059 = vmatpush.bf16.msra.mxu0 0
        %1060 = vmatpush.bf16.msra.mxu0 %v1048
        %1061 = vmatmul.bf16.gmra.mxu0 %v1051
        %v1062 = vpop.f32.mrf.mxu0
        %v1063 = vadd.f32 0.0, %v1062
        %v1064 = vpop.f32.mrf.mxu0
        %v1065 = vadd.f32 0.0, %v1064
        %1066 = vdwg.mxu0
        %v1067 = vadd.f32 %v808, %v1063
        %v1068 = vadd.f32 %v810, %v1065
        %s1069 = scalar_lea.vmem %s1, 48
        %v1070 = vld [vmem:[%s1069] sm:$0xf]
        %v1071 = vld [vmem:[%s1069 + $0x4] sm:$0xf]
        %v1072 = vld [vmem:[%s1069 + $0x8] sm:$0xf]
        %v1073 = vld [vmem:[%s1069 + $0xc] sm:$0xf]
        %s1074 = scalar_lea.vmem %s2, 48
        %v1075 = vld [vmem:[%s1074] sm:$0xf]
        %v1076 = vld [vmem:[%s1074 + $0x4] sm:$0xf]
        %v1077 = vld [vmem:[%s1074 + $0x8] sm:$0xf]
        %v1078 = vld [vmem:[%s1074 + $0xc] sm:$0xf]
        %s1079 = scalar_lea.vmem %s3, 48
        %v1080 = vld [vmem:[%s1079] sm:$0xf]
        %v1081 = vld [vmem:[%s1079 + $0x4] sm:$0xf]
        %v1082 = vld [vmem:[%s1079 + $0x8] sm:$0xf]
        %v1083 = vld [vmem:[%s1079 + $0xc] sm:$0xf]
        %s1084 = scalar_lea.vmem %s4, 24
        %v1085 = vld [vmem:[%s1084] sm:$0xf]
        %v1086 = vld [vmem:[%s1084 + $0x4] sm:$0xf]
        %v1091 = vunpack.c.l.b16 %v1070
        %v1092 = vunpack.c.l.b16 %v1071
        %v1093 = vunpack.c.l.b16 %v1072
        %v1094 = vunpack.c.l.b16 %v1073
        %v1095 = vpack.c.b16 %v1092, %v1091
        %v1096 = vpack.c.b16 %v1094, %v1093
        %1099 = vmatpush.bf16.msra.mxu0 0
        %1100 = vmatpush.bf16.msra.mxu0 0
        %1101 = vmatpush.bf16.msra.mxu0 0
        %1102 = vmatpush.bf16.msra.mxu0 0
        %1103 = vmatpush.bf16.msra.mxu0 0
        %1104 = vmatpush.bf16.msra.mxu0 0
        %1105 = vmatpush.bf16.msra.mxu0 %v1096
        %1106 = vmatpush.bf16.msra.mxu0 %v1095
        %1107 = vmatmul.bf16.gmra.mxu0 %v328
        %v1108 = vpop.f32.mrf.mxu0
        %v1109 = vadd.f32 0.0, %v1108
        %v1110 = vpop.f32.mrf.mxu0
        %v1111 = vadd.f32 0.0, %v1110
        %1112 = vdwg.mxu0
        %v1117 = vunpack.c.l.b16 %v1075
        %v1118 = vunpack.c.l.b16 %v1076
        %v1119 = vunpack.c.l.b16 %v1077
        %v1120 = vunpack.c.l.b16 %v1078
        %v1121 = vpack.c.b16 %v1118, %v1117
        %v1122 = vpack.c.b16 %v1120, %v1119
        %1125 = vmatpush.bf16.msra.mxu0 0
        %1126 = vmatpush.bf16.msra.mxu0 0
        %1127 = vmatpush.bf16.msra.mxu0 0
        %1128 = vmatpush.bf16.msra.mxu0 0
        %1129 = vmatpush.bf16.msra.mxu0 0
        %1130 = vmatpush.bf16.msra.mxu0 0
        %1131 = vmatpush.bf16.msra.mxu0 %v1122
        %1132 = vmatpush.bf16.msra.mxu0 %v1121
        %1133 = vmatmul.bf16.gmra.mxu0 %v328
        %v1134 = vpop.f32.mrf.mxu0
        %v1135 = vadd.f32 0.0, %v1134
        %v1136 = vpop.f32.mrf.mxu0
        %v1137 = vadd.f32 0.0, %v1136
        %1138 = vdwg.mxu0
        %v1143 = vunpack.c.l.b16 %v1080
        %v1144 = vunpack.c.l.b16 %v1081
        %v1145 = vunpack.c.l.b16 %v1082
        %v1146 = vunpack.c.l.b16 %v1083
        %v1147 = vpack.c.b16 %v1144, %v1143
        %v1148 = vpack.c.b16 %v1146, %v1145
        %1151 = vmatpush.bf16.msra.mxu0 0
        %1152 = vmatpush.bf16.msra.mxu0 0
        %1153 = vmatpush.bf16.msra.mxu0 0
        %1154 = vmatpush.bf16.msra.mxu0 0
        %1155 = vmatpush.bf16.msra.mxu0 0
        %1156 = vmatpush.bf16.msra.mxu0 0
        %1157 = vmatpush.bf16.msra.mxu0 %v1148
        %1158 = vmatpush.bf16.msra.mxu0 %v1147
        %1159 = vmatmul.bf16.gmra.mxu0 %v328
        %v1160 = vpop.f32.mrf.mxu0
        %v1161 = vadd.f32 0.0, %v1160
        %v1162 = vpop.f32.mrf.mxu0
        %v1163 = vadd.f32 0.0, %v1162
        %1164 = vdwg.mxu0
        %v1165 = vpack.c.bf16 %v1109, %v1109
        %v1166 = vpack.c.bf16 %v1111, %v1111
        %v1167 = vpack.c.bf16 %v1135, %v1135
        %v1168 = vpack.c.bf16 %v1137, %v1137
        %v1169 = vpack.c.bf16 %v1161, %v1161
        %v1170 = vpack.c.bf16 %v1163, %v1163
        %v1172 = vsel %vm402, %v1165, 0
        %v1175 = vsel %vm402, %v1167, 0
        %1177 = vmatpush.bf16.xpose.msra.mxu0 0
        %1178 = vmatpush.bf16.xpose.msra.mxu0 0
        %1179 = vmatpush.bf16.xpose.msra.mxu0 0
        %1180 = vmatpush.bf16.xpose.msra.mxu0 0
        %1181 = vmatpush.bf16.xpose.msra.mxu0 0
        %1182 = vmatpush.bf16.xpose.msra.mxu0 0
        %1183 = vmatpush.bf16.xpose.msra.mxu0 0
        %1184 = vmatpush.bf16.xpose.msra.mxu0 %v1175
        %1185 = vmatmul.bf16.gmra.mxu0 %v1172
        %v1186 = vpop.f32.mrf.mxu0
        %v1187 = vadd.f32 0.0, %v1186
        %v1188 = vpop.f32.mrf.mxu0
        %1189 = vdwg.mxu0
        %v1191 = vsel %vm402, %v1166, 0
        %v1194 = vsel %vm402, %v1168, 0
        %1196 = vmatpush.bf16.xpose.msra.mxu0 0
        %1197 = vmatpush.bf16.xpose.msra.mxu0 0
        %1198 = vmatpush.bf16.xpose.msra.mxu0 0
        %1199 = vmatpush.bf16.xpose.msra.mxu0 0
        %1200 = vmatpush.bf16.xpose.msra.mxu0 0
        %1201 = vmatpush.bf16.xpose.msra.mxu0 0
        %1202 = vmatpush.bf16.xpose.msra.mxu0 0
        %1203 = vmatpush.bf16.xpose.msra.mxu0 %v1194
        %1204 = vmatmul.bf16.gmra.mxu0 %v1191
        %v1205 = vpop.f32.mrf.mxu0
        %v1206 = vadd.f32 0.0, %v1205
        %v1207 = vpop.f32.mrf.mxu0
        %1208 = vdwg.mxu0
        %v1209 = vsel %vm441, %v1187, -inf
        %1210 = vmax.xlane.f32.xlu0 %v1209
        %v1211 = vpop.xlane.xlu0 %1210
        %v1212 = vsel %vm441, %v1206, -inf
        %1213 = vmax.xlane.f32.xlu0 %v1212
        %v1214 = vpop.xlane.xlu0 %1213
        %v1215 = vsub.f32 %v1187, %v1211
        %v1216 = vsub.f32 %v1206, %v1214
        %v1217 = vmul.f32 %v1215, 1.442695
        %v1218 = vpow.pop %v1217
        %v1219 = vmul.f32 %v1216, 1.442695
        %v1220 = vpow.pop %v1219
        %v1221 = vsel %vm441, %v1218, 0.0
        %1222 = vadd.xlane.f32.xlu0 %v1221
        %v1223 = vpop.xlane.xlu0 %1222
        %v1224 = vsel %vm441, %v1220, 0.0
        %1225 = vadd.xlane.f32.xlu0 %v1224
        %v1226 = vpop.xlane.xlu0 %1225
        %v1227 = vrcp.pop %v1223
        %v1228 = vmul.f32 %v1223, %v1227
        %v1229 = vsub.f32 1.0, %v1228
        %v1230 = vmul.f32 %v1227, %v1229
        %v1231 = vadd.f32 %v1227, %v1230
        %vm1232 = vweird.f32 %v1223
        %vm1233 = vweird.f32 %v1227
        %vm1234 = vmor %vm1232, %vm1233
        %v1235 = vsel %vm1234, %v1227, %v1231
        %v1236 = vand.u32 2147483647, %v1223
        %vm1237 = vcmp.eq.f32.partialorder %v1236, 8.507059e+37
        %v1238 = vand.u32 %v1223, 2147483648
        %v1239 = vor.u32 1.1754944e-38, %v1238
        %v1240 = vsel %vm1237, %v1239, %v1235
        %v1241 = vrcp.pop %v1226
        %v1242 = vmul.f32 %v1226, %v1241
        %v1243 = vsub.f32 1.0, %v1242
        %v1244 = vmul.f32 %v1241, %v1243
        %v1245 = vadd.f32 %v1241, %v1244
        %vm1246 = vweird.f32 %v1226
        %vm1247 = vweird.f32 %v1241
        %vm1248 = vmor %vm1246, %vm1247
        %v1249 = vsel %vm1248, %v1241, %v1245
        %v1250 = vand.u32 2147483647, %v1226
        %vm1251 = vcmp.eq.f32.partialorder %v1250, 8.507059e+37
        %v1252 = vand.u32 %v1226, 2147483648
        %v1253 = vor.u32 1.1754944e-38, %v1252
        %v1254 = vsel %vm1251, %v1253, %v1249
        %v1255 = vmul.f32 %v1218, %v1240
        %v1256 = vmul.f32 %v1220, %v1254
        %s1257 = scalar_lea.vmem %s283, 24 [#allocation4]
        %1258 = vst.msk [vmem:[%s1257] sm:$0xff] %vm441, %v1255
        %1259 = vst.msk [vmem:[%s1257 + $0x40] sm:$0xff] %vm441, %v1256
        %v1260 = vpack.c.bf16 %v1255, %v1255
        %v1261 = vpack.c.bf16 %v1256, %v1256
        %v1263 = vsel %vm441, %v1260, 0
        %v1266 = vsel %vm497, %v1169, 0
        %1268 = vmatpush.bf16.msra.mxu0 0
        %1269 = vmatpush.bf16.msra.mxu0 0
        %1270 = vmatpush.bf16.msra.mxu0 0
        %1271 = vmatpush.bf16.msra.mxu0 0
        %1272 = vmatpush.bf16.msra.mxu0 0
        %1273 = vmatpush.bf16.msra.mxu0 0
        %1274 = vmatpush.bf16.msra.mxu0 0
        %1275 = vmatpush.bf16.msra.mxu0 %v1266
        %1276 = vmatmul.bf16.gmra.mxu0 %v1263
        %v1277 = vpop.f32.mrf.mxu0
        %v1278 = vadd.f32 0.0, %v1277
        %v1279 = vpop.f32.mrf.mxu0
        %1280 = vdwg.mxu0
        %v1282 = vsel %vm441, %v1261, 0
        %v1285 = vsel %vm497, %v1170, 0
        %1287 = vmatpush.bf16.msra.mxu0 0
        %1288 = vmatpush.bf16.msra.mxu0 0
        %1289 = vmatpush.bf16.msra.mxu0 0
        %1290 = vmatpush.bf16.msra.mxu0 0
        %1291 = vmatpush.bf16.msra.mxu0 0
        %1292 = vmatpush.bf16.msra.mxu0 0
        %1293 = vmatpush.bf16.msra.mxu0 0
        %1294 = vmatpush.bf16.msra.mxu0 %v1285
        %1295 = vmatmul.bf16.gmra.mxu0 %v1282
        %v1296 = vpop.f32.mrf.mxu0
        %v1297 = vadd.f32 0.0, %v1296
        %v1298 = vpop.f32.mrf.mxu0
        %1299 = vdwg.mxu0
        %v1300 = vpack.c.bf16 %v1297, %v1278
        %v1303 = vunpack.c.l.b16 %v1085
        %v1304 = vunpack.c.l.b16 %v1086
        %v1305 = vpack.c.b16 %v1304, %v1303
        %v1308 = vsel %vm402, %v1300, 0
        %1310 = vmatpush.bf16.msra.mxu0 0
        %1311 = vmatpush.bf16.msra.mxu0 0
        %1312 = vmatpush.bf16.msra.mxu0 0
        %1313 = vmatpush.bf16.msra.mxu0 0
        %1314 = vmatpush.bf16.msra.mxu0 0
        %1315 = vmatpush.bf16.msra.mxu0 0
        %1316 = vmatpush.bf16.msra.mxu0 0
        %1317 = vmatpush.bf16.msra.mxu0 %v1305
        %1318 = vmatmul.bf16.gmra.mxu0 %v1308
        %v1319 = vpop.f32.mrf.mxu0
        %v1320 = vadd.f32 0.0, %v1319
        %v1321 = vpop.f32.mrf.mxu0
        %v1322 = vadd.f32 0.0, %v1321
        %1323 = vdwg.mxu0
        %v1324 = vadd.f32 %v1067, %v1320
        %v1325 = vadd.f32 %v1068, %v1322
        %s1326 = scalar_lea.vmem %s1, 64
        %v1327 = vld [vmem:[%s1326] sm:$0xf]
        %v1328 = vld [vmem:[%s1326 + $0x4] sm:$0xf]
        %v1329 = vld [vmem:[%s1326 + $0x8] sm:$0xf]
        %v1330 = vld [vmem:[%s1326 + $0xc] sm:$0xf]
        %s1331 = scalar_lea.vmem %s2, 64
        %v1332 = vld [vmem:[%s1331] sm:$0xf]
        %v1333 = vld [vmem:[%s1331 + $0x4] sm:$0xf]
        %v1334 = vld [vmem:[%s1331 + $0x8] sm:$0xf]
        %v1335 = vld [vmem:[%s1331 + $0xc] sm:$0xf]
        %s1336 = scalar_lea.vmem %s3, 64
        %v1337 = vld [vmem:[%s1336] sm:$0xf]
        %v1338 = vld [vmem:[%s1336 + $0x4] sm:$0xf]
        %v1339 = vld [vmem:[%s1336 + $0x8] sm:$0xf]
        %v1340 = vld [vmem:[%s1336 + $0xc] sm:$0xf]
        %s1341 = scalar_lea.vmem %s4, 32
        %v1342 = vld [vmem:[%s1341] sm:$0xf]
        %v1343 = vld [vmem:[%s1341 + $0x4] sm:$0xf]
        %v1348 = vunpack.c.l.b16 %v1327
        %v1349 = vunpack.c.l.b16 %v1328
        %v1350 = vunpack.c.l.b16 %v1329
        %v1351 = vunpack.c.l.b16 %v1330
        %v1352 = vpack.c.b16 %v1349, %v1348
        %v1353 = vpack.c.b16 %v1351, %v1350
        %1356 = vmatpush.bf16.msra.mxu0 0
        %1357 = vmatpush.bf16.msra.mxu0 0
        %1358 = vmatpush.bf16.msra.mxu0 0
        %1359 = vmatpush.bf16.msra.mxu0 0
        %1360 = vmatpush.bf16.msra.mxu0 0
        %1361 = vmatpush.bf16.msra.mxu0 0
        %1362 = vmatpush.bf16.msra.mxu0 %v1353
        %1363 = vmatpush.bf16.msra.mxu0 %v1352
        %1364 = vmatmul.bf16.gmra.mxu0 %v328
        %v1365 = vpop.f32.mrf.mxu0
        %v1366 = vadd.f32 0.0, %v1365
        %v1367 = vpop.f32.mrf.mxu0
        %v1368 = vadd.f32 0.0, %v1367
        %1369 = vdwg.mxu0
        %v1374 = vunpack.c.l.b16 %v1332
        %v1375 = vunpack.c.l.b16 %v1333
        %v1376 = vunpack.c.l.b16 %v1334
        %v1377 = vunpack.c.l.b16 %v1335
        %v1378 = vpack.c.b16 %v1375, %v1374
        %v1379 = vpack.c.b16 %v1377, %v1376
        %1382 = vmatpush.bf16.msra.mxu0 0
        %1383 = vmatpush.bf16.msra.mxu0 0
        %1384 = vmatpush.bf16.msra.mxu0 0
        %1385 = vmatpush.bf16.msra.mxu0 0
        %1386 = vmatpush.bf16.msra.mxu0 0
        %1387 = vmatpush.bf16.msra.mxu0 0
        %1388 = vmatpush.bf16.msra.mxu0 %v1379
        %1389 = vmatpush.bf16.msra.mxu0 %v1378
        %1390 = vmatmul.bf16.gmra.mxu0 %v328
        %v1391 = vpop.f32.mrf.mxu0
        %v1392 = vadd.f32 0.0, %v1391
        %v1393 = vpop.f32.mrf.mxu0
        %v1394 = vadd.f32 0.0, %v1393
        %1395 = vdwg.mxu0
        %v1400 = vunpack.c.l.b16 %v1337
        %v1401 = vunpack.c.l.b16 %v1338
        %v1402 = vunpack.c.l.b16 %v1339
        %v1403 = vunpack.c.l.b16 %v1340
        %v1404 = vpack.c.b16 %v1401, %v1400
        %v1405 = vpack.c.b16 %v1403, %v1402
        %1408 = vmatpush.bf16.msra.mxu0 0
        %1409 = vmatpush.bf16.msra.mxu0 0
        %1410 = vmatpush.bf16.msra.mxu0 0
        %1411 = vmatpush.bf16.msra.mxu0 0
        %1412 = vmatpush.bf16.msra.mxu0 0
        %1413 = vmatpush.bf16.msra.mxu0 0
        %1414 = vmatpush.bf16.msra.mxu0 %v1405
        %1415 = vmatpush.bf16.msra.mxu0 %v1404
        %1416 = vmatmul.bf16.gmra.mxu0 %v328
        %v1417 = vpop.f32.mrf.mxu0
        %v1418 = vadd.f32 0.0, %v1417
        %v1419 = vpop.f32.mrf.mxu0
        %v1420 = vadd.f32 0.0, %v1419
        %1421 = vdwg.mxu0
        %v1422 = vpack.c.bf16 %v1366, %v1366
        %v1423 = vpack.c.bf16 %v1368, %v1368
        %v1424 = vpack.c.bf16 %v1392, %v1392
        %v1425 = vpack.c.bf16 %v1394, %v1394
        %v1426 = vpack.c.bf16 %v1418, %v1418
        %v1427 = vpack.c.bf16 %v1420, %v1420
        %v1429 = vsel %vm402, %v1422, 0
        %v1432 = vsel %vm402, %v1424, 0
        %1434 = vmatpush.bf16.xpose.msra.mxu0 0
        %1435 = vmatpush.bf16.xpose.msra.mxu0 0
        %1436 = vmatpush.bf16.xpose.msra.mxu0 0
        %1437 = vmatpush.bf16.xpose.msra.mxu0 0
        %1438 = vmatpush.bf16.xpose.msra.mxu0 0
        %1439 = vmatpush.bf16.xpose.msra.mxu0 0
        %1440 = vmatpush.bf16.xpose.msra.mxu0 0
        %1441 = vmatpush.bf16.xpose.msra.mxu0 %v1432
        %1442 = vmatmul.bf16.gmra.mxu0 %v1429
        %v1443 = vpop.f32.mrf.mxu0
        %v1444 = vadd.f32 0.0, %v1443
        %v1445 = vpop.f32.mrf.mxu0
        %1446 = vdwg.mxu0
        %v1448 = vsel %vm402, %v1423, 0
        %v1451 = vsel %vm402, %v1425, 0
        %1453 = vmatpush.bf16.xpose.msra.mxu0 0
        %1454 = vmatpush.bf16.xpose.msra.mxu0 0
        %1455 = vmatpush.bf16.xpose.msra.mxu0 0
        %1456 = vmatpush.bf16.xpose.msra.mxu0 0
        %1457 = vmatpush.bf16.xpose.msra.mxu0 0
        %1458 = vmatpush.bf16.xpose.msra.mxu0 0
        %1459 = vmatpush.bf16.xpose.msra.mxu0 0
        %1460 = vmatpush.bf16.xpose.msra.mxu0 %v1451
        %1461 = vmatmul.bf16.gmra.mxu0 %v1448
        %v1462 = vpop.f32.mrf.mxu0
        %v1463 = vadd.f32 0.0, %v1462
        %v1464 = vpop.f32.mrf.mxu0
        %1465 = vdwg.mxu0
        %v1466 = vsel %vm441, %v1444, -inf
        %1467 = vmax.xlane.f32.xlu0 %v1466
        %v1468 = vpop.xlane.xlu0 %1467
        %v1469 = vsel %vm441, %v1463, -inf
        %1470 = vmax.xlane.f32.xlu0 %v1469
        %v1471 = vpop.xlane.xlu0 %1470
        %v1472 = vsub.f32 %v1444, %v1468
        %v1473 = vsub.f32 %v1463, %v1471
        %v1474 = vmul.f32 %v1472, 1.442695
        %v1475 = vpow.pop %v1474
        %v1476 = vmul.f32 %v1473, 1.442695
        %v1477 = vpow.pop %v1476
        %v1478 = vsel %vm441, %v1475, 0.0
        %1479 = vadd.xlane.f32.xlu0 %v1478
        %v1480 = vpop.xlane.xlu0 %1479
        %v1481 = vsel %vm441, %v1477, 0.0
        %1482 = vadd.xlane.f32.xlu0 %v1481
        %v1483 = vpop.xlane.xlu0 %1482
        %v1484 = vrcp.pop %v1480
        %v1485 = vmul.f32 %v1480, %v1484
        %v1486 = vsub.f32 1.0, %v1485
        %v1487 = vmul.f32 %v1484, %v1486
        %v1488 = vadd.f32 %v1484, %v1487
        %vm1489 = vweird.f32 %v1480
        %vm1490 = vweird.f32 %v1484
        %vm1491 = vmor %vm1489, %vm1490
        %v1492 = vsel %vm1491, %v1484, %v1488
        %v1493 = vand.u32 2147483647, %v1480
        %vm1494 = vcmp.eq.f32.partialorder %v1493, 8.507059e+37
        %v1495 = vand.u32 %v1480, 2147483648
        %v1496 = vor.u32 1.1754944e-38, %v1495
        %v1497 = vsel %vm1494, %v1496, %v1492
        %v1498 = vrcp.pop %v1483
        %v1499 = vmul.f32 %v1483, %v1498
        %v1500 = vsub.f32 1.0, %v1499
        %v1501 = vmul.f32 %v1498, %v1500
        %v1502 = vadd.f32 %v1498, %v1501
        %vm1503 = vweird.f32 %v1483
        %vm1504 = vweird.f32 %v1498
        %vm1505 = vmor %vm1503, %vm1504
        %v1506 = vsel %vm1505, %v1498, %v1502
        %v1507 = vand.u32 2147483647, %v1483
        %vm1508 = vcmp.eq.f32.partialorder %v1507, 8.507059e+37
        %v1509 = vand.u32 %v1483, 2147483648
        %v1510 = vor.u32 1.1754944e-38, %v1509
        %v1511 = vsel %vm1508, %v1510, %v1506
        %v1512 = vmul.f32 %v1475, %v1497
        %v1513 = vmul.f32 %v1477, %v1511
        %s1514 = scalar_lea.vmem %s283, 32 [#allocation4]
        %1515 = vst.msk [vmem:[%s1514] sm:$0xff] %vm441, %v1512
        %1516 = vst.msk [vmem:[%s1514 + $0x40] sm:$0xff] %vm441, %v1513
        %v1517 = vpack.c.bf16 %v1512, %v1512
        %v1518 = vpack.c.bf16 %v1513, %v1513
        %v1520 = vsel %vm441, %v1517, 0
        %v1523 = vsel %vm497, %v1426, 0
        %1525 = vmatpush.bf16.msra.mxu0 0
        %1526 = vmatpush.bf16.msra.mxu0 0
        %1527 = vmatpush.bf16.msra.mxu0 0
        %1528 = vmatpush.bf16.msra.mxu0 0
        %1529 = vmatpush.bf16.msra.mxu0 0
        %1530 = vmatpush.bf16.msra.mxu0 0
        %1531 = vmatpush.bf16.msra.mxu0 0
        %1532 = vmatpush.bf16.msra.mxu0 %v1523
        %1533 = vmatmul.bf16.gmra.mxu0 %v1520
        %v1534 = vpop.f32.mrf.mxu0
        %v1535 = vadd.f32 0.0, %v1534
        %v1536 = vpop.f32.mrf.mxu0
        %1537 = vdwg.mxu0
        %v1539 = vsel %vm441, %v1518, 0
        %v1542 = vsel %vm497, %v1427, 0
        %1544 = vmatpush.bf16.msra.mxu0 0
        %1545 = vmatpush.bf16.msra.mxu0 0
        %1546 = vmatpush.bf16.msra.mxu0 0
        %1547 = vmatpush.bf16.msra.mxu0 0
        %1548 = vmatpush.bf16.msra.mxu0 0
        %1549 = vmatpush.bf16.msra.mxu0 0
        %1550 = vmatpush.bf16.msra.mxu0 0
        %1551 = vmatpush.bf16.msra.mxu0 %v1542
        %1552 = vmatmul.bf16.gmra.mxu0 %v1539
        %v1553 = vpop.f32.mrf.mxu0
        %v1554 = vadd.f32 0.0, %v1553
        %v1555 = vpop.f32.mrf.mxu0
        %1556 = vdwg.mxu0
        %v1557 = vpack.c.bf16 %v1554, %v1535
        %v1560 = vunpack.c.l.b16 %v1342
        %v1561 = vunpack.c.l.b16 %v1343
        %v1562 = vpack.c.b16 %v1561, %v1560
        %v1565 = vsel %vm402, %v1557, 0
        %1567 = vmatpush.bf16.msra.mxu0 0
        %1568 = vmatpush.bf16.msra.mxu0 0
        %1569 = vmatpush.bf16.msra.mxu0 0
        %1570 = vmatpush.bf16.msra.mxu0 0
        %1571 = vmatpush.bf16.msra.mxu0 0
        %1572 = vmatpush.bf16.msra.mxu0 0
        %1573 = vmatpush.bf16.msra.mxu0 0
        %1574 = vmatpush.bf16.msra.mxu0 %v1562
        %1575 = vmatmul.bf16.gmra.mxu0 %v1565
        %v1576 = vpop.f32.mrf.mxu0
        %v1577 = vadd.f32 0.0, %v1576
        %v1578 = vpop.f32.mrf.mxu0
        %v1579 = vadd.f32 0.0, %v1578
        %1580 = vdwg.mxu0
        %v1581 = vadd.f32 %v1324, %v1577
        %v1582 = vadd.f32 %v1325, %v1579
        %s1583 = scalar_lea.vmem %s1, 80
        %v1584 = vld [vmem:[%s1583] sm:$0xf]
        %v1585 = vld [vmem:[%s1583 + $0x4] sm:$0xf]
        %v1586 = vld [vmem:[%s1583 + $0x8] sm:$0xf]
        %v1587 = vld [vmem:[%s1583 + $0xc] sm:$0xf]
        %s1588 = scalar_lea.vmem %s2, 80
        %v1589 = vld [vmem:[%s1588] sm:$0xf]
        %v1590 = vld [vmem:[%s1588 + $0x4] sm:$0xf]
        %v1591 = vld [vmem:[%s1588 + $0x8] sm:$0xf]
        %v1592 = vld [vmem:[%s1588 + $0xc] sm:$0xf]
        %s1593 = scalar_lea.vmem %s3, 80
        %v1594 = vld [vmem:[%s1593] sm:$0xf]
        %v1595 = vld [vmem:[%s1593 + $0x4] sm:$0xf]
        %v1596 = vld [vmem:[%s1593 + $0x8] sm:$0xf]
        %v1597 = vld [vmem:[%s1593 + $0xc] sm:$0xf]
        %s1598 = scalar_lea.vmem %s4, 40
        %v1599 = vld [vmem:[%s1598] sm:$0xf]
        %v1600 = vld [vmem:[%s1598 + $0x4] sm:$0xf]
        %v1605 = vunpack.c.l.b16 %v1584
        %v1606 = vunpack.c.l.b16 %v1585
        %v1607 = vunpack.c.l.b16 %v1586
        %v1608 = vunpack.c.l.b16 %v1587
        %v1609 = vpack.c.b16 %v1606, %v1605
        %v1610 = vpack.c.b16 %v1608, %v1607
        %1613 = vmatpush.bf16.msra.mxu0 0
        %1614 = vmatpush.bf16.msra.mxu0 0
        %1615 = vmatpush.bf16.msra.mxu0 0
        %1616 = vmatpush.bf16.msra.mxu0 0
        %1617 = vmatpush.bf16.msra.mxu0 0
        %1618 = vmatpush.bf16.msra.mxu0 0
        %1619 = vmatpush.bf16.msra.mxu0 %v1610
        %1620 = vmatpush.bf16.msra.mxu0 %v1609
        %1621 = vmatmul.bf16.gmra.mxu0 %v328
        %v1622 = vpop.f32.mrf.mxu0
        %v1623 = vadd.f32 0.0, %v1622
        %v1624 = vpop.f32.mrf.mxu0
        %v1625 = vadd.f32 0.0, %v1624
        %1626 = vdwg.mxu0
        %v1631 = vunpack.c.l.b16 %v1589
        %v1632 = vunpack.c.l.b16 %v1590
        %v1633 = vunpack.c.l.b16 %v1591
        %v1634 = vunpack.c.l.b16 %v1592
        %v1635 = vpack.c.b16 %v1632, %v1631
        %v1636 = vpack.c.b16 %v1634, %v1633
        %1639 = vmatpush.bf16.msra.mxu0 0
        %1640 = vmatpush.bf16.msra.mxu0 0
        %1641 = vmatpush.bf16.msra.mxu0 0
        %1642 = vmatpush.bf16.msra.mxu0 0
        %1643 = vmatpush.bf16.msra.mxu0 0
        %1644 = vmatpush.bf16.msra.mxu0 0
        %1645 = vmatpush.bf16.msra.mxu0 %v1636
        %1646 = vmatpush.bf16.msra.mxu0 %v1635
        %1647 = vmatmul.bf16.gmra.mxu0 %v328
        %v1648 = vpop.f32.mrf.mxu0
        %v1649 = vadd.f32 0.0, %v1648
        %v1650 = vpop.f32.mrf.mxu0
        %v1651 = vadd.f32 0.0, %v1650
        %1652 = vdwg.mxu0
        %v1657 = vunpack.c.l.b16 %v1594
        %v1658 = vunpack.c.l.b16 %v1595
        %v1659 = vunpack.c.l.b16 %v1596
        %v1660 = vunpack.c.l.b16 %v1597
        %v1661 = vpack.c.b16 %v1658, %v1657
        %v1662 = vpack.c.b16 %v1660, %v1659
        %1665 = vmatpush.bf16.msra.mxu0 0
        %1666 = vmatpush.bf16.msra.mxu0 0
        %1667 = vmatpush.bf16.msra.mxu0 0
        %1668 = vmatpush.bf16.msra.mxu0 0
        %1669 = vmatpush.bf16.msra.mxu0 0
        %1670 = vmatpush.bf16.msra.mxu0 0
        %1671 = vmatpush.bf16.msra.mxu0 %v1662
        %1672 = vmatpush.bf16.msra.mxu0 %v1661
        %1673 = vmatmul.bf16.gmra.mxu0 %v328
        %v1674 = vpop.f32.mrf.mxu0
        %v1675 = vadd.f32 0.0, %v1674
        %v1676 = vpop.f32.mrf.mxu0
        %v1677 = vadd.f32 0.0, %v1676
        %1678 = vdwg.mxu0
        %v1679 = vpack.c.bf16 %v1623, %v1623
        %v1680 = vpack.c.bf16 %v1625, %v1625
        %v1681 = vpack.c.bf16 %v1649, %v1649
        %v1682 = vpack.c.bf16 %v1651, %v1651
        %v1683 = vpack.c.bf16 %v1675, %v1675
        %v1684 = vpack.c.bf16 %v1677, %v1677
        %v1686 = vsel %vm402, %v1679, 0
        %v1689 = vsel %vm402, %v1681, 0
        %1691 = vmatpush.bf16.xpose.msra.mxu0 0
        %1692 = vmatpush.bf16.xpose.msra.mxu0 0
        %1693 = vmatpush.bf16.xpose.msra.mxu0 0
        %1694 = vmatpush.bf16.xpose.msra.mxu0 0
        %1695 = vmatpush.bf16.xpose.msra.mxu0 0
        %1696 = vmatpush.bf16.xpose.msra.mxu0 0
        %1697 = vmatpush.bf16.xpose.msra.mxu0 0
        %1698 = vmatpush.bf16.xpose.msra.mxu0 %v1689
        %1699 = vmatmul.bf16.gmra.mxu0 %v1686
        %v1700 = vpop.f32.mrf.mxu0
        %v1701 = vadd.f32 0.0, %v1700
        %v1702 = vpop.f32.mrf.mxu0
        %1703 = vdwg.mxu0
        %v1705 = vsel %vm402, %v1680, 0
        %v1708 = vsel %vm402, %v1682, 0
        %1710 = vmatpush.bf16.xpose.msra.mxu0 0
        %1711 = vmatpush.bf16.xpose.msra.mxu0 0
        %1712 = vmatpush.bf16.xpose.msra.mxu0 0
        %1713 = vmatpush.bf16.xpose.msra.mxu0 0
        %1714 = vmatpush.bf16.xpose.msra.mxu0 0
        %1715 = vmatpush.bf16.xpose.msra.mxu0 0
        %1716 = vmatpush.bf16.xpose.msra.mxu0 0
        %1717 = vmatpush.bf16.xpose.msra.mxu0 %v1708
        %1718 = vmatmul.bf16.gmra.mxu0 %v1705
        %v1719 = vpop.f32.mrf.mxu0
        %v1720 = vadd.f32 0.0, %v1719
        %v1721 = vpop.f32.mrf.mxu0
        %1722 = vdwg.mxu0
        %v1723 = vsel %vm441, %v1701, -inf
        %1724 = vmax.xlane.f32.xlu0 %v1723
        %v1725 = vpop.xlane.xlu0 %1724
        %v1726 = vsel %vm441, %v1720, -inf
        %1727 = vmax.xlane.f32.xlu0 %v1726
        %v1728 = vpop.xlane.xlu0 %1727
        %v1729 = vsub.f32 %v1701, %v1725
        %v1730 = vsub.f32 %v1720, %v1728
        %v1731 = vmul.f32 %v1729, 1.442695
        %v1732 = vpow.pop %v1731
        %v1733 = vmul.f32 %v1730, 1.442695
        %v1734 = vpow.pop %v1733
        %v1735 = vsel %vm441, %v1732, 0.0
        %1736 = vadd.xlane.f32.xlu0 %v1735
        %v1737 = vpop.xlane.xlu0 %1736
        %v1738 = vsel %vm441, %v1734, 0.0
        %1739 = vadd.xlane.f32.xlu0 %v1738
        %v1740 = vpop.xlane.xlu0 %1739
        %v1741 = vrcp.pop %v1737
        %v1742 = vmul.f32 %v1737, %v1741
        %v1743 = vsub.f32 1.0, %v1742
        %v1744 = vmul.f32 %v1741, %v1743
        %v1745 = vadd.f32 %v1741, %v1744
        %vm1746 = vweird.f32 %v1737
        %vm1747 = vweird.f32 %v1741
        %vm1748 = vmor %vm1746, %vm1747
        %v1749 = vsel %vm1748, %v1741, %v1745
        %v1750 = vand.u32 2147483647, %v1737
        %vm1751 = vcmp.eq.f32.partialorder %v1750, 8.507059e+37
        %v1752 = vand.u32 %v1737, 2147483648
        %v1753 = vor.u32 1.1754944e-38, %v1752
        %v1754 = vsel %vm1751, %v1753, %v1749
        %v1755 = vrcp.pop %v1740
        %v1756 = vmul.f32 %v1740, %v1755
        %v1757 = vsub.f32 1.0, %v1756
        %v1758 = vmul.f32 %v1755, %v1757
        %v1759 = vadd.f32 %v1755, %v1758
        %vm1760 = vweird.f32 %v1740
        %vm1761 = vweird.f32 %v1755
        %vm1762 = vmor %vm1760, %vm1761
        %v1763 = vsel %vm1762, %v1755, %v1759
        %v1764 = vand.u32 2147483647, %v1740
        %vm1765 = vcmp.eq.f32.partialorder %v1764, 8.507059e+37
        %v1766 = vand.u32 %v1740, 2147483648
        %v1767 = vor.u32 1.1754944e-38, %v1766
        %v1768 = vsel %vm1765, %v1767, %v1763
        %v1769 = vmul.f32 %v1732, %v1754
        %v1770 = vmul.f32 %v1734, %v1768
        %s1771 = scalar_lea.vmem %s283, 40 [#allocation4]
        %1772 = vst.msk [vmem:[%s1771] sm:$0xff] %vm441, %v1769
        %1773 = vst.msk [vmem:[%s1771 + $0x40] sm:$0xff] %vm441, %v1770
        %v1774 = vpack.c.bf16 %v1769, %v1769
        %v1775 = vpack.c.bf16 %v1770, %v1770
        %v1777 = vsel %vm441, %v1774, 0
        %v1780 = vsel %vm497, %v1683, 0
        %1782 = vmatpush.bf16.msra.mxu0 0
        %1783 = vmatpush.bf16.msra.mxu0 0
        %1784 = vmatpush.bf16.msra.mxu0 0
        %1785 = vmatpush.bf16.msra.mxu0 0
        %1786 = vmatpush.bf16.msra.mxu0 0
        %1787 = vmatpush.bf16.msra.mxu0 0
        %1788 = vmatpush.bf16.msra.mxu0 0
        %1789 = vmatpush.bf16.msra.mxu0 %v1780
        %1790 = vmatmul.bf16.gmra.mxu0 %v1777
        %v1791 = vpop.f32.mrf.mxu0
        %v1792 = vadd.f32 0.0, %v1791
        %v1793 = vpop.f32.mrf.mxu0
        %1794 = vdwg.mxu0
        %v1796 = vsel %vm441, %v1775, 0
        %v1799 = vsel %vm497, %v1684, 0
        %1801 = vmatpush.bf16.msra.mxu0 0
        %1802 = vmatpush.bf16.msra.mxu0 0
        %1803 = vmatpush.bf16.msra.mxu0 0
        %1804 = vmatpush.bf16.msra.mxu0 0
        %1805 = vmatpush.bf16.msra.mxu0 0
        %1806 = vmatpush.bf16.msra.mxu0 0
        %1807 = vmatpush.bf16.msra.mxu0 0
        %1808 = vmatpush.bf16.msra.mxu0 %v1799
        %1809 = vmatmul.bf16.gmra.mxu0 %v1796
        %v1810 = vpop.f32.mrf.mxu0
        %v1811 = vadd.f32 0.0, %v1810
        %v1812 = vpop.f32.mrf.mxu0
        %1813 = vdwg.mxu0
        %v1814 = vpack.c.bf16 %v1811, %v1792
        %v1817 = vunpack.c.l.b16 %v1599
        %v1818 = vunpack.c.l.b16 %v1600
        %v1819 = vpack.c.b16 %v1818, %v1817
        %v1822 = vsel %vm402, %v1814, 0
        %1824 = vmatpush.bf16.msra.mxu0 0
        %1825 = vmatpush.bf16.msra.mxu0 0
        %1826 = vmatpush.bf16.msra.mxu0 0
        %1827 = vmatpush.bf16.msra.mxu0 0
        %1828 = vmatpush.bf16.msra.mxu0 0
        %1829 = vmatpush.bf16.msra.mxu0 0
        %1830 = vmatpush.bf16.msra.mxu0 0
        %1831 = vmatpush.bf16.msra.mxu0 %v1819
        %1832 = vmatmul.bf16.gmra.mxu0 %v1822
        %v1833 = vpop.f32.mrf.mxu0
        %v1834 = vadd.f32 0.0, %v1833
        %v1835 = vpop.f32.mrf.mxu0
        %v1836 = vadd.f32 0.0, %v1835
        %1837 = vdwg.mxu0
        %v1838 = vadd.f32 %v1581, %v1834
        %v1839 = vadd.f32 %v1582, %v1836
        %s1840 = scalar_lea.vmem %s1, 96
        %v1841 = vld [vmem:[%s1840] sm:$0xf]
        %v1842 = vld [vmem:[%s1840 + $0x4] sm:$0xf]
        %v1843 = vld [vmem:[%s1840 + $0x8] sm:$0xf]
        %v1844 = vld [vmem:[%s1840 + $0xc] sm:$0xf]
        %s1845 = scalar_lea.vmem %s2, 96
        %v1846 = vld [vmem:[%s1845] sm:$0xf]
        %v1847 = vld [vmem:[%s1845 + $0x4] sm:$0xf]
        %v1848 = vld [vmem:[%s1845 + $0x8] sm:$0xf]
        %v1849 = vld [vmem:[%s1845 + $0xc] sm:$0xf]
        %s1850 = scalar_lea.vmem %s3, 96
        %v1851 = vld [vmem:[%s1850] sm:$0xf]
        %v1852 = vld [vmem:[%s1850 + $0x4] sm:$0xf]
        %v1853 = vld [vmem:[%s1850 + $0x8] sm:$0xf]
        %v1854 = vld [vmem:[%s1850 + $0xc] sm:$0xf]
        %s1855 = scalar_lea.vmem %s4, 48
        %v1856 = vld [vmem:[%s1855] sm:$0xf]
        %v1857 = vld [vmem:[%s1855 + $0x4] sm:$0xf]
        %v1862 = vunpack.c.l.b16 %v1841
        %v1863 = vunpack.c.l.b16 %v1842
        %v1864 = vunpack.c.l.b16 %v1843
        %v1865 = vunpack.c.l.b16 %v1844
        %v1866 = vpack.c.b16 %v1863, %v1862
        %v1867 = vpack.c.b16 %v1865, %v1864
        %1870 = vmatpush.bf16.msra.mxu0 0
        %1871 = vmatpush.bf16.msra.mxu0 0
        %1872 = vmatpush.bf16.msra.mxu0 0
        %1873 = vmatpush.bf16.msra.mxu0 0
        %1874 = vmatpush.bf16.msra.mxu0 0
        %1875 = vmatpush.bf16.msra.mxu0 0
        %1876 = vmatpush.bf16.msra.mxu0 %v1867
        %1877 = vmatpush.bf16.msra.mxu0 %v1866
        %1878 = vmatmul.bf16.gmra.mxu0 %v328
        %v1879 = vpop.f32.mrf.mxu0
        %v1880 = vadd.f32 0.0, %v1879
        %v1881 = vpop.f32.mrf.mxu0
        %v1882 = vadd.f32 0.0, %v1881
        %1883 = vdwg.mxu0
        %v1888 = vunpack.c.l.b16 %v1846
        %v1889 = vunpack.c.l.b16 %v1847
        %v1890 = vunpack.c.l.b16 %v1848
        %v1891 = vunpack.c.l.b16 %v1849
        %v1892 = vpack.c.b16 %v1889, %v1888
        %v1893 = vpack.c.b16 %v1891, %v1890
        %1896 = vmatpush.bf16.msra.mxu0 0
        %1897 = vmatpush.bf16.msra.mxu0 0
        %1898 = vmatpush.bf16.msra.mxu0 0
        %1899 = vmatpush.bf16.msra.mxu0 0
        %1900 = vmatpush.bf16.msra.mxu0 0
        %1901 = vmatpush.bf16.msra.mxu0 0
        %1902 = vmatpush.bf16.msra.mxu0 %v1893
        %1903 = vmatpush.bf16.msra.mxu0 %v1892
        %1904 = vmatmul.bf16.gmra.mxu0 %v328
        %v1905 = vpop.f32.mrf.mxu0
        %v1906 = vadd.f32 0.0, %v1905
        %v1907 = vpop.f32.mrf.mxu0
        %v1908 = vadd.f32 0.0, %v1907
        %1909 = vdwg.mxu0
        %v1914 = vunpack.c.l.b16 %v1851
        %v1915 = vunpack.c.l.b16 %v1852
        %v1916 = vunpack.c.l.b16 %v1853
        %v1917 = vunpack.c.l.b16 %v1854
        %v1918 = vpack.c.b16 %v1915, %v1914
        %v1919 = vpack.c.b16 %v1917, %v1916
        %1922 = vmatpush.bf16.msra.mxu0 0
        %1923 = vmatpush.bf16.msra.mxu0 0
        %1924 = vmatpush.bf16.msra.mxu0 0
        %1925 = vmatpush.bf16.msra.mxu0 0
        %1926 = vmatpush.bf16.msra.mxu0 0
        %1927 = vmatpush.bf16.msra.mxu0 0
        %1928 = vmatpush.bf16.msra.mxu0 %v1919
        %1929 = vmatpush.bf16.msra.mxu0 %v1918
        %1930 = vmatmul.bf16.gmra.mxu0 %v328
        %v1931 = vpop.f32.mrf.mxu0
        %v1932 = vadd.f32 0.0, %v1931
        %v1933 = vpop.f32.mrf.mxu0
        %v1934 = vadd.f32 0.0, %v1933
        %1935 = vdwg.mxu0
        %v1936 = vpack.c.bf16 %v1880, %v1880
        %v1937 = vpack.c.bf16 %v1882, %v1882
        %v1938 = vpack.c.bf16 %v1906, %v1906
        %v1939 = vpack.c.bf16 %v1908, %v1908
        %v1940 = vpack.c.bf16 %v1932, %v1932
        %v1941 = vpack.c.bf16 %v1934, %v1934
        %v1943 = vsel %vm402, %v1936, 0
        %v1946 = vsel %vm402, %v1938, 0
        %1948 = vmatpush.bf16.xpose.msra.mxu0 0
        %1949 = vmatpush.bf16.xpose.msra.mxu0 0
        %1950 = vmatpush.bf16.xpose.msra.mxu0 0
        %1951 = vmatpush.bf16.xpose.msra.mxu0 0
        %1952 = vmatpush.bf16.xpose.msra.mxu0 0
        %1953 = vmatpush.bf16.xpose.msra.mxu0 0
        %1954 = vmatpush.bf16.xpose.msra.mxu0 0
        %1955 = vmatpush.bf16.xpose.msra.mxu0 %v1946
        %1956 = vmatmul.bf16.gmra.mxu0 %v1943
        %v1957 = vpop.f32.mrf.mxu0
        %v1958 = vadd.f32 0.0, %v1957
        %v1959 = vpop.f32.mrf.mxu0
        %1960 = vdwg.mxu0
        %v1962 = vsel %vm402, %v1937, 0
        %v1965 = vsel %vm402, %v1939, 0
        %1967 = vmatpush.bf16.xpose.msra.mxu0 0
        %1968 = vmatpush.bf16.xpose.msra.mxu0 0
        %1969 = vmatpush.bf16.xpose.msra.mxu0 0
        %1970 = vmatpush.bf16.xpose.msra.mxu0 0
        %1971 = vmatpush.bf16.xpose.msra.mxu0 0
        %1972 = vmatpush.bf16.xpose.msra.mxu0 0
        %1973 = vmatpush.bf16.xpose.msra.mxu0 0
        %1974 = vmatpush.bf16.xpose.msra.mxu0 %v1965
        %1975 = vmatmul.bf16.gmra.mxu0 %v1962
        %v1976 = vpop.f32.mrf.mxu0
        %v1977 = vadd.f32 0.0, %v1976
        %v1978 = vpop.f32.mrf.mxu0
        %1979 = vdwg.mxu0
        %v1980 = vsel %vm441, %v1958, -inf
        %1981 = vmax.xlane.f32.xlu0 %v1980
        %v1982 = vpop.xlane.xlu0 %1981
        %v1983 = vsel %vm441, %v1977, -inf
        %1984 = vmax.xlane.f32.xlu0 %v1983
        %v1985 = vpop.xlane.xlu0 %1984
        %v1986 = vsub.f32 %v1958, %v1982
        %v1987 = vsub.f32 %v1977, %v1985
        %v1988 = vmul.f32 %v1986, 1.442695
        %v1989 = vpow.pop %v1988
        %v1990 = vmul.f32 %v1987, 1.442695
        %v1991 = vpow.pop %v1990
        %v1992 = vsel %vm441, %v1989, 0.0
        %1993 = vadd.xlane.f32.xlu0 %v1992
        %v1994 = vpop.xlane.xlu0 %1993
        %v1995 = vsel %vm441, %v1991, 0.0
        %1996 = vadd.xlane.f32.xlu0 %v1995
        %v1997 = vpop.xlane.xlu0 %1996
        %v1998 = vrcp.pop %v1994
        %v1999 = vmul.f32 %v1994, %v1998
        %v2000 = vsub.f32 1.0, %v1999
        %v2001 = vmul.f32 %v1998, %v2000
        %v2002 = vadd.f32 %v1998, %v2001
        %vm2003 = vweird.f32 %v1994
        %vm2004 = vweird.f32 %v1998
        %vm2005 = vmor %vm2003, %vm2004
        %v2006 = vsel %vm2005, %v1998, %v2002
        %v2007 = vand.u32 2147483647, %v1994
        %vm2008 = vcmp.eq.f32.partialorder %v2007, 8.507059e+37
        %v2009 = vand.u32 %v1994, 2147483648
        %v2010 = vor.u32 1.1754944e-38, %v2009
        %v2011 = vsel %vm2008, %v2010, %v2006
        %v2012 = vrcp.pop %v1997
        %v2013 = vmul.f32 %v1997, %v2012
        %v2014 = vsub.f32 1.0, %v2013
        %v2015 = vmul.f32 %v2012, %v2014
        %v2016 = vadd.f32 %v2012, %v2015
        %vm2017 = vweird.f32 %v1997
        %vm2018 = vweird.f32 %v2012
        %vm2019 = vmor %vm2017, %vm2018
        %v2020 = vsel %vm2019, %v2012, %v2016
        %v2021 = vand.u32 2147483647, %v1997
        %vm2022 = vcmp.eq.f32.partialorder %v2021, 8.507059e+37
        %v2023 = vand.u32 %v1997, 2147483648
        %v2024 = vor.u32 1.1754944e-38, %v2023
        %v2025 = vsel %vm2022, %v2024, %v2020
        %v2026 = vmul.f32 %v1989, %v2011
        %v2027 = vmul.f32 %v1991, %v2025
        %s2028 = scalar_lea.vmem %s283, 48 [#allocation4]
        %2029 = vst.msk [vmem:[%s2028] sm:$0xff] %vm441, %v2026
        %2030 = vst.msk [vmem:[%s2028 + $0x40] sm:$0xff] %vm441, %v2027
        %v2031 = vpack.c.bf16 %v2026, %v2026
        %v2032 = vpack.c.bf16 %v2027, %v2027
        %v2034 = vsel %vm441, %v2031, 0
        %v2037 = vsel %vm497, %v1940, 0
        %2039 = vmatpush.bf16.msra.mxu0 0
        %2040 = vmatpush.bf16.msra.mxu0 0
        %2041 = vmatpush.bf16.msra.mxu0 0
        %2042 = vmatpush.bf16.msra.mxu0 0
        %2043 = vmatpush.bf16.msra.mxu0 0
        %2044 = vmatpush.bf16.msra.mxu0 0
        %2045 = vmatpush.bf16.msra.mxu0 0
        %2046 = vmatpush.bf16.msra.mxu0 %v2037
        %2047 = vmatmul.bf16.gmra.mxu0 %v2034
        %v2048 = vpop.f32.mrf.mxu0
        %v2049 = vadd.f32 0.0, %v2048
        %v2050 = vpop.f32.mrf.mxu0
        %2051 = vdwg.mxu0
        %v2053 = vsel %vm441, %v2032, 0
        %v2056 = vsel %vm497, %v1941, 0
        %2058 = vmatpush.bf16.msra.mxu0 0
        %2059 = vmatpush.bf16.msra.mxu0 0
        %2060 = vmatpush.bf16.msra.mxu0 0
        %2061 = vmatpush.bf16.msra.mxu0 0
        %2062 = vmatpush.bf16.msra.mxu0 0
        %2063 = vmatpush.bf16.msra.mxu0 0
        %2064 = vmatpush.bf16.msra.mxu0 0
        %2065 = vmatpush.bf16.msra.mxu0 %v2056
        %2066 = vmatmul.bf16.gmra.mxu0 %v2053
        %v2067 = vpop.f32.mrf.mxu0
        %v2068 = vadd.f32 0.0, %v2067
        %v2069 = vpop.f32.mrf.mxu0
        %2070 = vdwg.mxu0
        %v2071 = vpack.c.bf16 %v2068, %v2049
        %v2074 = vunpack.c.l.b16 %v1856
        %v2075 = vunpack.c.l.b16 %v1857
        %v2076 = vpack.c.b16 %v2075, %v2074
        %v2079 = vsel %vm402, %v2071, 0
        %2081 = vmatpush.bf16.msra.mxu0 0
        %2082 = vmatpush.bf16.msra.mxu0 0
        %2083 = vmatpush.bf16.msra.mxu0 0
        %2084 = vmatpush.bf16.msra.mxu0 0
        %2085 = vmatpush.bf16.msra.mxu0 0
        %2086 = vmatpush.bf16.msra.mxu0 0
        %2087 = vmatpush.bf16.msra.mxu0 0
        %2088 = vmatpush.bf16.msra.mxu0 %v2076
        %2089 = vmatmul.bf16.gmra.mxu0 %v2079
        %v2090 = vpop.f32.mrf.mxu0
        %v2091 = vadd.f32 0.0, %v2090
        %v2092 = vpop.f32.mrf.mxu0
        %v2093 = vadd.f32 0.0, %v2092
        %2094 = vdwg.mxu0
        %v2095 = vadd.f32 %v1838, %v2091
        %v2096 = vadd.f32 %v1839, %v2093
        %s2097 = scalar_lea.vmem %s1, 112
        %v2098 = vld [vmem:[%s2097] sm:$0xf]
        %v2099 = vld [vmem:[%s2097 + $0x4] sm:$0xf]
        %v2100 = vld [vmem:[%s2097 + $0x8] sm:$0xf]
        %v2101 = vld [vmem:[%s2097 + $0xc] sm:$0xf]
        %s2102 = scalar_lea.vmem %s2, 112
        %v2103 = vld [vmem:[%s2102] sm:$0xf]
        %v2104 = vld [vmem:[%s2102 + $0x4] sm:$0xf]
        %v2105 = vld [vmem:[%s2102 + $0x8] sm:$0xf]
        %v2106 = vld [vmem:[%s2102 + $0xc] sm:$0xf]
        %s2107 = scalar_lea.vmem %s3, 112
        %v2108 = vld [vmem:[%s2107] sm:$0xf]
        %v2109 = vld [vmem:[%s2107 + $0x4] sm:$0xf]
        %v2110 = vld [vmem:[%s2107 + $0x8] sm:$0xf]
        %v2111 = vld [vmem:[%s2107 + $0xc] sm:$0xf]
        %s2112 = scalar_lea.vmem %s4, 56
        %v2113 = vld [vmem:[%s2112] sm:$0xf]
        %v2114 = vld [vmem:[%s2112 + $0x4] sm:$0xf]
        %v2119 = vunpack.c.l.b16 %v2098
        %v2120 = vunpack.c.l.b16 %v2099
        %v2121 = vunpack.c.l.b16 %v2100
        %v2122 = vunpack.c.l.b16 %v2101
        %v2123 = vpack.c.b16 %v2120, %v2119
        %v2124 = vpack.c.b16 %v2122, %v2121
        %2127 = vmatpush.bf16.msra.mxu0 0
        %2128 = vmatpush.bf16.msra.mxu0 0
        %2129 = vmatpush.bf16.msra.mxu0 0
        %2130 = vmatpush.bf16.msra.mxu0 0
        %2131 = vmatpush.bf16.msra.mxu0 0
        %2132 = vmatpush.bf16.msra.mxu0 0
        %2133 = vmatpush.bf16.msra.mxu0 %v2124
        %2134 = vmatpush.bf16.msra.mxu0 %v2123
        %2135 = vmatmul.bf16.gmra.mxu0 %v328
        %v2136 = vpop.f32.mrf.mxu0
        %v2137 = vadd.f32 0.0, %v2136
        %v2138 = vpop.f32.mrf.mxu0
        %v2139 = vadd.f32 0.0, %v2138
        %2140 = vdwg.mxu0
        %v2145 = vunpack.c.l.b16 %v2103
        %v2146 = vunpack.c.l.b16 %v2104
        %v2147 = vunpack.c.l.b16 %v2105
        %v2148 = vunpack.c.l.b16 %v2106
        %v2149 = vpack.c.b16 %v2146, %v2145
        %v2150 = vpack.c.b16 %v2148, %v2147
        %2153 = vmatpush.bf16.msra.mxu0 0
        %2154 = vmatpush.bf16.msra.mxu0 0
        %2155 = vmatpush.bf16.msra.mxu0 0
        %2156 = vmatpush.bf16.msra.mxu0 0
        %2157 = vmatpush.bf16.msra.mxu0 0
        %2158 = vmatpush.bf16.msra.mxu0 0
        %2159 = vmatpush.bf16.msra.mxu0 %v2150
        %2160 = vmatpush.bf16.msra.mxu0 %v2149
        %2161 = vmatmul.bf16.gmra.mxu0 %v328
        %v2162 = vpop.f32.mrf.mxu0
        %v2163 = vadd.f32 0.0, %v2162
        %v2164 = vpop.f32.mrf.mxu0
        %v2165 = vadd.f32 0.0, %v2164
        %2166 = vdwg.mxu0
        %v2171 = vunpack.c.l.b16 %v2108
        %v2172 = vunpack.c.l.b16 %v2109
        %v2173 = vunpack.c.l.b16 %v2110
        %v2174 = vunpack.c.l.b16 %v2111
        %v2175 = vpack.c.b16 %v2172, %v2171
        %v2176 = vpack.c.b16 %v2174, %v2173
        %2179 = vmatpush.bf16.msra.mxu0 0
        %2180 = vmatpush.bf16.msra.mxu0 0
        %2181 = vmatpush.bf16.msra.mxu0 0
        %2182 = vmatpush.bf16.msra.mxu0 0
        %2183 = vmatpush.bf16.msra.mxu0 0
        %2184 = vmatpush.bf16.msra.mxu0 0
        %2185 = vmatpush.bf16.msra.mxu0 %v2176
        %2186 = vmatpush.bf16.msra.mxu0 %v2175
        %2187 = vmatmul.bf16.gmra.mxu0 %v328
        %v2188 = vpop.f32.mrf.mxu0
        %v2189 = vadd.f32 0.0, %v2188
        %v2190 = vpop.f32.mrf.mxu0
        %v2191 = vadd.f32 0.0, %v2190
        %2192 = vdwg.mxu0
        %v2193 = vpack.c.bf16 %v2137, %v2137
        %v2194 = vpack.c.bf16 %v2139, %v2139
        %v2195 = vpack.c.bf16 %v2163, %v2163
        %v2196 = vpack.c.bf16 %v2165, %v2165
        %v2197 = vpack.c.bf16 %v2189, %v2189
        %v2198 = vpack.c.bf16 %v2191, %v2191
        %v2200 = vsel %vm402, %v2193, 0
        %v2203 = vsel %vm402, %v2195, 0
        %2205 = vmatpush.bf16.xpose.msra.mxu0 0
        %2206 = vmatpush.bf16.xpose.msra.mxu0 0
        %2207 = vmatpush.bf16.xpose.msra.mxu0 0
        %2208 = vmatpush.bf16.xpose.msra.mxu0 0
        %2209 = vmatpush.bf16.xpose.msra.mxu0 0
        %2210 = vmatpush.bf16.xpose.msra.mxu0 0
        %2211 = vmatpush.bf16.xpose.msra.mxu0 0
        %2212 = vmatpush.bf16.xpose.msra.mxu0 %v2203
        %2213 = vmatmul.bf16.gmra.mxu0 %v2200
        %v2214 = vpop.f32.mrf.mxu0
        %v2215 = vadd.f32 0.0, %v2214
        %v2216 = vpop.f32.mrf.mxu0
        %2217 = vdwg.mxu0
        %v2219 = vsel %vm402, %v2194, 0
        %v2222 = vsel %vm402, %v2196, 0
        %2224 = vmatpush.bf16.xpose.msra.mxu0 0
        %2225 = vmatpush.bf16.xpose.msra.mxu0 0
        %2226 = vmatpush.bf16.xpose.msra.mxu0 0
        %2227 = vmatpush.bf16.xpose.msra.mxu0 0
        %2228 = vmatpush.bf16.xpose.msra.mxu0 0
        %2229 = vmatpush.bf16.xpose.msra.mxu0 0
        %2230 = vmatpush.bf16.xpose.msra.mxu0 0
        %2231 = vmatpush.bf16.xpose.msra.mxu0 %v2222
        %2232 = vmatmul.bf16.gmra.mxu0 %v2219
        %v2233 = vpop.f32.mrf.mxu0
        %v2234 = vadd.f32 0.0, %v2233
        %v2235 = vpop.f32.mrf.mxu0
        %2236 = vdwg.mxu0
        %v2237 = vsel %vm441, %v2215, -inf
        %2238 = vmax.xlane.f32.xlu0 %v2237
        %v2239 = vpop.xlane.xlu0 %2238
        %v2240 = vsel %vm441, %v2234, -inf
        %2241 = vmax.xlane.f32.xlu0 %v2240
        %v2242 = vpop.xlane.xlu0 %2241
        %v2243 = vsub.f32 %v2215, %v2239
        %v2244 = vsub.f32 %v2234, %v2242
        %v2245 = vmul.f32 %v2243, 1.442695
        %v2246 = vpow.pop %v2245
        %v2247 = vmul.f32 %v2244, 1.442695
        %v2248 = vpow.pop %v2247
        %v2249 = vsel %vm441, %v2246, 0.0
        %2250 = vadd.xlane.f32.xlu0 %v2249
        %v2251 = vpop.xlane.xlu0 %2250
        %v2252 = vsel %vm441, %v2248, 0.0
        %2253 = vadd.xlane.f32.xlu0 %v2252
        %v2254 = vpop.xlane.xlu0 %2253
        %v2255 = vrcp.pop %v2251
        %v2256 = vmul.f32 %v2251, %v2255
        %v2257 = vsub.f32 1.0, %v2256
        %v2258 = vmul.f32 %v2255, %v2257
        %v2259 = vadd.f32 %v2255, %v2258
        %vm2260 = vweird.f32 %v2251
        %vm2261 = vweird.f32 %v2255
        %vm2262 = vmor %vm2260, %vm2261
        %v2263 = vsel %vm2262, %v2255, %v2259
        %v2264 = vand.u32 2147483647, %v2251
        %vm2265 = vcmp.eq.f32.partialorder %v2264, 8.507059e+37
        %v2266 = vand.u32 %v2251, 2147483648
        %v2267 = vor.u32 1.1754944e-38, %v2266
        %v2268 = vsel %vm2265, %v2267, %v2263
        %v2269 = vrcp.pop %v2254
        %v2270 = vmul.f32 %v2254, %v2269
        %v2271 = vsub.f32 1.0, %v2270
        %v2272 = vmul.f32 %v2269, %v2271
        %v2273 = vadd.f32 %v2269, %v2272
        %vm2274 = vweird.f32 %v2254
        %vm2275 = vweird.f32 %v2269
        %vm2276 = vmor %vm2274, %vm2275
        %v2277 = vsel %vm2276, %v2269, %v2273
        %v2278 = vand.u32 2147483647, %v2254
        %vm2279 = vcmp.eq.f32.partialorder %v2278, 8.507059e+37
        %v2280 = vand.u32 %v2254, 2147483648
        %v2281 = vor.u32 1.1754944e-38, %v2280
        %v2282 = vsel %vm2279, %v2281, %v2277
        %v2283 = vmul.f32 %v2246, %v2268
        %v2284 = vmul.f32 %v2248, %v2282
        %s2285 = scalar_lea.vmem %s283, 56 [#allocation4]
        %2286 = vst.msk [vmem:[%s2285] sm:$0xff] %vm441, %v2283
        %2287 = vst.msk [vmem:[%s2285 + $0x40] sm:$0xff] %vm441, %v2284
        %v2288 = vpack.c.bf16 %v2283, %v2283
        %v2289 = vpack.c.bf16 %v2284, %v2284
        %v2291 = vsel %vm441, %v2288, 0
        %v2294 = vsel %vm497, %v2197, 0
        %2296 = vmatpush.bf16.msra.mxu0 0
        %2297 = vmatpush.bf16.msra.mxu0 0
        %2298 = vmatpush.bf16.msra.mxu0 0
        %2299 = vmatpush.bf16.msra.mxu0 0
        %2300 = vmatpush.bf16.msra.mxu0 0
        %2301 = vmatpush.bf16.msra.mxu0 0
        %2302 = vmatpush.bf16.msra.mxu0 0
        %2303 = vmatpush.bf16.msra.mxu0 %v2294
        %2304 = vmatmul.bf16.gmra.mxu0 %v2291
        %v2305 = vpop.f32.mrf.mxu0
        %v2306 = vadd.f32 0.0, %v2305
        %v2307 = vpop.f32.mrf.mxu0
        %2308 = vdwg.mxu0
        %v2310 = vsel %vm441, %v2289, 0
        %v2313 = vsel %vm497, %v2198, 0
        %2315 = vmatpush.bf16.msra.mxu0 0
        %2316 = vmatpush.bf16.msra.mxu0 0
        %2317 = vmatpush.bf16.msra.mxu0 0
        %2318 = vmatpush.bf16.msra.mxu0 0
        %2319 = vmatpush.bf16.msra.mxu0 0
        %2320 = vmatpush.bf16.msra.mxu0 0
        %2321 = vmatpush.bf16.msra.mxu0 0
        %2322 = vmatpush.bf16.msra.mxu0 %v2313
        %2323 = vmatmul.bf16.gmra.mxu0 %v2310
        %v2324 = vpop.f32.mrf.mxu0
        %v2325 = vadd.f32 0.0, %v2324
        %v2326 = vpop.f32.mrf.mxu0
        %2327 = vdwg.mxu0
        %v2328 = vpack.c.bf16 %v2325, %v2306
        %v2331 = vunpack.c.l.b16 %v2113
        %v2332 = vunpack.c.l.b16 %v2114
        %v2333 = vpack.c.b16 %v2332, %v2331
        %v2336 = vsel %vm402, %v2328, 0
        %2338 = vmatpush.bf16.msra.mxu0 0
        %2339 = vmatpush.bf16.msra.mxu0 0
        %2340 = vmatpush.bf16.msra.mxu0 0
        %2341 = vmatpush.bf16.msra.mxu0 0
        %2342 = vmatpush.bf16.msra.mxu0 0
        %2343 = vmatpush.bf16.msra.mxu0 0
        %2344 = vmatpush.bf16.msra.mxu0 0
        %2345 = vmatpush.bf16.msra.mxu0 %v2333
        %2346 = vmatmul.bf16.gmra.mxu0 %v2336
        %v2347 = vpop.f32.mrf.mxu0
        %v2348 = vadd.f32 0.0, %v2347
        %v2349 = vpop.f32.mrf.mxu0
        %v2350 = vadd.f32 0.0, %v2349
        %2351 = vdwg.mxu0
        %v2352 = vadd.f32 %v2095, %v2348
        %v2353 = vadd.f32 %v2096, %v2350
        %v2354 = vld [vmem:[%s5] sm:$0x1]
        %v2356 = vperm.slane %v2354, 0
        %v2358 = vadd.f32 %v2352, %v2356
        %v2359 = vadd.f32 %v2353, %v2356
        %2360 = vst.msk [vmem:[%s276] sm:$0xff] %vm326, %v2358
        %2361 = vst.msk [vmem:[%s276 + $0x8] sm:$0xff] %vm326, %v2359
        %s2362 = sand.u32 %s164, 1
        %s2363 = scalar_lea.sflag [#allocation3], %s2362
        %s2364 = sand.u32 %s164, 1
        %s2365 = smul.addr %s2364, 16
        %s2366 = scalar_lea.vmem [#allocation2], %s2365
        %s2367 = sand.u32 %s190, 1
        %s2368 = scalar_lea.sflag [#allocation5], %s2367
        %s2369 = sand.u32 %s190, 1
        %s2370 = smul.addr %s2369, 128
        %s2371 = scalar_lea.vmem [#allocation4], %s2370
        // Predicated region
        $region45: #{tpu_custom_call.1} parent=43 // pred_check
          %p2372 = pneg %p174
        $region46: #{tpu_custom_call.1} parent=43 // pred_check_branch
          %2374 = sbr.rel (%p2372) target = $region48
        $region47: #{tpu_custom_call.1} parent=43 // pred_region
          %s2375 = smul.u32 2, %s25
          %2377 = vsyncadd %s2363, 0
          %s2378 = smul.addr %s2375, 8
          %s2379 = scalar_lea.hbm %s6, %s2378
          %s2380 = sshll.u32 %s2366, 4
          %s2381 = int_to_ptr.vmem [resolvable:$true] %s2380
          %s2382 = sshll.u32 %s2379, 4
          %s2383 = int_to_ptr.hbm [resolvable:$true] %s2382
          %2388 = dma.vmem_to_hbm [thread:$0]  %s2381, 256, %s2383, %s2363, 128, 128, 8
        $region48: #{tpu_custom_call.1} parent=43 // pred_fallthru
          _
        // Predicated region
        $region49: #{tpu_custom_call.1} parent=43 // pred_check
          %p2389 = pneg %p200
        $region50: #{tpu_custom_call.1} parent=43 // pred_check_branch
          %2391 = sbr.rel (%p2389) target = $region52
        $region51: #{tpu_custom_call.1} parent=43 // pred_region
          %s2392 = smul.u32 2, %s25
          %2394 = vsyncadd %s2368, 0
          %s2395 = smul.addr %s2392, 8
          %s2396 = smul.addr %s2395, 8
          %s2397 = scalar_lea.hbm %s7, %s2396
          %s2398 = sshll.u32 %s2371, 4
          %s2399 = int_to_ptr.vmem [resolvable:$true] %s2398
          %s2400 = sshll.u32 %s2397, 4
          %s2401 = int_to_ptr.hbm [resolvable:$true] %s2400
          %2406 = dma.vmem_to_hbm [thread:$0]  %s2399, 2048, %s2401, %s2368, 128, 128, 8
        $region52: #{tpu_custom_call.1} parent=43 // pred_fallthru
          _
      $region44: #{tpu_custom_call.1} parent=5 // pred_fallthru
        _
      %p2407 = scmp.le.s32.totalorder 2, %s20
      // Predicated region
      $region53: #{tpu_custom_call.1} parent=5 // pred_check
        %p2408 = pneg %p2407
      $region54: #{tpu_custom_call.1} parent=5 // pred_check_branch
        %2410 = sbr.rel (%p2408) target = $region56
      $region55: #{tpu_custom_call.1} parent=5 // pred_region
        %s2411 = ssub.s32 %s20, 2
        // Predicated region
        $region57: #{tpu_custom_call.1} parent=55 // pred_check
          %p2412 = pneg %p180
        $region58: #{tpu_custom_call.1} parent=55 // pred_check_branch
          %2414 = sbr.rel (%p2412) target = $region60
        $region59: #{tpu_custom_call.1} parent=55 // pred_region
          %s2415 = sand.u32 %s165, 1
          %s2416 = scalar_lea.sflag [#allocation3], %s2415
          %s2417 = sand.u32 %s165, 1
          %s2418 = smul.addr %s2417, 16
          %s2419 = scalar_lea.vmem [#allocation2], %s2418
          %2421 = dma.done %s2416, 256
        $region60: #{tpu_custom_call.1} parent=55 // pred_fallthru
          _
        // Predicated region
        $region61: #{tpu_custom_call.1} parent=55 // pred_check
          %p2422 = pneg %p206
        $region62: #{tpu_custom_call.1} parent=55 // pred_check_branch
          %2424 = sbr.rel (%p2422) target = $region64
        $region63: #{tpu_custom_call.1} parent=55 // pred_region
          %s2425 = sand.u32 %s191, 1
          %s2426 = scalar_lea.sflag [#allocation5], %s2425
          %s2427 = sand.u32 %s191, 1
          %s2428 = smul.addr %s2427, 128
          %s2429 = scalar_lea.vmem [#allocation4], %s2428
          %2431 = dma.done %s2426, 2048
        $region64: #{tpu_custom_call.1} parent=55 // pred_fallthru
          _
      $region56: #{tpu_custom_call.1} parent=5 // pred_fallthru
        _
    $region6: #{tpu_custom_call.1} parent=1 // loop_footer
      %s24 = sadd.s32 1, %s20
    $region7: #{tpu_custom_call.1} parent=1 // loop_footer_branch
      %19 = sbr.rel target = $region3
    $region8: #{tpu_custom_call.1} parent=1 // loop_exit
      _
    %2432 = vsyncpa [#allocation3], 1
    %s2433 = scalar_lea.sflag [#allocation3], 1
    %2434 = vsyncpa %s2433, 1
    %2435 = vsyncpa [#allocation5], 1
    %s2436 = scalar_lea.sflag [#allocation5], 1
    %2437 = vsyncpa %s2436, 1

</llo_original>
